<compile_context>
chip_gen: v5e
topology: v5e:2x2
jax: 0.10.0
libtpu: 0.0.40
codegen_flags: <defaults>
</compile_context>

<pallas_src>
import functools

import jax
import jax.numpy as jnp
from jax import lax
from jax.experimental import pallas as pl
from jax.experimental.pallas import tpu as pltpu


CPAD = 128        # lane width: activations / weight output dims padded to 128 lanes
STEM_KPAD = 256   # stem im2col contraction (7*7*3 = 147) padded to 256 (v6e/v7x native K)


# ----------------------------------------------------------------------------
# Compiler-parameter helpers
# ----------------------------------------------------------------------------

def _vmem_limit_bytes():
    """Per-generation VMEM budget (v7x: 64 MiB/TC, v5e/v6e: 128 MiB)."""
    try:
        cap = int(pltpu.get_tpu_info().vmem_capacity_bytes)
        return max(16 * 1024 * 1024, min(cap // 2, 96 * 1024 * 1024))
    except Exception:
        return 32 * 1024 * 1024


def _cparams():
    return pltpu.CompilerParams(dimension_semantics=("arbitrary",),
                                vmem_limit_bytes=_vmem_limit_bytes())


def _fs(shape):
    """Full-array BlockSpec for a size-1 grid."""
    return pl.BlockSpec(shape, lambda *_: (0,) * len(shape))


# ----------------------------------------------------------------------------
# Pallas kernels
# ----------------------------------------------------------------------------

def _stem_conv_kernel(patches_ref, w_ref, s_ref, b_ref, o_ref):
    """conv1 (7x7/s2) as a single K-folded matmul + folded BN + ReLU.

    patches_ref : (M, 256) bf16  -- im2col rows (n,ho,wo), K = 7*7*Cin padded to 256
    w_ref       : (256, 128) bf16
    s_ref/b_ref : (1, 128) f32   -- folded BN affine
    o_ref       : (M, 128) bf16  -- conv1 output rows, lane padded
    """
    acc = jnp.dot(patches_ref[...], w_ref[...], preferred_element_type=jnp.float32)
    acc = acc * s_ref[...] + b_ref[...]
    o_ref[...] = jnp.maximum(acc, 0.0).astype(o_ref.dtype)


def _maxpool_layer1_kernel(xph_ref, wa_ref, sa_ref, ba_ref,
                           wb_ref, sb_ref, bb_ref,
                           o_ref, pad1_ref, pad2_ref, *,
                           n, hq, wq, h, w, c1):
    """Fused maxpool(3x3/s2/p1) + BasicBlock (conv3x3+BN+ReLU, conv3x3+BN, +id, ReLU).

    xph_ref : (n, 4, hq*wq, 128) bf16 -- phase-split, zero-padded conv1 output
                                          (post-ReLU, so 0-fill == -inf fill for max)
    wa/wb   : (9, c1, 128) bf16       -- layer1 conv weights, tap-major, compact Cin
    s*/b*   : (1, 128) f32            -- folded BN affines
    o_ref   : (n*h*w, 128) bf16       -- block output, rows (img, y, x) row-major
    pad1/pad2 : (n*(h+2)*(w+2), 128) bf16 VMEM scratch -- zero-padded activations
    """
    wp = w + 2
    p_img = (h + 2) * wp
    rc = (n - 1) * p_img + (h - 1) * wp + w     # packed rows, batch folded into M
    nrows_mp = (h - 1) * wq + w                 # packed max-pool rows per image

    pad1_ref[...] = jnp.zeros_like(pad1_ref)
    pad2_ref[...] = jnp.zeros_like(pad2_ref)

    # ---- 3x3/s2/p1 max-pool straight out of the phase-split input -------------
    for img in range(n):
        m = None
        for i in range(3):
            for j in range(3):
                ph = (i % 2) * 2 + (j % 2)
                d = (i // 2) * wq + (j // 2)
                tap = xph_ref[img, ph, d:d + nrows_mp, :]
                m = tap if m is None else jnp.maximum(m, tap)
        for y in range(h):                      # scatter valid rows into pad ring
            a = img * p_img + (y + 1) * wp + 1
            pad1_ref[a:a + w, :] = m[y * wq:y * wq + w, :]

    # ---- conv1 3x3/s1 + BN + ReLU (9 shifted matmuls, batch folded into M) ----
    acc = jnp.zeros((rc, CPAD), jnp.float32)
    for i in range(3):
        for j in range(3):
            d = i * wp + j
            acc = acc + jnp.dot(pad1_ref[d:d + rc, 0:c1], wa_ref[i * 3 + j],
                                preferred_element_type=jnp.float32)
    mid = jnp.maximum(acc * sa_ref[...] + ba_ref[...], 0.0).astype(jnp.bfloat16)
    for img in range(n):
        for y in range(h):
            a = img * p_img + (y + 1) * wp + 1
            src = img * p_img + y * wp
            pad2_ref[a:a + w, :] = mid[src:src + w, :]

    # ---- conv2 3x3/s1 + BN + identity residual + ReLU ---------------------------
    acc2 = jnp.zeros((rc, CPAD), jnp.float32)
    for i in range(3):
        for j in range(3):
            d = i * wp + j
            acc2 = acc2 + jnp.dot(pad2_ref[d:d + rc, 0:c1], wb_ref[i * 3 + j],
                                  preferred_element_type=jnp.float32)
    res = pad1_ref[wp + 1:wp + 1 + rc, :].astype(jnp.float32)   # identity lives here
    y2 = jnp.maximum(acc2 * sb_ref[...] + bb_ref[...] + res, 0.0).astype(o_ref.dtype)
    for img in range(n):
        for y in range(h):
            dst = img * h * w + y * w
            src = img * p_img + y * wp
            o_ref[dst:dst + w, :] = y2[src:src + w, :]


def _layer2_gap_heads_kernel(xph_ref, wa_ref, sa_ref, ba_ref,
                             wb_ref, sb_ref, bb_ref,
                             wd_ref, sd_ref, bd_ref,
                             wh_ref, bh_ref,
                             o_ref, pad_ref, *,
                             n, hq, wq, h, w, cin, cout):
    """Fused layer2 BasicBlock (strided) + global-average-pool + 3 linear heads.

    xph_ref : (n, 4, hq*wq, 128) bf16 -- phase-split, zero-padded layer1 output
    wa (9, cin, 128)  conv1 3x3/s2        wd (cin, 128)   1x1/s2 downsample
    wb (9, cout, 128) conv2 3x3/s1        wh (cout, 128)  concatenated head weights
    s*/b*/bh : (1, 128) f32
    o_ref : (n, 128) f32 -- concatenated head logits (lane padded)
    pad_ref : (n*(h+2)*(w+2), 128) bf16 scratch -- zero-padded conv2 input
    """
    wp = w + 2
    p_img = (h + 2) * wp
    rc = (n - 1) * p_img + (h - 1) * wp + w
    nrows1 = (h - 1) * wq + w                   # packed rows of strided conv / downsample

    pad_ref[...] = jnp.zeros_like(pad_ref)

    # ---- conv1 3x3/s2 + BN + ReLU and 1x1/s2 downsample + BN, from the phases ---
    ds_list = []
    for img in range(n):
        acc = jnp.zeros((nrows1, CPAD), jnp.float32)
        for i in range(3):
            for j in range(3):
                ph = (i % 2) * 2 + (j % 2)
                d = (i // 2) * wq + (j // 2)
                acc = acc + jnp.dot(xph_ref[img, ph, d:d + nrows1, 0:cin],
                                    wa_ref[i * 3 + j],
                                    preferred_element_type=jnp.float32)
        mid = jnp.maximum(acc * sa_ref[...] + ba_ref[...], 0.0).astype(jnp.bfloat16)
        for y in range(h):
            a = img * p_img + (y + 1) * wp + 1
            pad_ref[a:a + w, :] = mid[y * wq:y * wq + w, :]
        # residual path: x[2ho, 2wo] == phase(1,1)[ho, wo] of the padded split
        ds = jnp.dot(xph_ref[img, 3, 0:nrows1, 0:cin], wd_ref[...],
                     preferred_element_type=jnp.float32)
        ds_list.append(ds * sd_ref[...] + bd_ref[...])

    # ---- conv2 3x3/s1 + BN (batch folded into M) --------------------------------
    acc2 = jnp.zeros((rc, CPAD), jnp.float32)
    for i in range(3):
        for j in range(3):
            d = i * wp + j
            acc2 = acc2 + jnp.dot(pad_ref[d:d + rc, 0:cout], wb_ref[i * 3 + j],
                                  preferred_element_type=jnp.float32)
    z = acc2 * sb_ref[...] + bb_ref[...]

    # ---- + residual, ReLU, global-average-pool (fused epilogue) -----------------
    feats = []
    inv = 1.0 / float(h * w)
    for img in range(n):
        ssum = jnp.zeros((1, CPAD), jnp.float32)
        for y in range(h):
            zz = z[img * p_img + y * wp:img * p_img + y * wp + w, :]
            rr = ds_list[img][y * wq:y * wq + w, :]
            ssum = ssum + jnp.sum(jnp.maximum(zz + rr, 0.0), axis=0, keepdims=True)
        feats.append(ssum * inv)
    feat = jnp.concatenate(feats, axis=0)                       # (n, 128) f32

    # ---- three linear heads, concatenated into one lane-dense matmul ------------
    logits = jnp.dot(feat[:, 0:cout].astype(jnp.bfloat16), wh_ref[...],
                     preferred_element_type=jnp.float32) + bh_ref[...]
    o_ref[...] = logits


# ----------------------------------------------------------------------------
# Thin XLA glue (runs once per kernel hand-off on tiny tensors)
# ----------------------------------------------------------------------------

def _phase_split(x, pad, stride, pad_value=0.0):
    """(N, H, W, C) -> (N, s*s, Hq*Wq, C) stride-phase decomposition."""
    N, H, W, C = x.shape
    Hp, Wp = H + 2 * pad, W + 2 * pad
    Hq = -(-Hp // stride)
    Wq = -(-Wp // stride)
    x = jnp.pad(x, ((0, 0), (pad, pad + Hq * stride - Hp),
                    (pad, pad + Wq * stride - Wp), (0, 0)),
                constant_values=pad_value)
    x = x.reshape(N, Hq, stride, Wq, stride, C).transpose(0, 2, 4, 1, 3, 5)
    return x.reshape(N, stride * stride, Hq * Wq, C), Hq, Wq


def _stem_patches(x_nhwc, k=7, stride=2, pad=3):
    """Mini-im2col for the stem: (N,H,W,Cin) -> (N*Ho*Wo, 256) bf16, K tap-major."""
    N, H, W, C = x_nhwc.shape
    ho = (H + 2 * pad - k) // stride + 1
    wo = (W + 2 * pad - k) // stride + 1
    xp = jnp.pad(x_nhwc, ((0, 0), (pad, pad), (pad, pad), (0, 0)))
    cols = []
    for i in range(k):
        for j in range(k):
            cols.append(xp[:, i:i + stride * ho:stride, j:j + stride * wo:stride, :])
    patches = jnp.concatenate(cols, axis=-1).reshape(N * ho * wo, k * k * C)
    patches = jnp.pad(patches, ((0, 0), (0, STEM_KPAD - k * k * C)))
    return patches.astype(jnp.bfloat16), ho, wo


# ----------------------------------------------------------------------------
# Parameters (deterministic, synthetic, compactly stored)
# ----------------------------------------------------------------------------

def _bn_affine(c, eps=1e-5):
    # fresh PyTorch BN in eval mode: gamma=1, beta=0, mean=0, var=1
    s = jnp.ones((1, CPAD), jnp.float32)
    s = s.at[0, :c].set(1.0 / jnp.sqrt(jnp.float32(1.0 + eps)))
    b = jnp.zeros((1, CPAD), jnp.float32)
    return s, b


def _he(key, shape):
    fan_in = shape[0] * shape[1] * shape[2]
    return ((2.0 / fan_in) ** 0.5) * jax.random.normal(key, shape, jnp.float32)


def _fold_taps(w_hwio):
    kh, kw, cin, cout = w_hwio.shape
    w = w_hwio.reshape(kh * kw, cin, cout)
    out = jnp.zeros((kh * kw, cin, CPAD), jnp.float32).at[:, :, :cout].set(w)
    return out.astype(jnp.bfloat16)


def init_params(key, in_ch=3, c1=16, c2=32, num_classes=5):
    ks = jax.random.split(key, 12)
    p = {}
    # stem conv 7x7/s2: taps folded into K (matches _stem_patches ordering)
    w1 = _he(ks[0], (7, 7, in_ch, c1)).reshape(49 * in_ch, c1)
    p["w1"] = (jnp.zeros((STEM_KPAD, CPAD), jnp.float32)
               .at[:49 * in_ch, :c1].set(w1).astype(jnp.bfloat16))
    p["s1"], p["b1"] = _bn_affine(c1)
    # layer1 basic block (c1 -> c1, stride 1)
    p["w_l1a"] = _fold_taps(_he(ks[1], (3, 3, c1, c1)))
    p["s_l1a"], p["b_l1a"] = _bn_affine(c1)
    p["w_l1b"] = _fold_taps(_he(ks[2], (3, 3, c1, c1)))
    p["s_l1b"], p["b_l1b"] = _bn_affine(c1)
    # layer2 basic block (c1 -> c2, stride 2, 1x1 downsample)
    p["w_l2a"] = _fold_taps(_he(ks[3], (3, 3, c1, c2)))
    p["s_l2a"], p["b_l2a"] = _bn_affine(c2)
    p["w_l2b"] = _fold_taps(_he(ks[4], (3, 3, c2, c2)))
    p["s_l2b"], p["b_l2b"] = _bn_affine(c2)
    wd = _he(ks[5], (1, 1, c1, c2)).reshape(c1, c2)
    p["w_down"] = (jnp.zeros((c1, CPAD), jnp.float32).at[:, :c2].set(wd)
                   .astype(jnp.bfloat16))
    p["s_down"], p["b_down"] = _bn_affine(c2)
    # three heads (fc_W | fc_I | fc_Fi) concatenated, lane padded to 128
    bound = 1.0 / (c2 ** 0.5)
    wh = jnp.zeros((c2, CPAD), jnp.float32)
    bh = jnp.zeros((1, CPAD), jnp.float32)
    for hidx in range(3):
        kw_, kb_ = jax.random.split(ks[6 + hidx])
        wv = jax.random.uniform(kw_, (c2, num_classes), jnp.float32, -bound, bound)
        bv = jax.random.uniform(kb_, (num_classes,), jnp.float32, -bound, bound)
        wh = wh.at[:, hidx * num_classes:(hidx + 1) * num_classes].set(wv)
        bh = bh.at[0, hidx * num_classes:(hidx + 1) * num_classes].set(bv)
    p["w_heads"] = wh.astype(jnp.bfloat16)
    p["b_heads"] = bh
    return p


# ----------------------------------------------------------------------------
# Forward pass = MultiHeadResNet.forward  (3 fused pallas_calls)
# ----------------------------------------------------------------------------

def _nbytes(a):
    return a.size * a.dtype.itemsize


@functools.partial(jax.jit, static_argnames=("num_classes",))
def multi_head_resnet_forward(params, x_nchw, num_classes=5):
    x = jnp.transpose(x_nchw, (0, 2, 3, 1)).astype(jnp.float32)   # NHWC
    N, _, _, in_ch = x.shape
    c1 = params["w_l1a"].shape[1]
    c2 = params["w_l2b"].shape[1]
    cp = _cparams()

    # ---- kernel A: stem conv1 7x7/s2 + BN + ReLU (one K-folded matmul) ---------
    patches, h1, w1 = _stem_patches(x)
    m1 = N * h1 * w1
    flops_a = 2 * m1 * (49 * in_ch) * c1
    bytes_a = (_nbytes(patches) + _nbytes(params["w1"]) + _nbytes(params["s1"])
               + _nbytes(params["b1"]) + m1 * CPAD * 2)
    stem = pl.pallas_call(
        _stem_conv_kernel,
        grid=(1,),
        in_specs=[_fs((m1, STEM_KPAD)), _fs((STEM_KPAD, CPAD)),
                  _fs((1, CPAD)), _fs((1, CPAD))],
        out_specs=_fs((m1, CPAD)),
        out_shape=jax.ShapeDtypeStruct((m1, CPAD), jnp.bfloat16),
        compiler_params=cp,
        cost_estimate=pl.CostEstimate(flops=int(flops_a), transcendentals=0,
                                      bytes_accessed=int(bytes_a)),
    )(patches, params["w1"], params["s1"], params["b1"])

    # ---- kernel B: maxpool + full layer1 BasicBlock -----------------------------
    xph1, hq1, wq1 = _phase_split(stem.reshape(N, h1, w1, CPAD), pad=1, stride=2)
    hm = (h1 + 2 - 3) // 2 + 1
    wm = (w1 + 2 - 3) // 2 + 1
    pimg1 = (hm + 2) * (wm + 2)
    flops_b = 2 * (N * hm * wm) * 9 * c1 * c1 * 2
    bytes_b = (_nbytes(xph1) + 2 * _nbytes(params["w_l1a"])
               + 4 * CPAD * 4 + N * hm * wm * CPAD * 2)
    kernel_b = functools.partial(_maxpool_layer1_kernel, n=N, hq=hq1, wq=wq1,
                                 h=hm, w=wm, c1=c1)
    l1 = pl.pallas_call(
        kernel_b,
        grid=(1,),
        in_specs=[_fs((N, 4, hq1 * wq1, CPAD)),
                  _fs((9, c1, CPAD)), _fs((1, CPAD)), _fs((1, CPAD)),
                  _fs((9, c1, CPAD)), _fs((1, CPAD)), _fs((1, CPAD))],
        out_specs=_fs((N * hm * wm, CPAD)),
        out_shape=jax.ShapeDtypeStruct((N * hm * wm, CPAD), jnp.bfloat16),
        scratch_shapes=[pltpu.VMEM((N * pimg1, CPAD), jnp.bfloat16),
                        pltpu.VMEM((N * pimg1, CPAD), jnp.bfloat16)],
        compiler_params=cp,
        cost_estimate=pl.CostEstimate(flops=int(flops_b), transcendentals=0,
                                      bytes_accessed=int(bytes_b)),
    )(xph1, params["w_l1a"], params["s_l1a"], params["b_l1a"],
      params["w_l1b"], params["s_l1b"], params["b_l1b"])

    # ---- kernel C: layer2 BasicBlock + GAP + 3 heads -----------------------------
    xph2, hq2, wq2 = _phase_split(l1.reshape(N, hm, wm, CPAD), pad=1, stride=2)
    h2 = (hm + 2 - 3) // 2 + 1
    w2 = (wm + 2 - 3) // 2 + 1
    pimg2 = (h2 + 2) * (w2 + 2)
    flops_c = (2 * (N * h2 * w2) * (9 * c1 * c2 + 9 * c2 * c2 + c1 * c2)
               + 2 * N * c2 * (3 * num_classes))
    bytes_c = (_nbytes(xph2) + _nbytes(params["w_l2a"]) + _nbytes(params["w_l2b"])
               + _nbytes(params["w_down"]) + _nbytes(params["w_heads"])
               + 8 * CPAD * 4 + N * CPAD * 4)
    kernel_c = functools.partial(_layer2_gap_heads_kernel, n=N, hq=hq2, wq=wq2,
                                 h=h2, w=w2, cin=c1, cout=c2)
    logits = pl.pallas_call(
        kernel_c,
        grid=(1,),
        in_specs=[_fs((N, 4, hq2 * wq2, CPAD)),
                  _fs((9, c1, CPAD)), _fs((1, CPAD)), _fs((1, CPAD)),
                  _fs((9, c2, CPAD)), _fs((1, CPAD)), _fs((1, CPAD)),
                  _fs((c1, CPAD)), _fs((1, CPAD)), _fs((1, CPAD)),
                  _fs((c2, CPAD)), _fs((1, CPAD))],
        out_specs=_fs((N, CPAD)),
        out_shape=jax.ShapeDtypeStruct((N, CPAD), jnp.float32),
        scratch_shapes=[pltpu.VMEM((N * pimg2, CPAD), jnp.bfloat16)],
        compiler_params=cp,
        cost_estimate=pl.CostEstimate(flops=int(flops_c), transcendentals=0,
                                      bytes_accessed=int(bytes_c)),
    )(xph2, params["w_l2a"], params["s_l2a"], params["b_l2a"],
      params["w_l2b"], params["s_l2b"], params["b_l2b"],
      params["w_down"], params["s_down"], params["b_down"],
      params["w_heads"], params["b_heads"])

    out_W = logits[:, 0:num_classes]
    out_I = logits[:, num_classes:2 * num_classes]
    out_Fi = logits[:, 2 * num_classes:3 * num_classes]
    return out_W, out_I, out_Fi


# ----------------------------------------------------------------------------
# Pure-JAX reference (f32) for a loose numerical sanity check (trunk is bf16)
# ----------------------------------------------------------------------------

def _reference_forward(params, x_nchw, num_classes=5):
    x = jnp.transpose(x_nchw, (0, 2, 3, 1)).astype(jnp.float32)
    in_ch = x.shape[-1]
    c1 = params["w_l1a"].shape[1]
    c2 = params["w_l2b"].shape[1]
    dn = ("NHWC", "HWIO", "NHWC")

    def conv(v, w_hwio, stride, pad):
        return lax.conv_general_dilated(v, w_hwio.astype(jnp.float32),
                                        (stride, stride), ((pad, pad), (pad, pad)),
                                        dimension_numbers=dn)

    def bn(v, s, b, c):
        return v * s[0, :c] + b[0, :c]

    w1 = params["w1"].astype(jnp.float32)[:49 * in_ch, :c1].reshape(7, 7, in_ch, c1)
    h = jax.nn.relu(bn(conv(x, w1, 2, 3), params["s1"], params["b1"], c1))
    h = lax.reduce_window(h, -jnp.inf, lax.max, (1, 3, 3, 1), (1, 2, 2, 1),
                          ((0, 0), (1, 1), (1, 1), (0, 0)))
    idn = h
    wa = params["w_l1a"].astype(jnp.float32)[:, :, :c1].reshape(3, 3, c1, c1)
    wb = params["w_l1b"].astype(jnp.float32)[:, :, :c1].reshape(3, 3, c1, c1)
    h = jax.nn.relu(bn(conv(h, wa, 1, 1), params["s_l1a"], params["b_l1a"], c1))
    h = jax.nn.relu(bn(conv(h, wb, 1, 1), params["s_l1b"], params["b_l1b"], c1) + idn)
    wd = params["w_down"].astype(jnp.float32)[:, :c2].reshape(1, 1, c1, c2)
    down = bn(conv(h, wd, 2, 0), params["s_down"], params["b_down"], c2)
    wa2 = params["w_l2a"].astype(jnp.float32)[:, :, :c2].reshape(3, 3, c1, c2)
    wb2 = params["w_l2b"].astype(jnp.float32)[:, :, :c2].reshape(3, 3, c2, c2)
    h = jax.nn.relu(bn(conv(h, wa2, 2, 1), params["s_l2a"], params["b_l2a"], c2))
    h = jax.nn.relu(bn(conv(h, wb2, 1, 1), params["s_l2b"], params["b_l2b"], c2) + down)
    feat = jnp.mean(h, axis=(1, 2))
    wh = params["w_heads"].astype(jnp.float32)[:, :3 * num_classes]
    bh = params["b_heads"][0, :3 * num_classes]
    logits = feat @ wh + bh
    return (logits[:, :num_classes], logits[:, num_classes:2 * num_classes],
            logits[:, 2 * num_classes:3 * num_classes])


# ----------------------------------------------------------------------------
# Demo
# ----------------------------------------------------------------------------

if __name__ == "__main__":
    key = jax.random.PRNGKey(0)
    kp, kx = jax.random.split(key)

    NUM_CLASSES = 5
    params = init_params(kp, in_ch=3, c1=16, c2=32, num_classes=NUM_CLASSES)

    # NCHW input, like the PyTorch module expects.
    x = jax.random.normal(kx, (2, 3, 16, 16), jnp.float32)

    out_W, out_I, out_Fi = multi_head_resnet_forward(
        params, x, num_classes=NUM_CLASSES)
    jax.block_until_ready((out_W, out_I, out_Fi))

    assert out_W.shape == (2, NUM_CLASSES)
    assert out_I.shape == (2, NUM_CLASSES)
    assert out_Fi.shape == (2, NUM_CLASSES)
    assert bool(jnp.all(jnp.isfinite(out_W)))
    assert bool(jnp.all(jnp.isfinite(out_I)))
    assert bool(jnp.all(jnp.isfinite(out_Fi)))

    # Loose numerical sanity check vs a pure-JAX f32 reference (bf16 trunk).
    ref_W, ref_I, ref_Fi = _reference_forward(params, x, num_classes=NUM_CLASSES)
    for got, want in ((out_W, ref_W), (out_I, ref_I), (out_Fi, ref_Fi)):
        tol = 0.1 * (float(jnp.max(jnp.abs(want))) + 1.0)
        assert float(jnp.max(jnp.abs(got - want))) < tol, "mismatch vs reference"

    print("KERNEL_OK")
</pallas_src>

<mosaic_0001>
module attributes {stable_mosaic.version = 11 : i64} {
  func.func @_stem_conv_kernel(%arg0: i32, %arg1: memref<128x256xbf16, #tpu.memory_space<vmem>>, %arg2: memref<256x128xbf16, #tpu.memory_space<vmem>>, %arg3: memref<1x128xf32, #tpu.memory_space<vmem>>, %arg4: memref<1x128xf32, #tpu.memory_space<vmem>>, %arg5: memref<128x128xbf16, #tpu.memory_space<vmem>>) attributes {dimension_semantics = [#tpu.dimension_semantics<arbitrary>], iteration_bounds = array<i64: 1>, scalar_prefetch = 0 : i64, scratch_operands = 0 : i64, tpu.core_type = #tpu.core_type<tc>, window_params = [{pipeline_mode = #tpu.pipeline_mode<synchronous>, transform_indices = @transform_0, window_bounds = array<i64: 128, 256>}, {pipeline_mode = #tpu.pipeline_mode<synchronous>, transform_indices = @transform_1, window_bounds = array<i64: 256, 128>}, {pipeline_mode = #tpu.pipeline_mode<synchronous>, transform_indices = @transform_2, window_bounds = array<i64: 1, 128>}, {pipeline_mode = #tpu.pipeline_mode<synchronous>, transform_indices = @transform_3, window_bounds = array<i64: 1, 128>}, {pipeline_mode = #tpu.pipeline_mode<synchronous>, transform_indices = @transform_4, window_bounds = array<i64: 128, 128>}]} {
    %c0 = arith.constant 0 : index
    %c0_0 = arith.constant 0 : index
    %0 = vector.load %arg1[%c0, %c0_0] : memref<128x256xbf16, #tpu.memory_space<vmem>>, vector<128x256xbf16>
    %c0_1 = arith.constant 0 : index
    %c0_2 = arith.constant 0 : index
    %1 = vector.load %arg2[%c0_1, %c0_2] : memref<256x128xbf16, #tpu.memory_space<vmem>>, vector<256x128xbf16>
    %cst = arith.constant dense<0.000000e+00> : vector<128x128xf32>
    %2 = tpu.matmul %0, %1, %cst {dimension_numbers = #tpu.dot_dimension_numbers<[1], [0], [0], [1], [0, 0, 1, 1], [], []>} : vector<128x256xbf16>, vector<256x128xbf16>, vector<128x128xf32> -> vector<128x128xf32>
    %c0_3 = arith.constant 0 : index
    %c0_4 = arith.constant 0 : index
    %3 = vector.load %arg3[%c0_3, %c0_4] : memref<1x128xf32, #tpu.memory_space<vmem>>, vector<1x128xf32>
    %4 = vector.broadcast %3 : vector<1x128xf32> to vector<128x128xf32>
    %5 = arith.mulf %2, %4 : vector<128x128xf32>
    %c0_5 = arith.constant 0 : index
    %c0_6 = arith.constant 0 : index
    %6 = vector.load %arg4[%c0_5, %c0_6] : memref<1x128xf32, #tpu.memory_space<vmem>>, vector<1x128xf32>
    %7 = vector.broadcast %6 : vector<1x128xf32> to vector<128x128xf32>
    %8 = arith.addf %5, %7 : vector<128x128xf32>
    %cst_7 = arith.constant 0.000000e+00 : f32
    %9 = vector.broadcast %cst_7 : f32 to vector<128x128xf32>
    %10 = arith.maximumf %8, %9 : vector<128x128xf32>
    %11 = arith.truncf %10 : vector<128x128xf32> to vector<128x128xbf16>
    %c0_8 = arith.constant 0 : index
    %c0_9 = arith.constant 0 : index
    %12 = vector.load %arg5[%c0_8, %c0_9] : memref<128x128xbf16, #tpu.memory_space<vmem>>, vector<128x128xbf16>
    tpu.vector_store %arg5[%c0_8, %c0_9], %11 {strides = array<i32>} : memref<128x128xbf16, #tpu.memory_space<vmem>>, vector<128x128xbf16>,
    return
  }
  func.func @transform_0(%arg0: i32) -> (i32, i32) {
    %c0_i32 = arith.constant 0 : i32
    %c0_i32_0 = arith.constant 0 : i32
    %c0_i32_1 = arith.constant 0 : i32
    return %c0_i32, %c0_i32_0 : i32, i32
  }
  func.func @transform_1(%arg0: i32) -> (i32, i32) {
    %c0_i32 = arith.constant 0 : i32
    %c0_i32_0 = arith.constant 0 : i32
    %c0_i32_1 = arith.constant 0 : i32
    return %c0_i32, %c0_i32_0 : i32, i32
  }
  func.func @transform_2(%arg0: i32) -> (i32, i32) {
    %c0_i32 = arith.constant 0 : i32
    %c0_i32_0 = arith.constant 0 : i32
    %c0_i32_1 = arith.constant 0 : i32
    return %c0_i32, %c0_i32_0 : i32, i32
  }
  func.func @transform_3(%arg0: i32) -> (i32, i32) {
    %c0_i32 = arith.constant 0 : i32
    %c0_i32_0 = arith.constant 0 : i32
    %c0_i32_1 = arith.constant 0 : i32
    return %c0_i32, %c0_i32_0 : i32, i32
  }
  func.func @transform_4(%arg0: i32) -> (i32, i32) {
    %c0_i32 = arith.constant 0 : i32
    %c0_i32_0 = arith.constant 0 : i32
    %c0_i32_1 = arith.constant 0 : i32
    return %c0_i32, %c0_i32_0 : i32, i32
  }
}

module attributes {stable_mosaic.version = 11 : i64} {
  func.func @_maxpool_layer1_kernel(%arg0: i32, %arg1: memref<2x4x25x128xbf16, #tpu.memory_space<vmem>>, %arg2: memref<9x16x128xbf16, #tpu.memory_space<vmem>>, %arg3: memref<1x128xf32, #tpu.memory_space<vmem>>, %arg4: memref<1x128xf32, #tpu.memory_space<vmem>>, %arg5: memref<9x16x128xbf16, #tpu.memory_space<vmem>>, %arg6: memref<1x128xf32, #tpu.memory_space<vmem>>, %arg7: memref<1x128xf32, #tpu.memory_space<vmem>>, %arg8: memref<32x128xbf16, #tpu.memory_space<vmem>>, %arg9: memref<72x128xbf16, #tpu.memory_space<vmem>>, %arg10: memref<72x128xbf16, #tpu.memory_space<vmem>>) attributes {dimension_semantics = [#tpu.dimension_semantics<arbitrary>], iteration_bounds = array<i64: 1>, scalar_prefetch = 0 : i64, scratch_operands = 2 : i64, tpu.core_type = #tpu.core_type<tc>, window_params = [{pipeline_mode = #tpu.pipeline_mode<synchronous>, transform_indices = @transform_0, window_bounds = array<i64: 2, 4, 25, 128>}, {pipeline_mode = #tpu.pipeline_mode<synchronous>, transform_indices = @transform_1, window_bounds = array<i64: 9, 16, 128>}, {pipeline_mode = #tpu.pipeline_mode<synchronous>, transform_indices = @transform_2, window_bounds = array<i64: 1, 128>}, {pipeline_mode = #tpu.pipeline_mode<synchronous>, transform_indices = @transform_3, window_bounds = array<i64: 1, 128>}, {pipeline_mode = #tpu.pipeline_mode<synchronous>, transform_indices = @transform_4, window_bounds = array<i64: 9, 16, 128>}, {pipeline_mode = #tpu.pipeline_mode<synchronous>, transform_indices = @transform_5, window_bounds = array<i64: 1, 128>}, {pipeline_mode = #tpu.pipeline_mode<synchronous>, transform_indices = @transform_6, window_bounds = array<i64: 1, 128>}, {pipeline_mode = #tpu.pipeline_mode<synchronous>, transform_indices = @transform_7, window_bounds = array<i64: 32, 128>}]} {
    %cst = arith.constant 0.000000e+00 : bf16
    %0 = vector.broadcast %cst : bf16 to vector<72x128xbf16>
    %c0 = arith.constant 0 : index
    %c0_0 = arith.constant 0 : index
    %1 = vector.load %arg9[%c0, %c0_0] : memref<72x128xbf16, #tpu.memory_space<vmem>>, vector<72x128xbf16>
    tpu.vector_store %arg9[%c0, %c0_0], %0 {strides = array<i32>} : memref<72x128xbf16, #tpu.memory_space<vmem>>, vector<72x128xbf16>,
    %cst_1 = arith.constant 0.000000e+00 : bf16
    %2 = vector.broadcast %cst_1 : bf16 to vector<72x128xbf16>
    %c0_2 = arith.constant 0 : index
    %c0_3 = arith.constant 0 : index
    %3 = vector.load %arg10[%c0_2, %c0_3] : memref<72x128xbf16, #tpu.memory_space<vmem>>, vector<72x128xbf16>
    tpu.vector_store %arg10[%c0_2, %c0_3], %2 {strides = array<i32>} : memref<72x128xbf16, #tpu.memory_space<vmem>>, vector<72x128xbf16>,
    %c0_4 = arith.constant 0 : index
    %c0_5 = arith.constant 0 : index
    %c0_6 = arith.constant 0 : index
    %c0_7 = arith.constant 0 : index
    %4 = vector.load %arg1[%c0_4, %c0_5, %c0_6, %c0_7] : memref<2x4x25x128xbf16, #tpu.memory_space<vmem>>, vector<1x1x19x128xbf16>
    %5 = vector.shape_cast %4 : vector<1x1x19x128xbf16> to vector<19x128xbf16>
    %c0_8 = arith.constant 0 : index
    %c1 = arith.constant 1 : index
    %c0_9 = arith.constant 0 : index
    %c0_10 = arith.constant 0 : index
    %6 = vector.load %arg1[%c0_8, %c1, %c0_9, %c0_10] : memref<2x4x25x128xbf16, #tpu.memory_space<vmem>>, vector<1x1x19x128xbf16>
    %7 = vector.shape_cast %6 : vector<1x1x19x128xbf16> to vector<19x128xbf16>
    %8 = arith.maximumf %5, %7 : vector<19x128xbf16>
    %c0_11 = arith.constant 0 : index
    %c0_12 = arith.constant 0 : index
    %c1_13 = arith.constant 1 : index
    %c0_14 = arith.constant 0 : index
    %9 = vector.load %arg1[%c0_11, %c0_12, %c1_13, %c0_14] : memref<2x4x25x128xbf16, #tpu.memory_space<vmem>>, vector<1x1x19x128xbf16>
    %10 = vector.shape_cast %9 : vector<1x1x19x128xbf16> to vector<19x128xbf16>
    %11 = arith.maximumf %8, %10 : vector<19x128xbf16>
    %c0_15 = arith.constant 0 : index
    %c2 = arith.constant 2 : index
    %c0_16 = arith.constant 0 : index
    %c0_17 = arith.constant 0 : index
    %12 = vector.load %arg1[%c0_15, %c2, %c0_16, %c0_17] : memref<2x4x25x128xbf16, #tpu.memory_space<vmem>>, vector<1x1x19x128xbf16>
    %13 = vector.shape_cast %12 : vector<1x1x19x128xbf16> to vector<19x128xbf16>
    %14 = arith.maximumf %11, %13 : vector<19x128xbf16>
    %c0_18 = arith.constant 0 : index
    %c3 = arith.constant 3 : index
    %c0_19 = arith.constant 0 : index
    %c0_20 = arith.constant 0 : index
    %15 = vector.load %arg1[%c0_18, %c3, %c0_19, %c0_20] : memref<2x4x25x128xbf16, #tpu.memory_space<vmem>>, vector<1x1x19x128xbf16>
    %16 = vector.shape_cast %15 : vector<1x1x19x128xbf16> to vector<19x128xbf16>
    %17 = arith.maximumf %14, %16 : vector<19x128xbf16>
    %c0_21 = arith.constant 0 : index
    %c2_22 = arith.constant 2 : index
    %c1_23 = arith.constant 1 : index
    %c0_24 = arith.constant 0 : index
    %18 = vector.load %arg1[%c0_21, %c2_22, %c1_23, %c0_24] : memref<2x4x25x128xbf16, #tpu.memory_space<vmem>>, vector<1x1x19x128xbf16>
    %19 = vector.shape_cast %18 : vector<1x1x19x128xbf16> to vector<19x128xbf16>
    %20 = arith.maximumf %17, %19 : vector<19x128xbf16>
    %c0_25 = arith.constant 0 : index
    %c0_26 = arith.constant 0 : index
    %c5 = arith.constant 5 : index
    %c0_27 = arith.constant 0 : index
    %21 = vector.load %arg1[%c0_25, %c0_26, %c5, %c0_27] : memref<2x4x25x128xbf16, #tpu.memory_space<vmem>>, vector<1x1x19x128xbf16>
    %22 = vector.shape_cast %21 : vector<1x1x19x128xbf16> to vector<19x128xbf16>
    %23 = arith.maximumf %20, %22 : vector<19x128xbf16>
    %c0_28 = arith.constant 0 : index
    %c1_29 = arith.constant 1 : index
    %c5_30 = arith.constant 5 : index
    %c0_31 = arith.constant 0 : index
    %24 = vector.load %arg1[%c0_28, %c1_29, %c5_30, %c0_31] : memref<2x4x25x128xbf16, #tpu.memory_space<vmem>>, vector<1x1x19x128xbf16>
    %25 = vector.shape_cast %24 : vector<1x1x19x128xbf16> to vector<19x128xbf16>
    %26 = arith.maximumf %23, %25 : vector<19x128xbf16>
    %c0_32 = arith.constant 0 : index
    %c0_33 = arith.constant 0 : index
    %c6 = arith.constant 6 : index
    %c0_34 = arith.constant 0 : index
    %27 = vector.load %arg1[%c0_32, %c0_33, %c6, %c0_34] : memref<2x4x25x128xbf16, #tpu.memory_space<vmem>>, vector<1x1x19x128xbf16>
    %28 = vector.shape_cast %27 : vector<1x1x19x128xbf16> to vector<19x128xbf16>
    %29 = arith.maximumf %26, %28 : vector<19x128xbf16>
    %30 = vector.extract_strided_slice %29 {offsets = [0, 0], sizes = [4, 128], strides = [1, 1]} : vector<19x128xbf16> to vector<4x128xbf16>
    %c7 = arith.constant 7 : index
    %c0_35 = arith.constant 0 : index
    %31 = vector.load %arg9[%c7, %c0_35] : memref<72x128xbf16, #tpu.memory_space<vmem>>, vector<4x128xbf16>
    tpu.vector_store %arg9[%c7, %c0_35], %30 {strides = array<i32>} : memref<72x128xbf16, #tpu.memory_space<vmem>>, vector<4x128xbf16>,
    %32 = vector.extract_strided_slice %29 {offsets = [5, 0], sizes = [4, 128], strides = [1, 1]} : vector<19x128xbf16> to vector<4x128xbf16>
    %c13 = arith.constant 13 : index
    %c0_36 = arith.constant 0 : index
    %33 = vector.load %arg9[%c13, %c0_36] : memref<72x128xbf16, #tpu.memory_space<vmem>>, vector<4x128xbf16>
    tpu.vector_store %arg9[%c13, %c0_36], %32 {strides = array<i32>} : memref<72x128xbf16, #tpu.memory_space<vmem>>, vector<4x128xbf16>,
    %34 = vector.extract_strided_slice %29 {offsets = [10, 0], sizes = [4, 128], strides = [1, 1]} : vector<19x128xbf16> to vector<4x128xbf16>
    %c19 = arith.constant 19 : index
    %c0_37 = arith.constant 0 : index
    %35 = vector.load %arg9[%c19, %c0_37] : memref<72x128xbf16, #tpu.memory_space<vmem>>, vector<4x128xbf16>
    tpu.vector_store %arg9[%c19, %c0_37], %34 {strides = array<i32>} : memref<72x128xbf16, #tpu.memory_space<vmem>>, vector<4x128xbf16>,
    %36 = vector.extract_strided_slice %29 {offsets = [15, 0], sizes = [4, 128], strides = [1, 1]} : vector<19x128xbf16> to vector<4x128xbf16>
    %c25 = arith.constant 25 : index
    %c0_38 = arith.constant 0 : index
    %37 = vector.load %arg9[%c25, %c0_38] : memref<72x128xbf16, #tpu.memory_space<vmem>>, vector<4x128xbf16>
    tpu.vector_store %arg9[%c25, %c0_38], %36 {strides = array<i32>} : memref<72x128xbf16, #tpu.memory_space<vmem>>, vector<4x128xbf16>,
    %c1_39 = arith.constant 1 : index
    %c0_40 = arith.constant 0 : index
    %c0_41 = arith.constant 0 : index
    %c0_42 = arith.constant 0 : index
    %38 = vector.load %arg1[%c1_39, %c0_40, %c0_41, %c0_42] : memref<2x4x25x128xbf16, #tpu.memory_space<vmem>>, vector<1x1x19x128xbf16>
    %39 = vector.shape_cast %38 : vector<1x1x19x128xbf16> to vector<19x128xbf16>
    %c1_43 = arith.constant 1 : index
    %c1_44 = arith.constant 1 : index
    %c0_45 = arith.constant 0 : index
    %c0_46 = arith.constant 0 : index
    %40 = vector.load %arg1[%c1_43, %c1_44, %c0_45, %c0_46] : memref<2x4x25x128xbf16, #tpu.memory_space<vmem>>, vector<1x1x19x128xbf16>
    %41 = vector.shape_cast %40 : vector<1x1x19x128xbf16> to vector<19x128xbf16>
    %42 = arith.maximumf %39, %41 : vector<19x128xbf16>
    %c1_47 = arith.constant 1 : index
    %c0_48 = arith.constant 0 : index
    %c1_49 = arith.constant 1 : index
    %c0_50 = arith.constant 0 : index
    %43 = vector.load %arg1[%c1_47, %c0_48, %c1_49, %c0_50] : memref<2x4x25x128xbf16, #tpu.memory_space<vmem>>, vector<1x1x19x128xbf16>
    %44 = vector.shape_cast %43 : vector<1x1x19x128xbf16> to vector<19x128xbf16>
    %45 = arith.maximumf %42, %44 : vector<19x128xbf16>
    %c1_51 = arith.constant 1 : index
    %c2_52 = arith.constant 2 : index
    %c0_53 = arith.constant 0 : index
    %c0_54 = arith.constant 0 : index
    %46 = vector.load %arg1[%c1_51, %c2_52, %c0_53, %c0_54] : memref<2x4x25x128xbf16, #tpu.memory_space<vmem>>, vector<1x1x19x128xbf16>
    %47 = vector.shape_cast %46 : vector<1x1x19x128xbf16> to vector<19x128xbf16>
    %48 = arith.maximumf %45, %47 : vector<19x128xbf16>
    %c1_55 = arith.constant 1 : index
    %c3_56 = arith.constant 3 : index
    %c0_57 = arith.constant 0 : index
    %c0_58 = arith.constant 0 : index
    %49 = vector.load %arg1[%c1_55, %c3_56, %c0_57, %c0_58] : memref<2x4x25x128xbf16, #tpu.memory_space<vmem>>, vector<1x1x19x128xbf16>
    %50 = vector.shape_cast %49 : vector<1x1x19x128xbf16> to vector<19x128xbf16>
    %51 = arith.maximumf %48, %50 : vector<19x128xbf16>
    %c1_59 = arith.constant 1 : index
    %c2_60 = arith.constant 2 : index
    %c1_61 = arith.constant 1 : index
    %c0_62 = arith.constant 0 : index
    %52 = vector.load %arg1[%c1_59, %c2_60, %c1_61, %c0_62] : memref<2x4x25x128xbf16, #tpu.memory_space<vmem>>, vector<1x1x19x128xbf16>
    %53 = vector.shape_cast %52 : vector<1x1x19x128xbf16> to vector<19x128xbf16>
    %54 = arith.maximumf %51, %53 : vector<19x128xbf16>
    %c1_63 = arith.constant 1 : index
    %c0_64 = arith.constant 0 : index
    %c5_65 = arith.constant 5 : index
    %c0_66 = arith.constant 0 : index
    %55 = vector.load %arg1[%c1_63, %c0_64, %c5_65, %c0_66] : memref<2x4x25x128xbf16, #tpu.memory_space<vmem>>, vector<1x1x19x128xbf16>
    %56 = vector.shape_cast %55 : vector<1x1x19x128xbf16> to vector<19x128xbf16>
    %57 = arith.maximumf %54, %56 : vector<19x128xbf16>
    %c1_67 = arith.constant 1 : index
    %c1_68 = arith.constant 1 : index
    %c5_69 = arith.constant 5 : index
    %c0_70 = arith.constant 0 : index
    %58 = vector.load %arg1[%c1_67, %c1_68, %c5_69, %c0_70] : memref<2x4x25x128xbf16, #tpu.memory_space<vmem>>, vector<1x1x19x128xbf16>
    %59 = vector.shape_cast %58 : vector<1x1x19x128xbf16> to vector<19x128xbf16>
    %60 = arith.maximumf %57, %59 : vector<19x128xbf16>
    %c1_71 = arith.constant 1 : index
    %c0_72 = arith.constant 0 : index
    %c6_73 = arith.constant 6 : index
    %c0_74 = arith.constant 0 : index
    %61 = vector.load %arg1[%c1_71, %c0_72, %c6_73, %c0_74] : memref<2x4x25x128xbf16, #tpu.memory_space<vmem>>, vector<1x1x19x128xbf16>
    %62 = vector.shape_cast %61 : vector<1x1x19x128xbf16> to vector<19x128xbf16>
    %63 = arith.maximumf %60, %62 : vector<19x128xbf16>
    %64 = vector.extract_strided_slice %63 {offsets = [0, 0], sizes = [4, 128], strides = [1, 1]} : vector<19x128xbf16> to vector<4x128xbf16>
    %c43 = arith.constant 43 : index
    %c0_75 = arith.constant 0 : index
    %65 = vector.load %arg9[%c43, %c0_75] : memref<72x128xbf16, #tpu.memory_space<vmem>>, vector<4x128xbf16>
    tpu.vector_store %arg9[%c43, %c0_75], %64 {strides = array<i32>} : memref<72x128xbf16, #tpu.memory_space<vmem>>, vector<4x128xbf16>,
    %66 = vector.extract_strided_slice %63 {offsets = [5, 0], sizes = [4, 128], strides = [1, 1]} : vector<19x128xbf16> to vector<4x128xbf16>
    %c49 = arith.constant 49 : index
    %c0_76 = arith.constant 0 : index
    %67 = vector.load %arg9[%c49, %c0_76] : memref<72x128xbf16, #tpu.memory_space<vmem>>, vector<4x128xbf16>
    tpu.vector_store %arg9[%c49, %c0_76], %66 {strides = array<i32>} : memref<72x128xbf16, #tpu.memory_space<vmem>>, vector<4x128xbf16>,
    %68 = vector.extract_strided_slice %63 {offsets = [10, 0], sizes = [4, 128], strides = [1, 1]} : vector<19x128xbf16> to vector<4x128xbf16>
    %c55 = arith.constant 55 : index
    %c0_77 = arith.constant 0 : index
    %69 = vector.load %arg9[%c55, %c0_77] : memref<72x128xbf16, #tpu.memory_space<vmem>>, vector<4x128xbf16>
    tpu.vector_store %arg9[%c55, %c0_77], %68 {strides = array<i32>} : memref<72x128xbf16, #tpu.memory_space<vmem>>, vector<4x128xbf16>,
    %70 = vector.extract_strided_slice %63 {offsets = [15, 0], sizes = [4, 128], strides = [1, 1]} : vector<19x128xbf16> to vector<4x128xbf16>
    %c61 = arith.constant 61 : index
    %c0_78 = arith.constant 0 : index
    %71 = vector.load %arg9[%c61, %c0_78] : memref<72x128xbf16, #tpu.memory_space<vmem>>, vector<4x128xbf16>
    tpu.vector_store %arg9[%c61, %c0_78], %70 {strides = array<i32>} : memref<72x128xbf16, #tpu.memory_space<vmem>>, vector<4x128xbf16>,
    %cst_79 = arith.constant 0.000000e+00 : f32
    %72 = vector.broadcast %cst_79 : f32 to vector<58x128xf32>
    %c0_80 = arith.constant 0 : index
    %c0_81 = arith.constant 0 : index
    %73 = vector.load %arg9[%c0_80, %c0_81] : memref<72x128xbf16, #tpu.memory_space<vmem>>, vector<58x16xbf16>
    %c0_82 = arith.constant 0 : index
    %c0_83 = arith.constant 0 : index
    %c0_84 = arith.constant 0 : index
    %74 = vector.load %arg2[%c0_82, %c0_83, %c0_84] : memref<9x16x128xbf16, #tpu.memory_space<vmem>>, vector<1x16x128xbf16>
    %75 = vector.shape_cast %74 : vector<1x16x128xbf16> to vector<16x128xbf16>
    %cst_85 = arith.constant dense<0.000000e+00> : vector<58x128xf32>
    %76 = tpu.matmul %73, %75, %cst_85 {dimension_numbers = #tpu.dot_dimension_numbers<[1], [0], [0], [1], [0, 0, 1, 1], [], []>} : vector<58x16xbf16>, vector<16x128xbf16>, vector<58x128xf32> -> vector<58x128xf32>
    %77 = arith.addf %72, %76 : vector<58x128xf32>
    %c1_86 = arith.constant 1 : index
    %c0_87 = arith.constant 0 : index
    %78 = vector.load %arg9[%c1_86, %c0_87] : memref<72x128xbf16, #tpu.memory_space<vmem>>, vector<58x16xbf16>
    %c1_88 = arith.constant 1 : index
    %c0_89 = arith.constant 0 : index
    %c0_90 = arith.constant 0 : index
    %79 = vector.load %arg2[%c1_88, %c0_89, %c0_90] : memref<9x16x128xbf16, #tpu.memory_space<vmem>>, vector<1x16x128xbf16>
    %80 = vector.shape_cast %79 : vector<1x16x128xbf16> to vector<16x128xbf16>
    %cst_91 = arith.constant dense<0.000000e+00> : vector<58x128xf32>
    %81 = tpu.matmul %78, %80, %cst_91 {dimension_numbers = #tpu.dot_dimension_numbers<[1], [0], [0], [1], [0, 0, 1, 1], [], []>} : vector<58x16xbf16>, vector<16x128xbf16>, vector<58x128xf32> -> vector<58x128xf32>
    %82 = arith.addf %77, %81 : vector<58x128xf32>
    %c2_92 = arith.constant 2 : index
    %c0_93 = arith.constant 0 : index
    %83 = vector.load %arg9[%c2_92, %c0_93] : memref<72x128xbf16, #tpu.memory_space<vmem>>, vector<58x16xbf16>
    %c2_94 = arith.constant 2 : index
    %c0_95 = arith.constant 0 : index
    %c0_96 = arith.constant 0 : index
    %84 = vector.load %arg2[%c2_94, %c0_95, %c0_96] : memref<9x16x128xbf16, #tpu.memory_space<vmem>>, vector<1x16x128xbf16>
    %85 = vector.shape_cast %84 : vector<1x16x128xbf16> to vector<16x128xbf16>
    %cst_97 = arith.constant dense<0.000000e+00> : vector<58x128xf32>
    %86 = tpu.matmul %83, %85, %cst_97 {dimension_numbers = #tpu.dot_dimension_numbers<[1], [0], [0], [1], [0, 0, 1, 1], [], []>} : vector<58x16xbf16>, vector<16x128xbf16>, vector<58x128xf32> -> vector<58x128xf32>
    %87 = arith.addf %82, %86 : vector<58x128xf32>
    %c6_98 = arith.constant 6 : index
    %c0_99 = arith.constant 0 : index
    %88 = vector.load %arg9[%c6_98, %c0_99] : memref<72x128xbf16, #tpu.memory_space<vmem>>, vector<58x16xbf16>
    %c3_100 = arith.constant 3 : index
    %c0_101 = arith.constant 0 : index
    %c0_102 = arith.constant 0 : index
    %89 = vector.load %arg2[%c3_100, %c0_101, %c0_102] : memref<9x16x128xbf16, #tpu.memory_space<vmem>>, vector<1x16x128xbf16>
    %90 = vector.shape_cast %89 : vector<1x16x128xbf16> to vector<16x128xbf16>
    %cst_103 = arith.constant dense<0.000000e+00> : vector<58x128xf32>
    %91 = tpu.matmul %88, %90, %cst_103 {dimension_numbers = #tpu.dot_dimension_numbers<[1], [0], [0], [1], [0, 0, 1, 1], [], []>} : vector<58x16xbf16>, vector<16x128xbf16>, vector<58x128xf32> -> vector<58x128xf32>
    %92 = arith.addf %87, %91 : vector<58x128xf32>
    %c7_104 = arith.constant 7 : index
    %c0_105 = arith.constant 0 : index
    %93 = vector.load %arg9[%c7_104, %c0_105] : memref<72x128xbf16, #tpu.memory_space<vmem>>, vector<58x16xbf16>
    %c4 = arith.constant 4 : index
    %c0_106 = arith.constant 0 : index
    %c0_107 = arith.constant 0 : index
    %94 = vector.load %arg2[%c4, %c0_106, %c0_107] : memref<9x16x128xbf16, #tpu.memory_space<vmem>>, vector<1x16x128xbf16>
    %95 = vector.shape_cast %94 : vector<1x16x128xbf16> to vector<16x128xbf16>
    %cst_108 = arith.constant dense<0.000000e+00> : vector<58x128xf32>
    %96 = tpu.matmul %93, %95, %cst_108 {dimension_numbers = #tpu.dot_dimension_numbers<[1], [0], [0], [1], [0, 0, 1, 1], [], []>} : vector<58x16xbf16>, vector<16x128xbf16>, vector<58x128xf32> -> vector<58x128xf32>
    %97 = arith.addf %92, %96 : vector<58x128xf32>
    %c8 = arith.constant 8 : index
    %c0_109 = arith.constant 0 : index
    %98 = vector.load %arg9[%c8, %c0_109] : memref<72x128xbf16, #tpu.memory_space<vmem>>, vector<58x16xbf16>
    %c5_110 = arith.constant 5 : index
    %c0_111 = arith.constant 0 : index
    %c0_112 = arith.constant 0 : index
    %99 = vector.load %arg2[%c5_110, %c0_111, %c0_112] : memref<9x16x128xbf16, #tpu.memory_space<vmem>>, vector<1x16x128xbf16>
    %100 = vector.shape_cast %99 : vector<1x16x128xbf16> to vector<16x128xbf16>
    %cst_113 = arith.constant dense<0.000000e+00> : vector<58x128xf32>
    %101 = tpu.matmul %98, %100, %cst_113 {dimension_numbers = #tpu.dot_dimension_numbers<[1], [0], [0], [1], [0, 0, 1, 1], [], []>} : vector<58x16xbf16>, vector<16x128xbf16>, vector<58x128xf32> -> vector<58x128xf32>
    %102 = arith.addf %97, %101 : vector<58x128xf32>
    %c12 = arith.constant 12 : index
    %c0_114 = arith.constant 0 : index
    %103 = vector.load %arg9[%c12, %c0_114] : memref<72x128xbf16, #tpu.memory_space<vmem>>, vector<58x16xbf16>
    %c6_115 = arith.constant 6 : index
    %c0_116 = arith.constant 0 : index
    %c0_117 = arith.constant 0 : index
    %104 = vector.load %arg2[%c6_115, %c0_116, %c0_117] : memref<9x16x128xbf16, #tpu.memory_space<vmem>>, vector<1x16x128xbf16>
    %105 = vector.shape_cast %104 : vector<1x16x128xbf16> to vector<16x128xbf16>
    %cst_118 = arith.constant dense<0.000000e+00> : vector<58x128xf32>
    %106 = tpu.matmul %103, %105, %cst_118 {dimension_numbers = #tpu.dot_dimension_numbers<[1], [0], [0], [1], [0, 0, 1, 1], [], []>} : vector<58x16xbf16>, vector<16x128xbf16>, vector<58x128xf32> -> vector<58x128xf32>
    %107 = arith.addf %102, %106 : vector<58x128xf32>
    %c13_119 = arith.constant 13 : index
    %c0_120 = arith.constant 0 : index
    %108 = vector.load %arg9[%c13_119, %c0_120] : memref<72x128xbf16, #tpu.memory_space<vmem>>, vector<58x16xbf16>
    %c7_121 = arith.constant 7 : index
    %c0_122 = arith.constant 0 : index
    %c0_123 = arith.constant 0 : index
    %109 = vector.load %arg2[%c7_121, %c0_122, %c0_123] : memref<9x16x128xbf16, #tpu.memory_space<vmem>>, vector<1x16x128xbf16>
    %110 = vector.shape_cast %109 : vector<1x16x128xbf16> to vector<16x128xbf16>
    %cst_124 = arith.constant dense<0.000000e+00> : vector<58x128xf32>
    %111 = tpu.matmul %108, %110, %cst_124 {dimension_numbers = #tpu.dot_dimension_numbers<[1], [0], [0], [1], [0, 0, 1, 1], [], []>} : vector<58x16xbf16>, vector<16x128xbf16>, vector<58x128xf32> -> vector<58x128xf32>
    %112 = arith.addf %107, %111 : vector<58x128xf32>
    %c14 = arith.constant 14 : index
    %c0_125 = arith.constant 0 : index
    %113 = vector.load %arg9[%c14, %c0_125] : memref<72x128xbf16, #tpu.memory_space<vmem>>, vector<58x16xbf16>
    %c8_126 = arith.constant 8 : index
    %c0_127 = arith.constant 0 : index
    %c0_128 = arith.constant 0 : index
    %114 = vector.load %arg2[%c8_126, %c0_127, %c0_128] : memref<9x16x128xbf16, #tpu.memory_space<vmem>>, vector<1x16x128xbf16>
    %115 = vector.shape_cast %114 : vector<1x16x128xbf16> to vector<16x128xbf16>
    %cst_129 = arith.constant dense<0.000000e+00> : vector<58x128xf32>
    %116 = tpu.matmul %113, %115, %cst_129 {dimension_numbers = #tpu.dot_dimension_numbers<[1], [0], [0], [1], [0, 0, 1, 1], [], []>} : vector<58x16xbf16>, vector<16x128xbf16>, vector<58x128xf32> -> vector<58x128xf32>
    %117 = arith.addf %112, %116 : vector<58x128xf32>
    %c0_130 = arith.constant 0 : index
    %c0_131 = arith.constant 0 : index
    %118 = vector.load %arg3[%c0_130, %c0_131] : memref<1x128xf32, #tpu.memory_space<vmem>>, vector<1x128xf32>
    %119 = vector.broadcast %118 : vector<1x128xf32> to vector<58x128xf32>
    %120 = arith.mulf %117, %119 : vector<58x128xf32>
    %c0_132 = arith.constant 0 : index
    %c0_133 = arith.constant 0 : index
    %121 = vector.load %arg4[%c0_132, %c0_133] : memref<1x128xf32, #tpu.memory_space<vmem>>, vector<1x128xf32>
    %122 = vector.broadcast %121 : vector<1x128xf32> to vector<58x128xf32>
    %123 = arith.addf %120, %122 : vector<58x128xf32>
    %cst_134 = arith.constant 0.000000e+00 : f32
    %124 = vector.broadcast %cst_134 : f32 to vector<58x128xf32>
    %125 = arith.maximumf %123, %124 : vector<58x128xf32>
    %126 = arith.truncf %125 : vector<58x128xf32> to vector<58x128xbf16>
    %127 = vector.extract_strided_slice %126 {offsets = [0, 0], sizes = [4, 128], strides = [1, 1]} : vector<58x128xbf16> to vector<4x128xbf16>
    %c7_135 = arith.constant 7 : index
    %c0_136 = arith.constant 0 : index
    %128 = vector.load %arg10[%c7_135, %c0_136] : memref<72x128xbf16, #tpu.memory_space<vmem>>, vector<4x128xbf16>
    tpu.vector_store %arg10[%c7_135, %c0_136], %127 {strides = array<i32>} : memref<72x128xbf16, #tpu.memory_space<vmem>>, vector<4x128xbf16>,
    %129 = vector.extract_strided_slice %126 {offsets = [6, 0], sizes = [4, 128], strides = [1, 1]} : vector<58x128xbf16> to vector<4x128xbf16>
    %c13_137 = arith.constant 13 : index
    %c0_138 = arith.constant 0 : index
    %130 = vector.load %arg10[%c13_137, %c0_138] : memref<72x128xbf16, #tpu.memory_space<vmem>>, vector<4x128xbf16>
    tpu.vector_store %arg10[%c13_137, %c0_138], %129 {strides = array<i32>} : memref<72x128xbf16, #tpu.memory_space<vmem>>, vector<4x128xbf16>,
    %131 = vector.extract_strided_slice %126 {offsets = [12, 0], sizes = [4, 128], strides = [1, 1]} : vector<58x128xbf16> to vector<4x128xbf16>
    %c19_139 = arith.constant 19 : index
    %c0_140 = arith.constant 0 : index
    %132 = vector.load %arg10[%c19_139, %c0_140] : memref<72x128xbf16, #tpu.memory_space<vmem>>, vector<4x128xbf16>
    tpu.vector_store %arg10[%c19_139, %c0_140], %131 {strides = array<i32>} : memref<72x128xbf16, #tpu.memory_space<vmem>>, vector<4x128xbf16>,
    %133 = vector.extract_strided_slice %126 {offsets = [18, 0], sizes = [4, 128], strides = [1, 1]} : vector<58x128xbf16> to vector<4x128xbf16>
    %c25_141 = arith.constant 25 : index
    %c0_142 = arith.constant 0 : index
    %134 = vector.load %arg10[%c25_141, %c0_142] : memref<72x128xbf16, #tpu.memory_space<vmem>>, vector<4x128xbf16>
    tpu.vector_store %arg10[%c25_141, %c0_142], %133 {strides = array<i32>} : memref<72x128xbf16, #tpu.memory_space<vmem>>, vector<4x128xbf16>,
    %135 = vector.extract_strided_slice %126 {offsets = [36, 0], sizes = [4, 128], strides = [1, 1]} : vector<58x128xbf16> to vector<4x128xbf16>
    %c43_143 = arith.constant 43 : index
    %c0_144 = arith.constant 0 : index
    %136 = vector.load %arg10[%c43_143, %c0_144] : memref<72x128xbf16, #tpu.memory_space<vmem>>, vector<4x128xbf16>
    tpu.vector_store %arg10[%c43_143, %c0_144], %135 {strides = array<i32>} : memref<72x128xbf16, #tpu.memory_space<vmem>>, vector<4x128xbf16>,
    %137 = vector.extract_strided_slice %126 {offsets = [42, 0], sizes = [4, 128], strides = [1, 1]} : vector<58x128xbf16> to vector<4x128xbf16>
    %c49_145 = arith.constant 49 : index
    %c0_146 = arith.constant 0 : index
    %138 = vector.load %arg10[%c49_145, %c0_146] : memref<72x128xbf16, #tpu.memory_space<vmem>>, vector<4x128xbf16>
    tpu.vector_store %arg10[%c49_145, %c0_146], %137 {strides = array<i32>} : memref<72x128xbf16, #tpu.memory_space<vmem>>, vector<4x128xbf16>,
    %139 = vector.extract_strided_slice %126 {offsets = [48, 0], sizes = [4, 128], strides = [1, 1]} : vector<58x128xbf16> to vector<4x128xbf16>
    %c55_147 = arith.constant 55 : index
    %c0_148 = arith.constant 0 : index
    %140 = vector.load %arg10[%c55_147, %c0_148] : memref<72x128xbf16, #tpu.memory_space<vmem>>, vector<4x128xbf16>
    tpu.vector_store %arg10[%c55_147, %c0_148], %139 {strides = array<i32>} : memref<72x128xbf16, #tpu.memory_space<vmem>>, vector<4x128xbf16>,
    %141 = vector.extract_strided_slice %126 {offsets = [54, 0], sizes = [4, 128], strides = [1, 1]} : vector<58x128xbf16> to vector<4x128xbf16>
    %c61_149 = arith.constant 61 : index
    %c0_150 = arith.constant 0 : index
    %142 = vector.load %arg10[%c61_149, %c0_150] : memref<72x128xbf16, #tpu.memory_space<vmem>>, vector<4x128xbf16>
    tpu.vector_store %arg10[%c61_149, %c0_150], %141 {strides = array<i32>} : memref<72x128xbf16, #tpu.memory_space<vmem>>, vector<4x128xbf16>,
    %cst_151 = arith.constant 0.000000e+00 : f32
    %143 = vector.broadcast %cst_151 : f32 to vector<58x128xf32>
    %c0_152 = arith.constant 0 : index
    %c0_153 = arith.constant 0 : index
    %144 = vector.load %arg10[%c0_152, %c0_153] : memref<72x128xbf16, #tpu.memory_space<vmem>>, vector<58x16xbf16>
    %c0_154 = arith.constant 0 : index
    %c0_155 = arith.constant 0 : index
    %c0_156 = arith.constant 0 : index
    %145 = vector.load %arg5[%c0_154, %c0_155, %c0_156] : memref<9x16x128xbf16, #tpu.memory_space<vmem>>, vector<1x16x128xbf16>
    %146 = vector.shape_cast %145 : vector<1x16x128xbf16> to vector<16x128xbf16>
    %cst_157 = arith.constant dense<0.000000e+00> : vector<58x128xf32>
    %147 = tpu.matmul %144, %146, %cst_157 {dimension_numbers = #tpu.dot_dimension_numbers<[1], [0], [0], [1], [0, 0, 1, 1], [], []>} : vector<58x16xbf16>, vector<16x128xbf16>, vector<58x128xf32> -> vector<58x128xf32>
    %148 = arith.addf %143, %147 : vector<58x128xf32>
    %c1_158 = arith.constant 1 : index
    %c0_159 = arith.constant 0 : index
    %149 = vector.load %arg10[%c1_158, %c0_159] : memref<72x128xbf16, #tpu.memory_space<vmem>>, vector<58x16xbf16>
    %c1_160 = arith.constant 1 : index
    %c0_161 = arith.constant 0 : index
    %c0_162 = arith.constant 0 : index
    %150 = vector.load %arg5[%c1_160, %c0_161, %c0_162] : memref<9x16x128xbf16, #tpu.memory_space<vmem>>, vector<1x16x128xbf16>
    %151 = vector.shape_cast %150 : vector<1x16x128xbf16> to vector<16x128xbf16>
    %cst_163 = arith.constant dense<0.000000e+00> : vector<58x128xf32>
    %152 = tpu.matmul %149, %151, %cst_163 {dimension_numbers = #tpu.dot_dimension_numbers<[1], [0], [0], [1], [0, 0, 1, 1], [], []>} : vector<58x16xbf16>, vector<16x128xbf16>, vector<58x128xf32> -> vector<58x128xf32>
    %153 = arith.addf %148, %152 : vector<58x128xf32>
    %c2_164 = arith.constant 2 : index
    %c0_165 = arith.constant 0 : index
    %154 = vector.load %arg10[%c2_164, %c0_165] : memref<72x128xbf16, #tpu.memory_space<vmem>>, vector<58x16xbf16>
    %c2_166 = arith.constant 2 : index
    %c0_167 = arith.constant 0 : index
    %c0_168 = arith.constant 0 : index
    %155 = vector.load %arg5[%c2_166, %c0_167, %c0_168] : memref<9x16x128xbf16, #tpu.memory_space<vmem>>, vector<1x16x128xbf16>
    %156 = vector.shape_cast %155 : vector<1x16x128xbf16> to vector<16x128xbf16>
    %cst_169 = arith.constant dense<0.000000e+00> : vector<58x128xf32>
    %157 = tpu.matmul %154, %156, %cst_169 {dimension_numbers = #tpu.dot_dimension_numbers<[1], [0], [0], [1], [0, 0, 1, 1], [], []>} : vector<58x16xbf16>, vector<16x128xbf16>, vector<58x128xf32> -> vector<58x128xf32>
    %158 = arith.addf %153, %157 : vector<58x128xf32>
    %c6_170 = arith.constant 6 : index
    %c0_171 = arith.constant 0 : index
    %159 = vector.load %arg10[%c6_170, %c0_171] : memref<72x128xbf16, #tpu.memory_space<vmem>>, vector<58x16xbf16>
    %c3_172 = arith.constant 3 : index
    %c0_173 = arith.constant 0 : index
    %c0_174 = arith.constant 0 : index
    %160 = vector.load %arg5[%c3_172, %c0_173, %c0_174] : memref<9x16x128xbf16, #tpu.memory_space<vmem>>, vector<1x16x128xbf16>
    %161 = vector.shape_cast %160 : vector<1x16x128xbf16> to vector<16x128xbf16>
    %cst_175 = arith.constant dense<0.000000e+00> : vector<58x128xf32>
    %162 = tpu.matmul %159, %161, %cst_175 {dimension_numbers = #tpu.dot_dimension_numbers<[1], [0], [0], [1], [0, 0, 1, 1], [], []>} : vector<58x16xbf16>, vector<16x128xbf16>, vector<58x128xf32> -> vector<58x128xf32>
    %163 = arith.addf %158, %162 : vector<58x128xf32>
    %c7_176 = arith.constant 7 : index
    %c0_177 = arith.constant 0 : index
    %164 = vector.load %arg10[%c7_176, %c0_177] : memref<72x128xbf16, #tpu.memory_space<vmem>>, vector<58x16xbf16>
    %c4_178 = arith.constant 4 : index
    %c0_179 = arith.constant 0 : index
    %c0_180 = arith.constant 0 : index
    %165 = vector.load %arg5[%c4_178, %c0_179, %c0_180] : memref<9x16x128xbf16, #tpu.memory_space<vmem>>, vector<1x16x128xbf16>
    %166 = vector.shape_cast %165 : vector<1x16x128xbf16> to vector<16x128xbf16>
    %cst_181 = arith.constant dense<0.000000e+00> : vector<58x128xf32>
    %167 = tpu.matmul %164, %166, %cst_181 {dimension_numbers = #tpu.dot_dimension_numbers<[1], [0], [0], [1], [0, 0, 1, 1], [], []>} : vector<58x16xbf16>, vector<16x128xbf16>, vector<58x128xf32> -> vector<58x128xf32>
    %168 = arith.addf %163, %167 : vector<58x128xf32>
    %c8_182 = arith.constant 8 : index
    %c0_183 = arith.constant 0 : index
    %169 = vector.load %arg10[%c8_182, %c0_183] : memref<72x128xbf16, #tpu.memory_space<vmem>>, vector<58x16xbf16>
    %c5_184 = arith.constant 5 : index
    %c0_185 = arith.constant 0 : index
    %c0_186 = arith.constant 0 : index
    %170 = vector.load %arg5[%c5_184, %c0_185, %c0_186] : memref<9x16x128xbf16, #tpu.memory_space<vmem>>, vector<1x16x128xbf16>
    %171 = vector.shape_cast %170 : vector<1x16x128xbf16> to vector<16x128xbf16>
    %cst_187 = arith.constant dense<0.000000e+00> : vector<58x128xf32>
    %172 = tpu.matmul %169, %171, %cst_187 {dimension_numbers = #tpu.dot_dimension_numbers<[1], [0], [0], [1], [0, 0, 1, 1], [], []>} : vector<58x16xbf16>, vector<16x128xbf16>, vector<58x128xf32> -> vector<58x128xf32>
    %173 = arith.addf %168, %172 : vector<58x128xf32>
    %c12_188 = arith.constant 12 : index
    %c0_189 = arith.constant 0 : index
    %174 = vector.load %arg10[%c12_188, %c0_189] : memref<72x128xbf16, #tpu.memory_space<vmem>>, vector<58x16xbf16>
    %c6_190 = arith.constant 6 : index
    %c0_191 = arith.constant 0 : index
    %c0_192 = arith.constant 0 : index
    %175 = vector.load %arg5[%c6_190, %c0_191, %c0_192] : memref<9x16x128xbf16, #tpu.memory_space<vmem>>, vector<1x16x128xbf16>
    %176 = vector.shape_cast %175 : vector<1x16x128xbf16> to vector<16x128xbf16>
    %cst_193 = arith.constant dense<0.000000e+00> : vector<58x128xf32>
    %177 = tpu.matmul %174, %176, %cst_193 {dimension_numbers = #tpu.dot_dimension_numbers<[1], [0], [0], [1], [0, 0, 1, 1], [], []>} : vector<58x16xbf16>, vector<16x128xbf16>, vector<58x128xf32> -> vector<58x128xf32>
    %178 = arith.addf %173, %177 : vector<58x128xf32>
    %c13_194 = arith.constant 13 : index
    %c0_195 = arith.constant 0 : index
    %179 = vector.load %arg10[%c13_194, %c0_195] : memref<72x128xbf16, #tpu.memory_space<vmem>>, vector<58x16xbf16>
    %c7_196 = arith.constant 7 : index
    %c0_197 = arith.constant 0 : index
    %c0_198 = arith.constant 0 : index
    %180 = vector.load %arg5[%c7_196, %c0_197, %c0_198] : memref<9x16x128xbf16, #tpu.memory_space<vmem>>, vector<1x16x128xbf16>
    %181 = vector.shape_cast %180 : vector<1x16x128xbf16> to vector<16x128xbf16>
    %cst_199 = arith.constant dense<0.000000e+00> : vector<58x128xf32>
    %182 = tpu.matmul %179, %181, %cst_199 {dimension_numbers = #tpu.dot_dimension_numbers<[1], [0], [0], [1], [0, 0, 1, 1], [], []>} : vector<58x16xbf16>, vector<16x128xbf16>, vector<58x128xf32> -> vector<58x128xf32>
    %183 = arith.addf %178, %182 : vector<58x128xf32>
    %c14_200 = arith.constant 14 : index
    %c0_201 = arith.constant 0 : index
    %184 = vector.load %arg10[%c14_200, %c0_201] : memref<72x128xbf16, #tpu.memory_space<vmem>>, vector<58x16xbf16>
    %c8_202 = arith.constant 8 : index
    %c0_203 = arith.constant 0 : index
    %c0_204 = arith.constant 0 : index
    %185 = vector.load %arg5[%c8_202, %c0_203, %c0_204] : memref<9x16x128xbf16, #tpu.memory_space<vmem>>, vector<1x16x128xbf16>
    %186 = vector.shape_cast %185 : vector<1x16x128xbf16> to vector<16x128xbf16>
    %cst_205 = arith.constant dense<0.000000e+00> : vector<58x128xf32>
    %187 = tpu.matmul %184, %186, %cst_205 {dimension_numbers = #tpu.dot_dimension_numbers<[1], [0], [0], [1], [0, 0, 1, 1], [], []>} : vector<58x16xbf16>, vector<16x128xbf16>, vector<58x128xf32> -> vector<58x128xf32>
    %188 = arith.addf %183, %187 : vector<58x128xf32>
    %c7_206 = arith.constant 7 : index
    %c0_207 = arith.constant 0 : index
    %189 = vector.load %arg9[%c7_206, %c0_207] : memref<72x128xbf16, #tpu.memory_space<vmem>>, vector<58x128xbf16>
    %190 = arith.extf %189 : vector<58x128xbf16> to vector<58x128xf32>
    %c0_208 = arith.constant 0 : index
    %c0_209 = arith.constant 0 : index
    %191 = vector.load %arg6[%c0_208, %c0_209] : memref<1x128xf32, #tpu.memory_space<vmem>>, vector<1x128xf32>
    %192 = vector.broadcast %191 : vector<1x128xf32> to vector<58x128xf32>
    %193 = arith.mulf %188, %192 : vector<58x128xf32>
    %c0_210 = arith.constant 0 : index
    %c0_211 = arith.constant 0 : index
    %194 = vector.load %arg7[%c0_210, %c0_211] : memref<1x128xf32, #tpu.memory_space<vmem>>, vector<1x128xf32>
    %195 = vector.broadcast %194 : vector<1x128xf32> to vector<58x128xf32>
    %196 = arith.addf %193, %195 : vector<58x128xf32>
    %197 = arith.addf %196, %190 : vector<58x128xf32>
    %cst_212 = arith.constant 0.000000e+00 : f32
    %198 = vector.broadcast %cst_212 : f32 to vector<58x128xf32>
    %199 = arith.maximumf %197, %198 : vector<58x128xf32>
    %200 = arith.truncf %199 : vector<58x128xf32> to vector<58x128xbf16>
    %201 = vector.extract_strided_slice %200 {offsets = [0, 0], sizes = [4, 128], strides = [1, 1]} : vector<58x128xbf16> to vector<4x128xbf16>
    %c0_213 = arith.constant 0 : index
    %c0_214 = arith.constant 0 : index
    %202 = vector.load %arg8[%c0_213, %c0_214] : memref<32x128xbf16, #tpu.memory_space<vmem>>, vector<4x128xbf16>
    tpu.vector_store %arg8[%c0_213, %c0_214], %201 {strides = array<i32>} : memref<32x128xbf16, #tpu.memory_space<vmem>>, vector<4x128xbf16>,
    %203 = vector.extract_strided_slice %200 {offsets = [6, 0], sizes = [4, 128], strides = [1, 1]} : vector<58x128xbf16> to vector<4x128xbf16>
    %c4_215 = arith.constant 4 : index
    %c0_216 = arith.constant 0 : index
    %204 = vector.load %arg8[%c4_215, %c0_216] : memref<32x128xbf16, #tpu.memory_space<vmem>>, vector<4x128xbf16>
    tpu.vector_store %arg8[%c4_215, %c0_216], %203 {strides = array<i32>} : memref<32x128xbf16, #tpu.memory_space<vmem>>, vector<4x128xbf16>,
    %205 = vector.extract_strided_slice %200 {offsets = [12, 0], sizes = [4, 128], strides = [1, 1]} : vector<58x128xbf16> to vector<4x128xbf16>
    %c8_217 = arith.constant 8 : index
    %c0_218 = arith.constant 0 : index
    %206 = vector.load %arg8[%c8_217, %c0_218] : memref<32x128xbf16, #tpu.memory_space<vmem>>, vector<4x128xbf16>
    tpu.vector_store %arg8[%c8_217, %c0_218], %205 {strides = array<i32>} : memref<32x128xbf16, #tpu.memory_space<vmem>>, vector<4x128xbf16>,
    %207 = vector.extract_strided_slice %200 {offsets = [18, 0], sizes = [4, 128], strides = [1, 1]} : vector<58x128xbf16> to vector<4x128xbf16>
    %c12_219 = arith.constant 12 : index
    %c0_220 = arith.constant 0 : index
    %208 = vector.load %arg8[%c12_219, %c0_220] : memref<32x128xbf16, #tpu.memory_space<vmem>>, vector<4x128xbf16>
    tpu.vector_store %arg8[%c12_219, %c0_220], %207 {strides = array<i32>} : memref<32x128xbf16, #tpu.memory_space<vmem>>, vector<4x128xbf16>,
    %209 = vector.extract_strided_slice %200 {offsets = [36, 0], sizes = [4, 128], strides = [1, 1]} : vector<58x128xbf16> to vector<4x128xbf16>
    %c16 = arith.constant 16 : index
    %c0_221 = arith.constant 0 : index
    %210 = vector.load %arg8[%c16, %c0_221] : memref<32x128xbf16, #tpu.memory_space<vmem>>, vector<4x128xbf16>
    tpu.vector_store %arg8[%c16, %c0_221], %209 {strides = array<i32>} : memref<32x128xbf16, #tpu.memory_space<vmem>>, vector<4x128xbf16>,
    %211 = vector.extract_strided_slice %200 {offsets = [42, 0], sizes = [4, 128], strides = [1, 1]} : vector<58x128xbf16> to vector<4x128xbf16>
    %c20 = arith.constant 20 : index
    %c0_222 = arith.constant 0 : index
    %212 = vector.load %arg8[%c20, %c0_222] : memref<32x128xbf16, #tpu.memory_space<vmem>>, vector<4x128xbf16>
    tpu.vector_store %arg8[%c20, %c0_222], %211 {strides = array<i32>} : memref<32x128xbf16, #tpu.memory_space<vmem>>, vector<4x128xbf16>,
    %213 = vector.extract_strided_slice %200 {offsets = [48, 0], sizes = [4, 128], strides = [1, 1]} : vector<58x128xbf16> to vector<4x128xbf16>
    %c24 = arith.constant 24 : index
    %c0_223 = arith.constant 0 : index
    %214 = vector.load %arg8[%c24, %c0_223] : memref<32x128xbf16, #tpu.memory_space<vmem>>, vector<4x128xbf16>
    tpu.vector_store %arg8[%c24, %c0_223], %213 {strides = array<i32>} : memref<32x128xbf16, #tpu.memory_space<vmem>>, vector<4x128xbf16>,
    %215 = vector.extract_strided_slice %200 {offsets = [54, 0], sizes = [4, 128], strides = [1, 1]} : vector<58x128xbf16> to vector<4x128xbf16>
    %c28 = arith.constant 28 : index
    %c0_224 = arith.constant 0 : index
    %216 = vector.load %arg8[%c28, %c0_224] : memref<32x128xbf16, #tpu.memory_space<vmem>>, vector<4x128xbf16>
    tpu.vector_store %arg8[%c28, %c0_224], %215 {strides = array<i32>} : memref<32x128xbf16, #tpu.memory_space<vmem>>, vector<4x128xbf16>,
    return
  }
  func.func @transform_0(%arg0: i32) -> (i32, i32, i32, i32) {
    %c0_i32 = arith.constant 0 : i32
    %c0_i32_0 = arith.constant 0 : i32
    %c0_i32_1 = arith.constant 0 : i32
    %c0_i32_2 = arith.constant 0 : i32
    %c0_i32_3 = arith.constant 0 : i32
    return %c0_i32, %c0_i32_0, %c0_i32_1, %c0_i32_2 : i32, i32, i32, i32
  }
  func.func @transform_1(%arg0: i32) -> (i32, i32, i32) {
    %c0_i32 = arith.constant 0 : i32
    %c0_i32_0 = arith.constant 0 : i32
    %c0_i32_1 = arith.constant 0 : i32
    %c0_i32_2 = arith.constant 0 : i32
    return %c0_i32, %c0_i32_0, %c0_i32_1 : i32, i32, i32
  }
  func.func @transform_2(%arg0: i32) -> (i32, i32) {
    %c0_i32 = arith.constant 0 : i32
    %c0_i32_0 = arith.constant 0 : i32
    %c0_i32_1 = arith.constant 0 : i32
    return %c0_i32, %c0_i32_0 : i32, i32
  }
  func.func @transform_3(%arg0: i32) -> (i32, i32) {
    %c0_i32 = arith.constant 0 : i32
    %c0_i32_0 = arith.constant 0 : i32
    %c0_i32_1 = arith.constant 0 : i32
    return %c0_i32, %c0_i32_0 : i32, i32
  }
  func.func @transform_4(%arg0: i32) -> (i32, i32, i32) {
    %c0_i32 = arith.constant 0 : i32
    %c0_i32_0 = arith.constant 0 : i32
    %c0_i32_1 = arith.constant 0 : i32
    %c0_i32_2 = arith.constant 0 : i32
    return %c0_i32, %c0_i32_0, %c0_i32_1 : i32, i32, i32
  }
  func.func @transform_5(%arg0: i32) -> (i32, i32) {
    %c0_i32 = arith.constant 0 : i32
    %c0_i32_0 = arith.constant 0 : i32
    %c0_i32_1 = arith.constant 0 : i32
    return %c0_i32, %c0_i32_0 : i32, i32
  }
  func.func @transform_6(%arg0: i32) -> (i32, i32) {
    %c0_i32 = arith.constant 0 : i32
    %c0_i32_0 = arith.constant 0 : i32
    %c0_i32_1 = arith.constant 0 : i32
    return %c0_i32, %c0_i32_0 : i32, i32
  }
  func.func @transform_7(%arg0: i32) -> (i32, i32) {
    %c0_i32 = arith.constant 0 : i32
    %c0_i32_0 = arith.constant 0 : i32
    %c0_i32_1 = arith.constant 0 : i32
    return %c0_i32, %c0_i32_0 : i32, i32
  }
}

module attributes {stable_mosaic.version = 11 : i64} {
  func.func @_layer2_gap_heads_kernel(%arg0: i32, %arg1: memref<2x4x9x128xbf16, #tpu.memory_space<vmem>>, %arg2: memref<9x16x128xbf16, #tpu.memory_space<vmem>>, %arg3: memref<1x128xf32, #tpu.memory_space<vmem>>, %arg4: memref<1x128xf32, #tpu.memory_space<vmem>>, %arg5: memref<9x32x128xbf16, #tpu.memory_space<vmem>>, %arg6: memref<1x128xf32, #tpu.memory_space<vmem>>, %arg7: memref<1x128xf32, #tpu.memory_space<vmem>>, %arg8: memref<16x128xbf16, #tpu.memory_space<vmem>>, %arg9: memref<1x128xf32, #tpu.memory_space<vmem>>, %arg10: memref<1x128xf32, #tpu.memory_space<vmem>>, %arg11: memref<32x128xbf16, #tpu.memory_space<vmem>>, %arg12: memref<1x128xf32, #tpu.memory_space<vmem>>, %arg13: memref<2x128xf32, #tpu.memory_space<vmem>>, %arg14: memref<32x128xbf16, #tpu.memory_space<vmem>>) attributes {dimension_semantics = [#tpu.dimension_semantics<arbitrary>], iteration_bounds = array<i64: 1>, scalar_prefetch = 0 : i64, scratch_operands = 1 : i64, tpu.core_type = #tpu.core_type<tc>, window_params = [{pipeline_mode = #tpu.pipeline_mode<synchronous>, transform_indices = @transform_0, window_bounds = array<i64: 2, 4, 9, 128>}, {pipeline_mode = #tpu.pipeline_mode<synchronous>, transform_indices = @transform_1, window_bounds = array<i64: 9, 16, 128>}, {pipeline_mode = #tpu.pipeline_mode<synchronous>, transform_indices = @transform_2, window_bounds = array<i64: 1, 128>}, {pipeline_mode = #tpu.pipeline_mode<synchronous>, transform_indices = @transform_3, window_bounds = array<i64: 1, 128>}, {pipeline_mode = #tpu.pipeline_mode<synchronous>, transform_indices = @transform_4, window_bounds = array<i64: 9, 32, 128>}, {pipeline_mode = #tpu.pipeline_mode<synchronous>, transform_indices = @transform_5, window_bounds = array<i64: 1, 128>}, {pipeline_mode = #tpu.pipeline_mode<synchronous>, transform_indices = @transform_6, window_bounds = array<i64: 1, 128>}, {pipeline_mode = #tpu.pipeline_mode<synchronous>, transform_indices = @transform_7, window_bounds = array<i64: 16, 128>}, {pipeline_mode = #tpu.pipeline_mode<synchronous>, transform_indices = @transform_8, window_bounds = array<i64: 1, 128>}, {pipeline_mode = #tpu.pipeline_mode<synchronous>, transform_indices = @transform_9, window_bounds = array<i64: 1, 128>}, {pipeline_mode = #tpu.pipeline_mode<synchronous>, transform_indices = @transform_10, window_bounds = array<i64: 32, 128>}, {pipeline_mode = #tpu.pipeline_mode<synchronous>, transform_indices = @transform_11, window_bounds = array<i64: 1, 128>}, {pipeline_mode = #tpu.pipeline_mode<synchronous>, transform_indices = @transform_12, window_bounds = array<i64: 2, 128>}]} {
    %cst = arith.constant 0.000000e+00 : bf16
    %0 = vector.broadcast %cst : bf16 to vector<32x128xbf16>
    %c0 = arith.constant 0 : index
    %c0_0 = arith.constant 0 : index
    %1 = vector.load %arg14[%c0, %c0_0] : memref<32x128xbf16, #tpu.memory_space<vmem>>, vector<32x128xbf16>
    tpu.vector_store %arg14[%c0, %c0_0], %0 {strides = array<i32>} : memref<32x128xbf16, #tpu.memory_space<vmem>>, vector<32x128xbf16>,
    %cst_1 = arith.constant 0.000000e+00 : f32
    %2 = vector.broadcast %cst_1 : f32 to vector<5x128xf32>
    %c0_2 = arith.constant 0 : index
    %c0_3 = arith.constant 0 : index
    %c0_4 = arith.constant 0 : index
    %c0_5 = arith.constant 0 : index
    %3 = vector.load %arg1[%c0_2, %c0_3, %c0_4, %c0_5] : memref<2x4x9x128xbf16, #tpu.memory_space<vmem>>, vector<1x1x5x16xbf16>
    %4 = vector.shape_cast %3 : vector<1x1x5x16xbf16> to vector<5x16xbf16>
    %c0_6 = arith.constant 0 : index
    %c0_7 = arith.constant 0 : index
    %c0_8 = arith.constant 0 : index
    %5 = vector.load %arg2[%c0_6, %c0_7, %c0_8] : memref<9x16x128xbf16, #tpu.memory_space<vmem>>, vector<1x16x128xbf16>
    %6 = vector.shape_cast %5 : vector<1x16x128xbf16> to vector<16x128xbf16>
    %cst_9 = arith.constant dense<0.000000e+00> : vector<5x128xf32>
    %7 = tpu.matmul %4, %6, %cst_9 {dimension_numbers = #tpu.dot_dimension_numbers<[1], [0], [0], [1], [0, 0, 1, 1], [], []>} : vector<5x16xbf16>, vector<16x128xbf16>, vector<5x128xf32> -> vector<5x128xf32>
    %8 = arith.addf %2, %7 : vector<5x128xf32>
    %c0_10 = arith.constant 0 : index
    %c1 = arith.constant 1 : index
    %c0_11 = arith.constant 0 : index
    %c0_12 = arith.constant 0 : index
    %9 = vector.load %arg1[%c0_10, %c1, %c0_11, %c0_12] : memref<2x4x9x128xbf16, #tpu.memory_space<vmem>>, vector<1x1x5x16xbf16>
    %10 = vector.shape_cast %9 : vector<1x1x5x16xbf16> to vector<5x16xbf16>
    %c1_13 = arith.constant 1 : index
    %c0_14 = arith.constant 0 : index
    %c0_15 = arith.constant 0 : index
    %11 = vector.load %arg2[%c1_13, %c0_14, %c0_15] : memref<9x16x128xbf16, #tpu.memory_space<vmem>>, vector<1x16x128xbf16>
    %12 = vector.shape_cast %11 : vector<1x16x128xbf16> to vector<16x128xbf16>
    %cst_16 = arith.constant dense<0.000000e+00> : vector<5x128xf32>
    %13 = tpu.matmul %10, %12, %cst_16 {dimension_numbers = #tpu.dot_dimension_numbers<[1], [0], [0], [1], [0, 0, 1, 1], [], []>} : vector<5x16xbf16>, vector<16x128xbf16>, vector<5x128xf32> -> vector<5x128xf32>
    %14 = arith.addf %8, %13 : vector<5x128xf32>
    %c0_17 = arith.constant 0 : index
    %c0_18 = arith.constant 0 : index
    %c1_19 = arith.constant 1 : index
    %c0_20 = arith.constant 0 : index
    %15 = vector.load %arg1[%c0_17, %c0_18, %c1_19, %c0_20] : memref<2x4x9x128xbf16, #tpu.memory_space<vmem>>, vector<1x1x5x16xbf16>
    %16 = vector.shape_cast %15 : vector<1x1x5x16xbf16> to vector<5x16xbf16>
    %c2 = arith.constant 2 : index
    %c0_21 = arith.constant 0 : index
    %c0_22 = arith.constant 0 : index
    %17 = vector.load %arg2[%c2, %c0_21, %c0_22] : memref<9x16x128xbf16, #tpu.memory_space<vmem>>, vector<1x16x128xbf16>
    %18 = vector.shape_cast %17 : vector<1x16x128xbf16> to vector<16x128xbf16>
    %cst_23 = arith.constant dense<0.000000e+00> : vector<5x128xf32>
    %19 = tpu.matmul %16, %18, %cst_23 {dimension_numbers = #tpu.dot_dimension_numbers<[1], [0], [0], [1], [0, 0, 1, 1], [], []>} : vector<5x16xbf16>, vector<16x128xbf16>, vector<5x128xf32> -> vector<5x128xf32>
    %20 = arith.addf %14, %19 : vector<5x128xf32>
    %c0_24 = arith.constant 0 : index
    %c2_25 = arith.constant 2 : index
    %c0_26 = arith.constant 0 : index
    %c0_27 = arith.constant 0 : index
    %21 = vector.load %arg1[%c0_24, %c2_25, %c0_26, %c0_27] : memref<2x4x9x128xbf16, #tpu.memory_space<vmem>>, vector<1x1x5x16xbf16>
    %22 = vector.shape_cast %21 : vector<1x1x5x16xbf16> to vector<5x16xbf16>
    %c3 = arith.constant 3 : index
    %c0_28 = arith.constant 0 : index
    %c0_29 = arith.constant 0 : index
    %23 = vector.load %arg2[%c3, %c0_28, %c0_29] : memref<9x16x128xbf16, #tpu.memory_space<vmem>>, vector<1x16x128xbf16>
    %24 = vector.shape_cast %23 : vector<1x16x128xbf16> to vector<16x128xbf16>
    %cst_30 = arith.constant dense<0.000000e+00> : vector<5x128xf32>
    %25 = tpu.matmul %22, %24, %cst_30 {dimension_numbers = #tpu.dot_dimension_numbers<[1], [0], [0], [1], [0, 0, 1, 1], [], []>} : vector<5x16xbf16>, vector<16x128xbf16>, vector<5x128xf32> -> vector<5x128xf32>
    %26 = arith.addf %20, %25 : vector<5x128xf32>
    %c0_31 = arith.constant 0 : index
    %c3_32 = arith.constant 3 : index
    %c0_33 = arith.constant 0 : index
    %c0_34 = arith.constant 0 : index
    %27 = vector.load %arg1[%c0_31, %c3_32, %c0_33, %c0_34] : memref<2x4x9x128xbf16, #tpu.memory_space<vmem>>, vector<1x1x5x16xbf16>
    %28 = vector.shape_cast %27 : vector<1x1x5x16xbf16> to vector<5x16xbf16>
    %c4 = arith.constant 4 : index
    %c0_35 = arith.constant 0 : index
    %c0_36 = arith.constant 0 : index
    %29 = vector.load %arg2[%c4, %c0_35, %c0_36] : memref<9x16x128xbf16, #tpu.memory_space<vmem>>, vector<1x16x128xbf16>
    %30 = vector.shape_cast %29 : vector<1x16x128xbf16> to vector<16x128xbf16>
    %cst_37 = arith.constant dense<0.000000e+00> : vector<5x128xf32>
    %31 = tpu.matmul %28, %30, %cst_37 {dimension_numbers = #tpu.dot_dimension_numbers<[1], [0], [0], [1], [0, 0, 1, 1], [], []>} : vector<5x16xbf16>, vector<16x128xbf16>, vector<5x128xf32> -> vector<5x128xf32>
    %32 = arith.addf %26, %31 : vector<5x128xf32>
    %c0_38 = arith.constant 0 : index
    %c2_39 = arith.constant 2 : index
    %c1_40 = arith.constant 1 : index
    %c0_41 = arith.constant 0 : index
    %33 = vector.load %arg1[%c0_38, %c2_39, %c1_40, %c0_41] : memref<2x4x9x128xbf16, #tpu.memory_space<vmem>>, vector<1x1x5x16xbf16>
    %34 = vector.shape_cast %33 : vector<1x1x5x16xbf16> to vector<5x16xbf16>
    %c5 = arith.constant 5 : index
    %c0_42 = arith.constant 0 : index
    %c0_43 = arith.constant 0 : index
    %35 = vector.load %arg2[%c5, %c0_42, %c0_43] : memref<9x16x128xbf16, #tpu.memory_space<vmem>>, vector<1x16x128xbf16>
    %36 = vector.shape_cast %35 : vector<1x16x128xbf16> to vector<16x128xbf16>
    %cst_44 = arith.constant dense<0.000000e+00> : vector<5x128xf32>
    %37 = tpu.matmul %34, %36, %cst_44 {dimension_numbers = #tpu.dot_dimension_numbers<[1], [0], [0], [1], [0, 0, 1, 1], [], []>} : vector<5x16xbf16>, vector<16x128xbf16>, vector<5x128xf32> -> vector<5x128xf32>
    %38 = arith.addf %32, %37 : vector<5x128xf32>
    %c0_45 = arith.constant 0 : index
    %c0_46 = arith.constant 0 : index
    %c3_47 = arith.constant 3 : index
    %c0_48 = arith.constant 0 : index
    %39 = vector.load %arg1[%c0_45, %c0_46, %c3_47, %c0_48] : memref<2x4x9x128xbf16, #tpu.memory_space<vmem>>, vector<1x1x5x16xbf16>
    %40 = vector.shape_cast %39 : vector<1x1x5x16xbf16> to vector<5x16xbf16>
    %c6 = arith.constant 6 : index
    %c0_49 = arith.constant 0 : index
    %c0_50 = arith.constant 0 : index
    %41 = vector.load %arg2[%c6, %c0_49, %c0_50] : memref<9x16x128xbf16, #tpu.memory_space<vmem>>, vector<1x16x128xbf16>
    %42 = vector.shape_cast %41 : vector<1x16x128xbf16> to vector<16x128xbf16>
    %cst_51 = arith.constant dense<0.000000e+00> : vector<5x128xf32>
    %43 = tpu.matmul %40, %42, %cst_51 {dimension_numbers = #tpu.dot_dimension_numbers<[1], [0], [0], [1], [0, 0, 1, 1], [], []>} : vector<5x16xbf16>, vector<16x128xbf16>, vector<5x128xf32> -> vector<5x128xf32>
    %44 = arith.addf %38, %43 : vector<5x128xf32>
    %c0_52 = arith.constant 0 : index
    %c1_53 = arith.constant 1 : index
    %c3_54 = arith.constant 3 : index
    %c0_55 = arith.constant 0 : index
    %45 = vector.load %arg1[%c0_52, %c1_53, %c3_54, %c0_55] : memref<2x4x9x128xbf16, #tpu.memory_space<vmem>>, vector<1x1x5x16xbf16>
    %46 = vector.shape_cast %45 : vector<1x1x5x16xbf16> to vector<5x16xbf16>
    %c7 = arith.constant 7 : index
    %c0_56 = arith.constant 0 : index
    %c0_57 = arith.constant 0 : index
    %47 = vector.load %arg2[%c7, %c0_56, %c0_57] : memref<9x16x128xbf16, #tpu.memory_space<vmem>>, vector<1x16x128xbf16>
    %48 = vector.shape_cast %47 : vector<1x16x128xbf16> to vector<16x128xbf16>
    %cst_58 = arith.constant dense<0.000000e+00> : vector<5x128xf32>
    %49 = tpu.matmul %46, %48, %cst_58 {dimension_numbers = #tpu.dot_dimension_numbers<[1], [0], [0], [1], [0, 0, 1, 1], [], []>} : vector<5x16xbf16>, vector<16x128xbf16>, vector<5x128xf32> -> vector<5x128xf32>
    %50 = arith.addf %44, %49 : vector<5x128xf32>
    %c0_59 = arith.constant 0 : index
    %c0_60 = arith.constant 0 : index
    %c4_61 = arith.constant 4 : index
    %c0_62 = arith.constant 0 : index
    %51 = vector.load %arg1[%c0_59, %c0_60, %c4_61, %c0_62] : memref<2x4x9x128xbf16, #tpu.memory_space<vmem>>, vector<1x1x5x16xbf16>
    %52 = vector.shape_cast %51 : vector<1x1x5x16xbf16> to vector<5x16xbf16>
    %c8 = arith.constant 8 : index
    %c0_63 = arith.constant 0 : index
    %c0_64 = arith.constant 0 : index
    %53 = vector.load %arg2[%c8, %c0_63, %c0_64] : memref<9x16x128xbf16, #tpu.memory_space<vmem>>, vector<1x16x128xbf16>
    %54 = vector.shape_cast %53 : vector<1x16x128xbf16> to vector<16x128xbf16>
    %cst_65 = arith.constant dense<0.000000e+00> : vector<5x128xf32>
    %55 = tpu.matmul %52, %54, %cst_65 {dimension_numbers = #tpu.dot_dimension_numbers<[1], [0], [0], [1], [0, 0, 1, 1], [], []>} : vector<5x16xbf16>, vector<16x128xbf16>, vector<5x128xf32> -> vector<5x128xf32>
    %56 = arith.addf %50, %55 : vector<5x128xf32>
    %c0_66 = arith.constant 0 : index
    %c0_67 = arith.constant 0 : index
    %57 = vector.load %arg3[%c0_66, %c0_67] : memref<1x128xf32, #tpu.memory_space<vmem>>, vector<1x128xf32>
    %58 = vector.broadcast %57 : vector<1x128xf32> to vector<5x128xf32>
    %59 = arith.mulf %56, %58 : vector<5x128xf32>
    %c0_68 = arith.constant 0 : index
    %c0_69 = arith.constant 0 : index
    %60 = vector.load %arg4[%c0_68, %c0_69] : memref<1x128xf32, #tpu.memory_space<vmem>>, vector<1x128xf32>
    %61 = vector.broadcast %60 : vector<1x128xf32> to vector<5x128xf32>
    %62 = arith.addf %59, %61 : vector<5x128xf32>
    %cst_70 = arith.constant 0.000000e+00 : f32
    %63 = vector.broadcast %cst_70 : f32 to vector<5x128xf32>
    %64 = arith.maximumf %62, %63 : vector<5x128xf32>
    %65 = arith.truncf %64 : vector<5x128xf32> to vector<5x128xbf16>
    %66 = vector.extract_strided_slice %65 {offsets = [0, 0], sizes = [2, 128], strides = [1, 1]} : vector<5x128xbf16> to vector<2x128xbf16>
    %c5_71 = arith.constant 5 : index
    %c0_72 = arith.constant 0 : index
    %67 = vector.load %arg14[%c5_71, %c0_72] : memref<32x128xbf16, #tpu.memory_space<vmem>>, vector<2x128xbf16>
    tpu.vector_store %arg14[%c5_71, %c0_72], %66 {strides = array<i32>} : memref<32x128xbf16, #tpu.memory_space<vmem>>, vector<2x128xbf16>,
    %68 = vector.extract_strided_slice %65 {offsets = [3, 0], sizes = [2, 128], strides = [1, 1]} : vector<5x128xbf16> to vector<2x128xbf16>
    %c9 = arith.constant 9 : index
    %c0_73 = arith.constant 0 : index
    %69 = vector.load %arg14[%c9, %c0_73] : memref<32x128xbf16, #tpu.memory_space<vmem>>, vector<2x128xbf16>
    tpu.vector_store %arg14[%c9, %c0_73], %68 {strides = array<i32>} : memref<32x128xbf16, #tpu.memory_space<vmem>>, vector<2x128xbf16>,
    %c0_74 = arith.constant 0 : index
    %c3_75 = arith.constant 3 : index
    %c0_76 = arith.constant 0 : index
    %c0_77 = arith.constant 0 : index
    %70 = vector.load %arg1[%c0_74, %c3_75, %c0_76, %c0_77] : memref<2x4x9x128xbf16, #tpu.memory_space<vmem>>, vector<1x1x5x16xbf16>
    %71 = vector.shape_cast %70 : vector<1x1x5x16xbf16> to vector<5x16xbf16>
    %c0_78 = arith.constant 0 : index
    %c0_79 = arith.constant 0 : index
    %72 = vector.load %arg8[%c0_78, %c0_79] : memref<16x128xbf16, #tpu.memory_space<vmem>>, vector<16x128xbf16>
    %cst_80 = arith.constant dense<0.000000e+00> : vector<5x128xf32>
    %73 = tpu.matmul %71, %72, %cst_80 {dimension_numbers = #tpu.dot_dimension_numbers<[1], [0], [0], [1], [0, 0, 1, 1], [], []>} : vector<5x16xbf16>, vector<16x128xbf16>, vector<5x128xf32> -> vector<5x128xf32>
    %c0_81 = arith.constant 0 : index
    %c0_82 = arith.constant 0 : index
    %74 = vector.load %arg9[%c0_81, %c0_82] : memref<1x128xf32, #tpu.memory_space<vmem>>, vector<1x128xf32>
    %75 = vector.broadcast %74 : vector<1x128xf32> to vector<5x128xf32>
    %76 = arith.mulf %73, %75 : vector<5x128xf32>
    %c0_83 = arith.constant 0 : index
    %c0_84 = arith.constant 0 : index
    %77 = vector.load %arg10[%c0_83, %c0_84] : memref<1x128xf32, #tpu.memory_space<vmem>>, vector<1x128xf32>
    %78 = vector.broadcast %77 : vector<1x128xf32> to vector<5x128xf32>
    %79 = arith.addf %76, %78 : vector<5x128xf32>
    %cst_85 = arith.constant 0.000000e+00 : f32
    %80 = vector.broadcast %cst_85 : f32 to vector<5x128xf32>
    %c1_86 = arith.constant 1 : index
    %c0_87 = arith.constant 0 : index
    %c0_88 = arith.constant 0 : index
    %c0_89 = arith.constant 0 : index
    %81 = vector.load %arg1[%c1_86, %c0_87, %c0_88, %c0_89] : memref<2x4x9x128xbf16, #tpu.memory_space<vmem>>, vector<1x1x5x16xbf16>
    %82 = vector.shape_cast %81 : vector<1x1x5x16xbf16> to vector<5x16xbf16>
    %c0_90 = arith.constant 0 : index
    %c0_91 = arith.constant 0 : index
    %c0_92 = arith.constant 0 : index
    %83 = vector.load %arg2[%c0_90, %c0_91, %c0_92] : memref<9x16x128xbf16, #tpu.memory_space<vmem>>, vector<1x16x128xbf16>
    %84 = vector.shape_cast %83 : vector<1x16x128xbf16> to vector<16x128xbf16>
    %cst_93 = arith.constant dense<0.000000e+00> : vector<5x128xf32>
    %85 = tpu.matmul %82, %84, %cst_93 {dimension_numbers = #tpu.dot_dimension_numbers<[1], [0], [0], [1], [0, 0, 1, 1], [], []>} : vector<5x16xbf16>, vector<16x128xbf16>, vector<5x128xf32> -> vector<5x128xf32>
    %86 = arith.addf %80, %85 : vector<5x128xf32>
    %c1_94 = arith.constant 1 : index
    %c1_95 = arith.constant 1 : index
    %c0_96 = arith.constant 0 : index
    %c0_97 = arith.constant 0 : index
    %87 = vector.load %arg1[%c1_94, %c1_95, %c0_96, %c0_97] : memref<2x4x9x128xbf16, #tpu.memory_space<vmem>>, vector<1x1x5x16xbf16>
    %88 = vector.shape_cast %87 : vector<1x1x5x16xbf16> to vector<5x16xbf16>
    %c1_98 = arith.constant 1 : index
    %c0_99 = arith.constant 0 : index
    %c0_100 = arith.constant 0 : index
    %89 = vector.load %arg2[%c1_98, %c0_99, %c0_100] : memref<9x16x128xbf16, #tpu.memory_space<vmem>>, vector<1x16x128xbf16>
    %90 = vector.shape_cast %89 : vector<1x16x128xbf16> to vector<16x128xbf16>
    %cst_101 = arith.constant dense<0.000000e+00> : vector<5x128xf32>
    %91 = tpu.matmul %88, %90, %cst_101 {dimension_numbers = #tpu.dot_dimension_numbers<[1], [0], [0], [1], [0, 0, 1, 1], [], []>} : vector<5x16xbf16>, vector<16x128xbf16>, vector<5x128xf32> -> vector<5x128xf32>
    %92 = arith.addf %86, %91 : vector<5x128xf32>
    %c1_102 = arith.constant 1 : index
    %c0_103 = arith.constant 0 : index
    %c1_104 = arith.constant 1 : index
    %c0_105 = arith.constant 0 : index
    %93 = vector.load %arg1[%c1_102, %c0_103, %c1_104, %c0_105] : memref<2x4x9x128xbf16, #tpu.memory_space<vmem>>, vector<1x1x5x16xbf16>
    %94 = vector.shape_cast %93 : vector<1x1x5x16xbf16> to vector<5x16xbf16>
    %c2_106 = arith.constant 2 : index
    %c0_107 = arith.constant 0 : index
    %c0_108 = arith.constant 0 : index
    %95 = vector.load %arg2[%c2_106, %c0_107, %c0_108] : memref<9x16x128xbf16, #tpu.memory_space<vmem>>, vector<1x16x128xbf16>
    %96 = vector.shape_cast %95 : vector<1x16x128xbf16> to vector<16x128xbf16>
    %cst_109 = arith.constant dense<0.000000e+00> : vector<5x128xf32>
    %97 = tpu.matmul %94, %96, %cst_109 {dimension_numbers = #tpu.dot_dimension_numbers<[1], [0], [0], [1], [0, 0, 1, 1], [], []>} : vector<5x16xbf16>, vector<16x128xbf16>, vector<5x128xf32> -> vector<5x128xf32>
    %98 = arith.addf %92, %97 : vector<5x128xf32>
    %c1_110 = arith.constant 1 : index
    %c2_111 = arith.constant 2 : index
    %c0_112 = arith.constant 0 : index
    %c0_113 = arith.constant 0 : index
    %99 = vector.load %arg1[%c1_110, %c2_111, %c0_112, %c0_113] : memref<2x4x9x128xbf16, #tpu.memory_space<vmem>>, vector<1x1x5x16xbf16>
    %100 = vector.shape_cast %99 : vector<1x1x5x16xbf16> to vector<5x16xbf16>
    %c3_114 = arith.constant 3 : index
    %c0_115 = arith.constant 0 : index
    %c0_116 = arith.constant 0 : index
    %101 = vector.load %arg2[%c3_114, %c0_115, %c0_116] : memref<9x16x128xbf16, #tpu.memory_space<vmem>>, vector<1x16x128xbf16>
    %102 = vector.shape_cast %101 : vector<1x16x128xbf16> to vector<16x128xbf16>
    %cst_117 = arith.constant dense<0.000000e+00> : vector<5x128xf32>
    %103 = tpu.matmul %100, %102, %cst_117 {dimension_numbers = #tpu.dot_dimension_numbers<[1], [0], [0], [1], [0, 0, 1, 1], [], []>} : vector<5x16xbf16>, vector<16x128xbf16>, vector<5x128xf32> -> vector<5x128xf32>
    %104 = arith.addf %98, %103 : vector<5x128xf32>
    %c1_118 = arith.constant 1 : index
    %c3_119 = arith.constant 3 : index
    %c0_120 = arith.constant 0 : index
    %c0_121 = arith.constant 0 : index
    %105 = vector.load %arg1[%c1_118, %c3_119, %c0_120, %c0_121] : memref<2x4x9x128xbf16, #tpu.memory_space<vmem>>, vector<1x1x5x16xbf16>
    %106 = vector.shape_cast %105 : vector<1x1x5x16xbf16> to vector<5x16xbf16>
    %c4_122 = arith.constant 4 : index
    %c0_123 = arith.constant 0 : index
    %c0_124 = arith.constant 0 : index
    %107 = vector.load %arg2[%c4_122, %c0_123, %c0_124] : memref<9x16x128xbf16, #tpu.memory_space<vmem>>, vector<1x16x128xbf16>
    %108 = vector.shape_cast %107 : vector<1x16x128xbf16> to vector<16x128xbf16>
    %cst_125 = arith.constant dense<0.000000e+00> : vector<5x128xf32>
    %109 = tpu.matmul %106, %108, %cst_125 {dimension_numbers = #tpu.dot_dimension_numbers<[1], [0], [0], [1], [0, 0, 1, 1], [], []>} : vector<5x16xbf16>, vector<16x128xbf16>, vector<5x128xf32> -> vector<5x128xf32>
    %110 = arith.addf %104, %109 : vector<5x128xf32>
    %c1_126 = arith.constant 1 : index
    %c2_127 = arith.constant 2 : index
    %c1_128 = arith.constant 1 : index
    %c0_129 = arith.constant 0 : index
    %111 = vector.load %arg1[%c1_126, %c2_127, %c1_128, %c0_129] : memref<2x4x9x128xbf16, #tpu.memory_space<vmem>>, vector<1x1x5x16xbf16>
    %112 = vector.shape_cast %111 : vector<1x1x5x16xbf16> to vector<5x16xbf16>
    %c5_130 = arith.constant 5 : index
    %c0_131 = arith.constant 0 : index
    %c0_132 = arith.constant 0 : index
    %113 = vector.load %arg2[%c5_130, %c0_131, %c0_132] : memref<9x16x128xbf16, #tpu.memory_space<vmem>>, vector<1x16x128xbf16>
    %114 = vector.shape_cast %113 : vector<1x16x128xbf16> to vector<16x128xbf16>
    %cst_133 = arith.constant dense<0.000000e+00> : vector<5x128xf32>
    %115 = tpu.matmul %112, %114, %cst_133 {dimension_numbers = #tpu.dot_dimension_numbers<[1], [0], [0], [1], [0, 0, 1, 1], [], []>} : vector<5x16xbf16>, vector<16x128xbf16>, vector<5x128xf32> -> vector<5x128xf32>
    %116 = arith.addf %110, %115 : vector<5x128xf32>
    %c1_134 = arith.constant 1 : index
    %c0_135 = arith.constant 0 : index
    %c3_136 = arith.constant 3 : index
    %c0_137 = arith.constant 0 : index
    %117 = vector.load %arg1[%c1_134, %c0_135, %c3_136, %c0_137] : memref<2x4x9x128xbf16, #tpu.memory_space<vmem>>, vector<1x1x5x16xbf16>
    %118 = vector.shape_cast %117 : vector<1x1x5x16xbf16> to vector<5x16xbf16>
    %c6_138 = arith.constant 6 : index
    %c0_139 = arith.constant 0 : index
    %c0_140 = arith.constant 0 : index
    %119 = vector.load %arg2[%c6_138, %c0_139, %c0_140] : memref<9x16x128xbf16, #tpu.memory_space<vmem>>, vector<1x16x128xbf16>
    %120 = vector.shape_cast %119 : vector<1x16x128xbf16> to vector<16x128xbf16>
    %cst_141 = arith.constant dense<0.000000e+00> : vector<5x128xf32>
    %121 = tpu.matmul %118, %120, %cst_141 {dimension_numbers = #tpu.dot_dimension_numbers<[1], [0], [0], [1], [0, 0, 1, 1], [], []>} : vector<5x16xbf16>, vector<16x128xbf16>, vector<5x128xf32> -> vector<5x128xf32>
    %122 = arith.addf %116, %121 : vector<5x128xf32>
    %c1_142 = arith.constant 1 : index
    %c1_143 = arith.constant 1 : index
    %c3_144 = arith.constant 3 : index
    %c0_145 = arith.constant 0 : index
    %123 = vector.load %arg1[%c1_142, %c1_143, %c3_144, %c0_145] : memref<2x4x9x128xbf16, #tpu.memory_space<vmem>>, vector<1x1x5x16xbf16>
    %124 = vector.shape_cast %123 : vector<1x1x5x16xbf16> to vector<5x16xbf16>
    %c7_146 = arith.constant 7 : index
    %c0_147 = arith.constant 0 : index
    %c0_148 = arith.constant 0 : index
    %125 = vector.load %arg2[%c7_146, %c0_147, %c0_148] : memref<9x16x128xbf16, #tpu.memory_space<vmem>>, vector<1x16x128xbf16>
    %126 = vector.shape_cast %125 : vector<1x16x128xbf16> to vector<16x128xbf16>
    %cst_149 = arith.constant dense<0.000000e+00> : vector<5x128xf32>
    %127 = tpu.matmul %124, %126, %cst_149 {dimension_numbers = #tpu.dot_dimension_numbers<[1], [0], [0], [1], [0, 0, 1, 1], [], []>} : vector<5x16xbf16>, vector<16x128xbf16>, vector<5x128xf32> -> vector<5x128xf32>
    %128 = arith.addf %122, %127 : vector<5x128xf32>
    %c1_150 = arith.constant 1 : index
    %c0_151 = arith.constant 0 : index
    %c4_152 = arith.constant 4 : index
    %c0_153 = arith.constant 0 : index
    %129 = vector.load %arg1[%c1_150, %c0_151, %c4_152, %c0_153] : memref<2x4x9x128xbf16, #tpu.memory_space<vmem>>, vector<1x1x5x16xbf16>
    %130 = vector.shape_cast %129 : vector<1x1x5x16xbf16> to vector<5x16xbf16>
    %c8_154 = arith.constant 8 : index
    %c0_155 = arith.constant 0 : index
    %c0_156 = arith.constant 0 : index
    %131 = vector.load %arg2[%c8_154, %c0_155, %c0_156] : memref<9x16x128xbf16, #tpu.memory_space<vmem>>, vector<1x16x128xbf16>
    %132 = vector.shape_cast %131 : vector<1x16x128xbf16> to vector<16x128xbf16>
    %cst_157 = arith.constant dense<0.000000e+00> : vector<5x128xf32>
    %133 = tpu.matmul %130, %132, %cst_157 {dimension_numbers = #tpu.dot_dimension_numbers<[1], [0], [0], [1], [0, 0, 1, 1], [], []>} : vector<5x16xbf16>, vector<16x128xbf16>, vector<5x128xf32> -> vector<5x128xf32>
    %134 = arith.addf %128, %133 : vector<5x128xf32>
    %c0_158 = arith.constant 0 : index
    %c0_159 = arith.constant 0 : index
    %135 = vector.load %arg3[%c0_158, %c0_159] : memref<1x128xf32, #tpu.memory_space<vmem>>, vector<1x128xf32>
    %136 = vector.broadcast %135 : vector<1x128xf32> to vector<5x128xf32>
    %137 = arith.mulf %134, %136 : vector<5x128xf32>
    %c0_160 = arith.constant 0 : index
    %c0_161 = arith.constant 0 : index
    %138 = vector.load %arg4[%c0_160, %c0_161] : memref<1x128xf32, #tpu.memory_space<vmem>>, vector<1x128xf32>
    %139 = vector.broadcast %138 : vector<1x128xf32> to vector<5x128xf32>
    %140 = arith.addf %137, %139 : vector<5x128xf32>
    %cst_162 = arith.constant 0.000000e+00 : f32
    %141 = vector.broadcast %cst_162 : f32 to vector<5x128xf32>
    %142 = arith.maximumf %140, %141 : vector<5x128xf32>
    %143 = arith.truncf %142 : vector<5x128xf32> to vector<5x128xbf16>
    %144 = vector.extract_strided_slice %143 {offsets = [0, 0], sizes = [2, 128], strides = [1, 1]} : vector<5x128xbf16> to vector<2x128xbf16>
    %c21 = arith.constant 21 : index
    %c0_163 = arith.constant 0 : index
    %145 = vector.load %arg14[%c21, %c0_163] : memref<32x128xbf16, #tpu.memory_space<vmem>>, vector<2x128xbf16>
    tpu.vector_store %arg14[%c21, %c0_163], %144 {strides = array<i32>} : memref<32x128xbf16, #tpu.memory_space<vmem>>, vector<2x128xbf16>,
    %146 = vector.extract_strided_slice %143 {offsets = [3, 0], sizes = [2, 128], strides = [1, 1]} : vector<5x128xbf16> to vector<2x128xbf16>
    %c25 = arith.constant 25 : index
    %c0_164 = arith.constant 0 : index
    %147 = vector.load %arg14[%c25, %c0_164] : memref<32x128xbf16, #tpu.memory_space<vmem>>, vector<2x128xbf16>
    tpu.vector_store %arg14[%c25, %c0_164], %146 {strides = array<i32>} : memref<32x128xbf16, #tpu.memory_space<vmem>>, vector<2x128xbf16>,
    %c1_165 = arith.constant 1 : index
    %c3_166 = arith.constant 3 : index
    %c0_167 = arith.constant 0 : index
    %c0_168 = arith.constant 0 : index
    %148 = vector.load %arg1[%c1_165, %c3_166, %c0_167, %c0_168] : memref<2x4x9x128xbf16, #tpu.memory_space<vmem>>, vector<1x1x5x16xbf16>
    %149 = vector.shape_cast %148 : vector<1x1x5x16xbf16> to vector<5x16xbf16>
    %c0_169 = arith.constant 0 : index
    %c0_170 = arith.constant 0 : index
    %150 = vector.load %arg8[%c0_169, %c0_170] : memref<16x128xbf16, #tpu.memory_space<vmem>>, vector<16x128xbf16>
    %cst_171 = arith.constant dense<0.000000e+00> : vector<5x128xf32>
    %151 = tpu.matmul %149, %150, %cst_171 {dimension_numbers = #tpu.dot_dimension_numbers<[1], [0], [0], [1], [0, 0, 1, 1], [], []>} : vector<5x16xbf16>, vector<16x128xbf16>, vector<5x128xf32> -> vector<5x128xf32>
    %c0_172 = arith.constant 0 : index
    %c0_173 = arith.constant 0 : index
    %152 = vector.load %arg9[%c0_172, %c0_173] : memref<1x128xf32, #tpu.memory_space<vmem>>, vector<1x128xf32>
    %153 = vector.broadcast %152 : vector<1x128xf32> to vector<5x128xf32>
    %154 = arith.mulf %151, %153 : vector<5x128xf32>
    %c0_174 = arith.constant 0 : index
    %c0_175 = arith.constant 0 : index
    %155 = vector.load %arg10[%c0_174, %c0_175] : memref<1x128xf32, #tpu.memory_space<vmem>>, vector<1x128xf32>
    %156 = vector.broadcast %155 : vector<1x128xf32> to vector<5x128xf32>
    %157 = arith.addf %154, %156 : vector<5x128xf32>
    %cst_176 = arith.constant 0.000000e+00 : f32
    %158 = vector.broadcast %cst_176 : f32 to vector<22x128xf32>
    %c0_177 = arith.constant 0 : index
    %c0_178 = arith.constant 0 : index
    %159 = vector.load %arg14[%c0_177, %c0_178] : memref<32x128xbf16, #tpu.memory_space<vmem>>, vector<22x32xbf16>
    %c0_179 = arith.constant 0 : index
    %c0_180 = arith.constant 0 : index
    %c0_181 = arith.constant 0 : index
    %160 = vector.load %arg5[%c0_179, %c0_180, %c0_181] : memref<9x32x128xbf16, #tpu.memory_space<vmem>>, vector<1x32x128xbf16>
    %161 = vector.shape_cast %160 : vector<1x32x128xbf16> to vector<32x128xbf16>
    %cst_182 = arith.constant dense<0.000000e+00> : vector<22x128xf32>
    %162 = tpu.matmul %159, %161, %cst_182 {dimension_numbers = #tpu.dot_dimension_numbers<[1], [0], [0], [1], [0, 0, 1, 1], [], []>} : vector<22x32xbf16>, vector<32x128xbf16>, vector<22x128xf32> -> vector<22x128xf32>
    %163 = arith.addf %158, %162 : vector<22x128xf32>
    %c1_183 = arith.constant 1 : index
    %c0_184 = arith.constant 0 : index
    %164 = vector.load %arg14[%c1_183, %c0_184] : memref<32x128xbf16, #tpu.memory_space<vmem>>, vector<22x32xbf16>
    %c1_185 = arith.constant 1 : index
    %c0_186 = arith.constant 0 : index
    %c0_187 = arith.constant 0 : index
    %165 = vector.load %arg5[%c1_185, %c0_186, %c0_187] : memref<9x32x128xbf16, #tpu.memory_space<vmem>>, vector<1x32x128xbf16>
    %166 = vector.shape_cast %165 : vector<1x32x128xbf16> to vector<32x128xbf16>
    %cst_188 = arith.constant dense<0.000000e+00> : vector<22x128xf32>
    %167 = tpu.matmul %164, %166, %cst_188 {dimension_numbers = #tpu.dot_dimension_numbers<[1], [0], [0], [1], [0, 0, 1, 1], [], []>} : vector<22x32xbf16>, vector<32x128xbf16>, vector<22x128xf32> -> vector<22x128xf32>
    %168 = arith.addf %163, %167 : vector<22x128xf32>
    %c2_189 = arith.constant 2 : index
    %c0_190 = arith.constant 0 : index
    %169 = vector.load %arg14[%c2_189, %c0_190] : memref<32x128xbf16, #tpu.memory_space<vmem>>, vector<22x32xbf16>
    %c2_191 = arith.constant 2 : index
    %c0_192 = arith.constant 0 : index
    %c0_193 = arith.constant 0 : index
    %170 = vector.load %arg5[%c2_191, %c0_192, %c0_193] : memref<9x32x128xbf16, #tpu.memory_space<vmem>>, vector<1x32x128xbf16>
    %171 = vector.shape_cast %170 : vector<1x32x128xbf16> to vector<32x128xbf16>
    %cst_194 = arith.constant dense<0.000000e+00> : vector<22x128xf32>
    %172 = tpu.matmul %169, %171, %cst_194 {dimension_numbers = #tpu.dot_dimension_numbers<[1], [0], [0], [1], [0, 0, 1, 1], [], []>} : vector<22x32xbf16>, vector<32x128xbf16>, vector<22x128xf32> -> vector<22x128xf32>
    %173 = arith.addf %168, %172 : vector<22x128xf32>
    %c4_195 = arith.constant 4 : index
    %c0_196 = arith.constant 0 : index
    %174 = vector.load %arg14[%c4_195, %c0_196] : memref<32x128xbf16, #tpu.memory_space<vmem>>, vector<22x32xbf16>
    %c3_197 = arith.constant 3 : index
    %c0_198 = arith.constant 0 : index
    %c0_199 = arith.constant 0 : index
    %175 = vector.load %arg5[%c3_197, %c0_198, %c0_199] : memref<9x32x128xbf16, #tpu.memory_space<vmem>>, vector<1x32x128xbf16>
    %176 = vector.shape_cast %175 : vector<1x32x128xbf16> to vector<32x128xbf16>
    %cst_200 = arith.constant dense<0.000000e+00> : vector<22x128xf32>
    %177 = tpu.matmul %174, %176, %cst_200 {dimension_numbers = #tpu.dot_dimension_numbers<[1], [0], [0], [1], [0, 0, 1, 1], [], []>} : vector<22x32xbf16>, vector<32x128xbf16>, vector<22x128xf32> -> vector<22x128xf32>
    %178 = arith.addf %173, %177 : vector<22x128xf32>
    %c5_201 = arith.constant 5 : index
    %c0_202 = arith.constant 0 : index
    %179 = vector.load %arg14[%c5_201, %c0_202] : memref<32x128xbf16, #tpu.memory_space<vmem>>, vector<22x32xbf16>
    %c4_203 = arith.constant 4 : index
    %c0_204 = arith.constant 0 : index
    %c0_205 = arith.constant 0 : index
    %180 = vector.load %arg5[%c4_203, %c0_204, %c0_205] : memref<9x32x128xbf16, #tpu.memory_space<vmem>>, vector<1x32x128xbf16>
    %181 = vector.shape_cast %180 : vector<1x32x128xbf16> to vector<32x128xbf16>
    %cst_206 = arith.constant dense<0.000000e+00> : vector<22x128xf32>
    %182 = tpu.matmul %179, %181, %cst_206 {dimension_numbers = #tpu.dot_dimension_numbers<[1], [0], [0], [1], [0, 0, 1, 1], [], []>} : vector<22x32xbf16>, vector<32x128xbf16>, vector<22x128xf32> -> vector<22x128xf32>
    %183 = arith.addf %178, %182 : vector<22x128xf32>
    %c6_207 = arith.constant 6 : index
    %c0_208 = arith.constant 0 : index
    %184 = vector.load %arg14[%c6_207, %c0_208] : memref<32x128xbf16, #tpu.memory_space<vmem>>, vector<22x32xbf16>
    %c5_209 = arith.constant 5 : index
    %c0_210 = arith.constant 0 : index
    %c0_211 = arith.constant 0 : index
    %185 = vector.load %arg5[%c5_209, %c0_210, %c0_211] : memref<9x32x128xbf16, #tpu.memory_space<vmem>>, vector<1x32x128xbf16>
    %186 = vector.shape_cast %185 : vector<1x32x128xbf16> to vector<32x128xbf16>
    %cst_212 = arith.constant dense<0.000000e+00> : vector<22x128xf32>
    %187 = tpu.matmul %184, %186, %cst_212 {dimension_numbers = #tpu.dot_dimension_numbers<[1], [0], [0], [1], [0, 0, 1, 1], [], []>} : vector<22x32xbf16>, vector<32x128xbf16>, vector<22x128xf32> -> vector<22x128xf32>
    %188 = arith.addf %183, %187 : vector<22x128xf32>
    %c8_213 = arith.constant 8 : index
    %c0_214 = arith.constant 0 : index
    %189 = vector.load %arg14[%c8_213, %c0_214] : memref<32x128xbf16, #tpu.memory_space<vmem>>, vector<22x32xbf16>
    %c6_215 = arith.constant 6 : index
    %c0_216 = arith.constant 0 : index
    %c0_217 = arith.constant 0 : index
    %190 = vector.load %arg5[%c6_215, %c0_216, %c0_217] : memref<9x32x128xbf16, #tpu.memory_space<vmem>>, vector<1x32x128xbf16>
    %191 = vector.shape_cast %190 : vector<1x32x128xbf16> to vector<32x128xbf16>
    %cst_218 = arith.constant dense<0.000000e+00> : vector<22x128xf32>
    %192 = tpu.matmul %189, %191, %cst_218 {dimension_numbers = #tpu.dot_dimension_numbers<[1], [0], [0], [1], [0, 0, 1, 1], [], []>} : vector<22x32xbf16>, vector<32x128xbf16>, vector<22x128xf32> -> vector<22x128xf32>
    %193 = arith.addf %188, %192 : vector<22x128xf32>
    %c9_219 = arith.constant 9 : index
    %c0_220 = arith.constant 0 : index
    %194 = vector.load %arg14[%c9_219, %c0_220] : memref<32x128xbf16, #tpu.memory_space<vmem>>, vector<22x32xbf16>
    %c7_221 = arith.constant 7 : index
    %c0_222 = arith.constant 0 : index
    %c0_223 = arith.constant 0 : index
    %195 = vector.load %arg5[%c7_221, %c0_222, %c0_223] : memref<9x32x128xbf16, #tpu.memory_space<vmem>>, vector<1x32x128xbf16>
    %196 = vector.shape_cast %195 : vector<1x32x128xbf16> to vector<32x128xbf16>
    %cst_224 = arith.constant dense<0.000000e+00> : vector<22x128xf32>
    %197 = tpu.matmul %194, %196, %cst_224 {dimension_numbers = #tpu.dot_dimension_numbers<[1], [0], [0], [1], [0, 0, 1, 1], [], []>} : vector<22x32xbf16>, vector<32x128xbf16>, vector<22x128xf32> -> vector<22x128xf32>
    %198 = arith.addf %193, %197 : vector<22x128xf32>
    %c10 = arith.constant 10 : index
    %c0_225 = arith.constant 0 : index
    %199 = vector.load %arg14[%c10, %c0_225] : memref<32x128xbf16, #tpu.memory_space<vmem>>, vector<22x32xbf16>
    %c8_226 = arith.constant 8 : index
    %c0_227 = arith.constant 0 : index
    %c0_228 = arith.constant 0 : index
    %200 = vector.load %arg5[%c8_226, %c0_227, %c0_228] : memref<9x32x128xbf16, #tpu.memory_space<vmem>>, vector<1x32x128xbf16>
    %201 = vector.shape_cast %200 : vector<1x32x128xbf16> to vector<32x128xbf16>
    %cst_229 = arith.constant dense<0.000000e+00> : vector<22x128xf32>
    %202 = tpu.matmul %199, %201, %cst_229 {dimension_numbers = #tpu.dot_dimension_numbers<[1], [0], [0], [1], [0, 0, 1, 1], [], []>} : vector<22x32xbf16>, vector<32x128xbf16>, vector<22x128xf32> -> vector<22x128xf32>
    %203 = arith.addf %198, %202 : vector<22x128xf32>
    %c0_230 = arith.constant 0 : index
    %c0_231 = arith.constant 0 : index
    %204 = vector.load %arg6[%c0_230, %c0_231] : memref<1x128xf32, #tpu.memory_space<vmem>>, vector<1x128xf32>
    %205 = vector.broadcast %204 : vector<1x128xf32> to vector<22x128xf32>
    %206 = arith.mulf %203, %205 : vector<22x128xf32>
    %c0_232 = arith.constant 0 : index
    %c0_233 = arith.constant 0 : index
    %207 = vector.load %arg7[%c0_232, %c0_233] : memref<1x128xf32, #tpu.memory_space<vmem>>, vector<1x128xf32>
    %208 = vector.broadcast %207 : vector<1x128xf32> to vector<22x128xf32>
    %209 = arith.addf %206, %208 : vector<22x128xf32>
    %cst_234 = arith.constant 0.000000e+00 : f32
    %210 = vector.broadcast %cst_234 : f32 to vector<1x128xf32>
    %211 = vector.extract_strided_slice %209 {offsets = [0, 0], sizes = [2, 128], strides = [1, 1]} : vector<22x128xf32> to vector<2x128xf32>
    %212 = vector.extract_strided_slice %79 {offsets = [0, 0], sizes = [2, 128], strides = [1, 1]} : vector<5x128xf32> to vector<2x128xf32>
    %213 = arith.addf %211, %212 : vector<2x128xf32>
    %cst_235 = arith.constant 0.000000e+00 : f32
    %214 = vector.broadcast %cst_235 : f32 to vector<2x128xf32>
    %215 = arith.maximumf %213, %214 : vector<2x128xf32>
    %cst_236 = arith.constant dense<0.000000e+00> : vector<128xf32>
    %216 = vector.multi_reduction <add>, %215, %cst_236 [0] : vector<2x128xf32> to vector<128xf32>
    %217 = vector.shape_cast %216 : vector<128xf32> to vector<1x128xf32>
    %218 = arith.addf %210, %217 : vector<1x128xf32>
    %219 = vector.extract_strided_slice %209 {offsets = [4, 0], sizes = [2, 128], strides = [1, 1]} : vector<22x128xf32> to vector<2x128xf32>
    %220 = vector.extract_strided_slice %79 {offsets = [3, 0], sizes = [2, 128], strides = [1, 1]} : vector<5x128xf32> to vector<2x128xf32>
    %221 = arith.addf %219, %220 : vector<2x128xf32>
    %cst_237 = arith.constant 0.000000e+00 : f32
    %222 = vector.broadcast %cst_237 : f32 to vector<2x128xf32>
    %223 = arith.maximumf %221, %222 : vector<2x128xf32>
    %cst_238 = arith.constant dense<0.000000e+00> : vector<128xf32>
    %224 = vector.multi_reduction <add>, %223, %cst_238 [0] : vector<2x128xf32> to vector<128xf32>
    %225 = vector.shape_cast %224 : vector<128xf32> to vector<1x128xf32>
    %226 = arith.addf %218, %225 : vector<1x128xf32>
    %cst_239 = arith.constant 2.500000e-01 : f32
    %227 = vector.broadcast %cst_239 : f32 to vector<1x128xf32>
    %228 = arith.mulf %226, %227 : vector<1x128xf32>
    %cst_240 = arith.constant 0.000000e+00 : f32
    %229 = vector.broadcast %cst_240 : f32 to vector<1x128xf32>
    %230 = vector.extract_strided_slice %209 {offsets = [16, 0], sizes = [2, 128], strides = [1, 1]} : vector<22x128xf32> to vector<2x128xf32>
    %231 = vector.extract_strided_slice %157 {offsets = [0, 0], sizes = [2, 128], strides = [1, 1]} : vector<5x128xf32> to vector<2x128xf32>
    %232 = arith.addf %230, %231 : vector<2x128xf32>
    %cst_241 = arith.constant 0.000000e+00 : f32
    %233 = vector.broadcast %cst_241 : f32 to vector<2x128xf32>
    %234 = arith.maximumf %232, %233 : vector<2x128xf32>
    %cst_242 = arith.constant dense<0.000000e+00> : vector<128xf32>
    %235 = vector.multi_reduction <add>, %234, %cst_242 [0] : vector<2x128xf32> to vector<128xf32>
    %236 = vector.shape_cast %235 : vector<128xf32> to vector<1x128xf32>
    %237 = arith.addf %229, %236 : vector<1x128xf32>
    %238 = vector.extract_strided_slice %209 {offsets = [20, 0], sizes = [2, 128], strides = [1, 1]} : vector<22x128xf32> to vector<2x128xf32>
    %239 = vector.extract_strided_slice %157 {offsets = [3, 0], sizes = [2, 128], strides = [1, 1]} : vector<5x128xf32> to vector<2x128xf32>
    %240 = arith.addf %238, %239 : vector<2x128xf32>
    %cst_243 = arith.constant 0.000000e+00 : f32
    %241 = vector.broadcast %cst_243 : f32 to vector<2x128xf32>
    %242 = arith.maximumf %240, %241 : vector<2x128xf32>
    %cst_244 = arith.constant dense<0.000000e+00> : vector<128xf32>
    %243 = vector.multi_reduction <add>, %242, %cst_244 [0] : vector<2x128xf32> to vector<128xf32>
    %244 = vector.shape_cast %243 : vector<128xf32> to vector<1x128xf32>
    %245 = arith.addf %237, %244 : vector<1x128xf32>
    %cst_245 = arith.constant 2.500000e-01 : f32
    %246 = vector.broadcast %cst_245 : f32 to vector<1x128xf32>
    %247 = arith.mulf %245, %246 : vector<1x128xf32>
    %248 = tpu.concatenate %228, %247 in 0 : vector<1x128xf32>, vector<1x128xf32> -> vector<2x128xf32>
    %249 = vector.extract_strided_slice %248 {offsets = [0, 0], sizes = [2, 32], strides = [1, 1]} : vector<2x128xf32> to vector<2x32xf32>
    %250 = arith.truncf %249 : vector<2x32xf32> to vector<2x32xbf16>
    %c0_246 = arith.constant 0 : index
    %c0_247 = arith.constant 0 : index
    %251 = vector.load %arg11[%c0_246, %c0_247] : memref<32x128xbf16, #tpu.memory_space<vmem>>, vector<32x128xbf16>
    %cst_248 = arith.constant dense<0.000000e+00> : vector<2x128xf32>
    %252 = tpu.matmul %250, %251, %cst_248 {dimension_numbers = #tpu.dot_dimension_numbers<[1], [0], [0], [1], [0, 0, 1, 1], [], []>} : vector<2x32xbf16>, vector<32x128xbf16>, vector<2x128xf32> -> vector<2x128xf32>
    %c0_249 = arith.constant 0 : index
    %c0_250 = arith.constant 0 : index
    %253 = vector.load %arg12[%c0_249, %c0_250] : memref<1x128xf32, #tpu.memory_space<vmem>>, vector<1x128xf32>
    %254 = vector.broadcast %253 : vector<1x128xf32> to vector<2x128xf32>
    %255 = arith.addf %252, %254 : vector<2x128xf32>
    %c0_251 = arith.constant 0 : index
    %c0_252 = arith.constant 0 : index
    %256 = vector.load %arg13[%c0_251, %c0_252] : memref<2x128xf32, #tpu.memory_space<vmem>>, vector<2x128xf32>
    tpu.vector_store %arg13[%c0_251, %c0_252], %255 {strides = array<i32>} : memref<2x128xf32, #tpu.memory_space<vmem>>, vector<2x128xf32>,
    return
  }
  func.func @transform_0(%arg0: i32) -> (i32, i32, i32, i32) {
    %c0_i32 = arith.constant 0 : i32
    %c0_i32_0 = arith.constant 0 : i32
    %c0_i32_1 = arith.constant 0 : i32
    %c0_i32_2 = arith.constant 0 : i32
    %c0_i32_3 = arith.constant 0 : i32
    return %c0_i32, %c0_i32_0, %c0_i32_1, %c0_i32_2 : i32, i32, i32, i32
  }
  func.func @transform_1(%arg0: i32) -> (i32, i32, i32) {
    %c0_i32 = arith.constant 0 : i32
    %c0_i32_0 = arith.constant 0 : i32
    %c0_i32_1 = arith.constant 0 : i32
    %c0_i32_2 = arith.constant 0 : i32
    return %c0_i32, %c0_i32_0, %c0_i32_1 : i32, i32, i32
  }
  func.func @transform_2(%arg0: i32) -> (i32, i32) {
    %c0_i32 = arith.constant 0 : i32
    %c0_i32_0 = arith.constant 0 : i32
    %c0_i32_1 = arith.constant 0 : i32
    return %c0_i32, %c0_i32_0 : i32, i32
  }
  func.func @transform_3(%arg0: i32) -> (i32, i32) {
    %c0_i32 = arith.constant 0 : i32
    %c0_i32_0 = arith.constant 0 : i32
    %c0_i32_1 = arith.constant 0 : i32
    return %c0_i32, %c0_i32_0 : i32, i32
  }
  func.func @transform_4(%arg0: i32) -> (i32, i32, i32) {
    %c0_i32 = arith.constant 0 : i32
    %c0_i32_0 = arith.constant 0 : i32
    %c0_i32_1 = arith.constant 0 : i32
    %c0_i32_2 = arith.constant 0 : i32
    return %c0_i32, %c0_i32_0, %c0_i32_1 : i32, i32, i32
  }
  func.func @transform_5(%arg0: i32) -> (i32, i32) {
    %c0_i32 = arith.constant 0 : i32
    %c0_i32_0 = arith.constant 0 : i32
    %c0_i32_1 = arith.constant 0 : i32
    return %c0_i32, %c0_i32_0 : i32, i32
  }
  func.func @transform_6(%arg0: i32) -> (i32, i32) {
    %c0_i32 = arith.constant 0 : i32
    %c0_i32_0 = arith.constant 0 : i32
    %c0_i32_1 = arith.constant 0 : i32
    return %c0_i32, %c0_i32_0 : i32, i32
  }
  func.func @transform_7(%arg0: i32) -> (i32, i32) {
    %c0_i32 = arith.constant 0 : i32
    %c0_i32_0 = arith.constant 0 : i32
    %c0_i32_1 = arith.constant 0 : i32
    return %c0_i32, %c0_i32_0 : i32, i32
  }
  func.func @transform_8(%arg0: i32) -> (i32, i32) {
    %c0_i32 = arith.constant 0 : i32
    %c0_i32_0 = arith.constant 0 : i32
    %c0_i32_1 = arith.constant 0 : i32
    return %c0_i32, %c0_i32_0 : i32, i32
  }
  func.func @transform_9(%arg0: i32) -> (i32, i32) {
    %c0_i32 = arith.constant 0 : i32
    %c0_i32_0 = arith.constant 0 : i32
    %c0_i32_1 = arith.constant 0 : i32
    return %c0_i32, %c0_i32_0 : i32, i32
  }
  func.func @transform_10(%arg0: i32) -> (i32, i32) {
    %c0_i32 = arith.constant 0 : i32
    %c0_i32_0 = arith.constant 0 : i32
    %c0_i32_1 = arith.constant 0 : i32
    return %c0_i32, %c0_i32_0 : i32, i32
  }
  func.func @transform_11(%arg0: i32) -> (i32, i32) {
    %c0_i32 = arith.constant 0 : i32
    %c0_i32_0 = arith.constant 0 : i32
    %c0_i32_1 = arith.constant 0 : i32
    return %c0_i32, %c0_i32_0 : i32, i32
  }
  func.func @transform_12(%arg0: i32) -> (i32, i32) {
    %c0_i32 = arith.constant 0 : i32
    %c0_i32_0 = arith.constant 0 : i32
    %c0_i32_1 = arith.constant 0 : i32
    return %c0_i32, %c0_i32_0 : i32, i32
  }
}

</mosaic_0001>

<llo_original>
// kernel: multi_head_resnet_forward.3
$region0: #{multi_head_resnet_forward.3}
  #allocation0 [shape = 'u32[]', space=smem, size = 0x4, offset = 0x4, fixed_abs, tag = 'smem constant byte address 0x4 - core index']
  #allocation1 [shape = 'u32[72,128]{1,0:T(1,128)}', space=vmem, size = 0x9000, scoped, tag = 'internal scratch']
  %s0 = inlined_call_operand.vmem [shape: bf16[128,256], index: 0, kind: input, shape index: {}]
  %s1 = inlined_call_operand.vmem [shape: bf16[256,128], index: 1, kind: input, shape index: {}]
  %s2 = inlined_call_operand.vmem [shape: f32[1,128], index: 2, kind: input, shape index: {}]
  %s3 = inlined_call_operand.vmem [shape: f32[1,128], index: 3, kind: input, shape index: {}]
  %s4 = inlined_call_operand.vmem [shape: bf16[128,128], index: 4, kind: output, shape index: {}]
  %s5 = sld [smem:[#allocation0]]
  $region26: #{multi_head_resnet_forward.3} parent=0
    _
  %s7 = ssub.s32 1, %s5
  %s8 = scalar_select 0, %s7, %s5
  // Predicated region
  $region2: #{multi_head_resnet_forward.3} parent=0 // pred_check
    _
  $region3: #{multi_head_resnet_forward.3} parent=0 // pred_check_branch
    %10 = sbr.rel (0) target = $region5
  $region4: #{multi_head_resnet_forward.3} parent=0 // pred_region
    _
  $region5: #{multi_head_resnet_forward.3} parent=0 // pred_fallthru
    _
  // Predicated region
  $region6: #{multi_head_resnet_forward.3} parent=0 // pred_check
    _
  $region7: #{multi_head_resnet_forward.3} parent=0 // pred_check_branch
    %12 = sbr.rel (0) target = $region9
  $region8: #{multi_head_resnet_forward.3} parent=0 // pred_region
    _
  $region9: #{multi_head_resnet_forward.3} parent=0 // pred_fallthru
    _
  // Predicated region
  $region10: #{multi_head_resnet_forward.3} parent=0 // pred_check
    _
  $region11: #{multi_head_resnet_forward.3} parent=0 // pred_check_branch
    %14 = sbr.rel (0) target = $region13
  $region12: #{multi_head_resnet_forward.3} parent=0 // pred_region
    _
  $region13: #{multi_head_resnet_forward.3} parent=0 // pred_fallthru
    _
  // Predicated region
  $region14: #{multi_head_resnet_forward.3} parent=0 // pred_check
    _
  $region15: #{multi_head_resnet_forward.3} parent=0 // pred_check_branch
    %16 = sbr.rel (0) target = $region17
  $region16: #{multi_head_resnet_forward.3} parent=0 // pred_region
    _
  $region17: #{multi_head_resnet_forward.3} parent=0 // pred_fallthru
    _
  %v17 = vld [vmem:[%s0] sm:$0xff]
  %v18 = vld [vmem:[%s0 + $0x8] sm:$0xff]
  %v19 = vld [vmem:[%s0 + $0x10] sm:$0xff]
  %v20 = vld [vmem:[%s0 + $0x18] sm:$0xff]
  %v21 = vld [vmem:[%s0 + $0x20] sm:$0xff]
  %v22 = vld [vmem:[%s0 + $0x28] sm:$0xff]
  %v23 = vld [vmem:[%s0 + $0x30] sm:$0xff]
  %v24 = vld [vmem:[%s0 + $0x38] sm:$0xff]
  %v25 = vld [vmem:[%s0 + $0x40] sm:$0xff]
  %v26 = vld [vmem:[%s0 + $0x48] sm:$0xff]
  %v27 = vld [vmem:[%s0 + $0x50] sm:$0xff]
  %v28 = vld [vmem:[%s0 + $0x58] sm:$0xff]
  %v29 = vld [vmem:[%s0 + $0x60] sm:$0xff]
  %v30 = vld [vmem:[%s0 + $0x68] sm:$0xff]
  %v31 = vld [vmem:[%s0 + $0x70] sm:$0xff]
  %v32 = vld [vmem:[%s0 + $0x78] sm:$0xff]
  %v33 = vld [vmem:[%s1] sm:$0xf]
  %v34 = vld [vmem:[%s1 + $0x4] sm:$0xf]
  %v35 = vld [vmem:[%s1 + $0x8] sm:$0xf]
  %v36 = vld [vmem:[%s1 + $0xc] sm:$0xf]
  %v37 = vld [vmem:[%s1 + $0x10] sm:$0xf]
  %v38 = vld [vmem:[%s1 + $0x14] sm:$0xf]
  %v39 = vld [vmem:[%s1 + $0x18] sm:$0xf]
  %v40 = vld [vmem:[%s1 + $0x1c] sm:$0xf]
  %v41 = vld [vmem:[%s1 + $0x20] sm:$0xf]
  %v42 = vld [vmem:[%s1 + $0x24] sm:$0xf]
  %v43 = vld [vmem:[%s1 + $0x28] sm:$0xf]
  %v44 = vld [vmem:[%s1 + $0x2c] sm:$0xf]
  %v45 = vld [vmem:[%s1 + $0x30] sm:$0xf]
  %v46 = vld [vmem:[%s1 + $0x34] sm:$0xf]
  %v47 = vld [vmem:[%s1 + $0x38] sm:$0xf]
  %v48 = vld [vmem:[%s1 + $0x3c] sm:$0xf]
  %v49 = vld [vmem:[%s1 + $0x40] sm:$0xf]
  %v50 = vld [vmem:[%s1 + $0x44] sm:$0xf]
  %v51 = vld [vmem:[%s1 + $0x48] sm:$0xf]
  %v52 = vld [vmem:[%s1 + $0x4c] sm:$0xf]
  %v53 = vld [vmem:[%s1 + $0x50] sm:$0xf]
  %v54 = vld [vmem:[%s1 + $0x54] sm:$0xf]
  %v55 = vld [vmem:[%s1 + $0x58] sm:$0xf]
  %v56 = vld [vmem:[%s1 + $0x5c] sm:$0xf]
  %v57 = vld [vmem:[%s1 + $0x60] sm:$0xf]
  %v58 = vld [vmem:[%s1 + $0x64] sm:$0xf]
  %v59 = vld [vmem:[%s1 + $0x68] sm:$0xf]
  %v60 = vld [vmem:[%s1 + $0x6c] sm:$0xf]
  %v61 = vld [vmem:[%s1 + $0x70] sm:$0xf]
  %v62 = vld [vmem:[%s1 + $0x74] sm:$0xf]
  %v63 = vld [vmem:[%s1 + $0x78] sm:$0xf]
  %v64 = vld [vmem:[%s1 + $0x7c] sm:$0xf]
  %v81 = vunpack.c.l.b16 %v17
  %v82 = vunpack.c.h.b16 %v17
  %v83 = vunpack.c.l.b16 %v18
  %v84 = vunpack.c.h.b16 %v18
  %v85 = vunpack.c.l.b16 %v19
  %v86 = vunpack.c.h.b16 %v19
  %v87 = vunpack.c.l.b16 %v20
  %v88 = vunpack.c.h.b16 %v20
  %v89 = vunpack.c.l.b16 %v21
  %v90 = vunpack.c.h.b16 %v21
  %v91 = vunpack.c.l.b16 %v22
  %v92 = vunpack.c.h.b16 %v22
  %v93 = vunpack.c.l.b16 %v23
  %v94 = vunpack.c.h.b16 %v23
  %v95 = vunpack.c.l.b16 %v24
  %v96 = vunpack.c.h.b16 %v24
  %v97 = vunpack.c.l.b16 %v25
  %v98 = vunpack.c.h.b16 %v25
  %v99 = vunpack.c.l.b16 %v26
  %v100 = vunpack.c.h.b16 %v26
  %v101 = vunpack.c.l.b16 %v27
  %v102 = vunpack.c.h.b16 %v27
  %v103 = vunpack.c.l.b16 %v28
  %v104 = vunpack.c.h.b16 %v28
  %v105 = vunpack.c.l.b16 %v29
  %v106 = vunpack.c.h.b16 %v29
  %v107 = vunpack.c.l.b16 %v30
  %v108 = vunpack.c.h.b16 %v30
  %v109 = vunpack.c.l.b16 %v31
  %v110 = vunpack.c.h.b16 %v31
  %v111 = vunpack.c.l.b16 %v32
  %v112 = vunpack.c.h.b16 %v32
  %v113 = vpack.c.b16 %v83, %v81
  %v114 = vpack.c.b16 %v84, %v82
  %v115 = vpack.c.b16 %v87, %v85
  %v116 = vpack.c.b16 %v88, %v86
  %v117 = vpack.c.b16 %v91, %v89
  %v118 = vpack.c.b16 %v92, %v90
  %v119 = vpack.c.b16 %v95, %v93
  %v120 = vpack.c.b16 %v96, %v94
  %v121 = vpack.c.b16 %v99, %v97
  %v122 = vpack.c.b16 %v100, %v98
  %v123 = vpack.c.b16 %v103, %v101
  %v124 = vpack.c.b16 %v104, %v102
  %v125 = vpack.c.b16 %v107, %v105
  %v126 = vpack.c.b16 %v108, %v106
  %v127 = vpack.c.b16 %v111, %v109
  %v128 = vpack.c.b16 %v112, %v110
  %v177 = vunpack.c.l.b16 %v33
  %v178 = vunpack.c.l.b16 %v34
  %v179 = vunpack.c.l.b16 %v35
  %v180 = vunpack.c.l.b16 %v36
  %v181 = vunpack.c.l.b16 %v37
  %v182 = vunpack.c.l.b16 %v38
  %v183 = vunpack.c.l.b16 %v39
  %v184 = vunpack.c.l.b16 %v40
  %v185 = vunpack.c.l.b16 %v41
  %v186 = vunpack.c.l.b16 %v42
  %v187 = vunpack.c.l.b16 %v43
  %v188 = vunpack.c.l.b16 %v44
  %v189 = vunpack.c.l.b16 %v45
  %v190 = vunpack.c.l.b16 %v46
  %v191 = vunpack.c.l.b16 %v47
  %v192 = vunpack.c.l.b16 %v48
  %v193 = vunpack.c.l.b16 %v49
  %v194 = vunpack.c.l.b16 %v50
  %v195 = vunpack.c.l.b16 %v51
  %v196 = vunpack.c.l.b16 %v52
  %v197 = vunpack.c.l.b16 %v53
  %v198 = vunpack.c.l.b16 %v54
  %v199 = vunpack.c.l.b16 %v55
  %v200 = vunpack.c.l.b16 %v56
  %v201 = vunpack.c.l.b16 %v57
  %v202 = vunpack.c.l.b16 %v58
  %v203 = vunpack.c.l.b16 %v59
  %v204 = vunpack.c.l.b16 %v60
  %v205 = vunpack.c.l.b16 %v61
  %v206 = vunpack.c.l.b16 %v62
  %v207 = vunpack.c.l.b16 %v63
  %v208 = vunpack.c.l.b16 %v64
  %v209 = vpack.c.b16 %v178, %v177
  %v210 = vpack.c.b16 %v180, %v179
  %v211 = vpack.c.b16 %v182, %v181
  %v212 = vpack.c.b16 %v184, %v183
  %v213 = vpack.c.b16 %v186, %v185
  %v214 = vpack.c.b16 %v188, %v187
  %v215 = vpack.c.b16 %v190, %v189
  %v216 = vpack.c.b16 %v192, %v191
  %v217 = vpack.c.b16 %v194, %v193
  %v218 = vpack.c.b16 %v196, %v195
  %v219 = vpack.c.b16 %v198, %v197
  %v220 = vpack.c.b16 %v200, %v199
  %v221 = vpack.c.b16 %v202, %v201
  %v222 = vpack.c.b16 %v204, %v203
  %v223 = vpack.c.b16 %v206, %v205
  %v224 = vpack.c.b16 %v208, %v207
  %241 = vmatpush.bf16.msra.mxu0 %v216
  %242 = vmatpush.bf16.msra.mxu0 %v215
  %243 = vmatpush.bf16.msra.mxu0 %v214
  %244 = vmatpush.bf16.msra.mxu0 %v213
  %245 = vmatpush.bf16.msra.mxu0 %v212
  %246 = vmatpush.bf16.msra.mxu0 %v211
  %247 = vmatpush.bf16.msra.mxu0 %v210
  %248 = vmatpush.bf16.msra.mxu0 %v209
  %249 = vmatmul.bf16.gmra.mxu0 %v113
  %v250 = vpop.f32.mrf.mxu0
  %v251 = vadd.f32 0.0, %v250
  %v252 = vpop.f32.mrf.mxu0
  %v253 = vadd.f32 0.0, %v252
  %254 = vmatmul.bf16.gmra.mxu0 %v115
  %v255 = vpop.f32.mrf.mxu0
  %v256 = vadd.f32 0.0, %v255
  %v257 = vpop.f32.mrf.mxu0
  %v258 = vadd.f32 0.0, %v257
  %259 = vmatmul.bf16.gmra.mxu0 %v117
  %v260 = vpop.f32.mrf.mxu0
  %v261 = vadd.f32 0.0, %v260
  %v262 = vpop.f32.mrf.mxu0
  %v263 = vadd.f32 0.0, %v262
  %264 = vmatmul.bf16.gmra.mxu0 %v119
  %v265 = vpop.f32.mrf.mxu0
  %v266 = vadd.f32 0.0, %v265
  %v267 = vpop.f32.mrf.mxu0
  %v268 = vadd.f32 0.0, %v267
  %269 = vmatmul.bf16.gmra.mxu0 %v121
  %v270 = vpop.f32.mrf.mxu0
  %v271 = vadd.f32 0.0, %v270
  %v272 = vpop.f32.mrf.mxu0
  %v273 = vadd.f32 0.0, %v272
  %274 = vmatmul.bf16.gmra.mxu0 %v123
  %v275 = vpop.f32.mrf.mxu0
  %v276 = vadd.f32 0.0, %v275
  %v277 = vpop.f32.mrf.mxu0
  %v278 = vadd.f32 0.0, %v277
  %279 = vmatmul.bf16.gmra.mxu0 %v125
  %v280 = vpop.f32.mrf.mxu0
  %v281 = vadd.f32 0.0, %v280
  %v282 = vpop.f32.mrf.mxu0
  %v283 = vadd.f32 0.0, %v282
  %284 = vmatmul.bf16.gmra.mxu0 %v127
  %v285 = vpop.f32.mrf.mxu0
  %v286 = vadd.f32 0.0, %v285
  %v287 = vpop.f32.mrf.mxu0
  %v288 = vadd.f32 0.0, %v287
  %289 = vdwg.mxu0
  %290 = vmatpush.bf16.msra.mxu0 %v224
  %291 = vmatpush.bf16.msra.mxu0 %v223
  %292 = vmatpush.bf16.msra.mxu0 %v222
  %293 = vmatpush.bf16.msra.mxu0 %v221
  %294 = vmatpush.bf16.msra.mxu0 %v220
  %295 = vmatpush.bf16.msra.mxu0 %v219
  %296 = vmatpush.bf16.msra.mxu0 %v218
  %297 = vmatpush.bf16.msra.mxu0 %v217
  %298 = vmatmul.bf16.gmra.mxu0 %v114
  %v299 = vpop.f32.mrf.mxu0
  %v300 = vadd.f32 %v251, %v299
  %v301 = vpop.f32.mrf.mxu0
  %v302 = vadd.f32 %v253, %v301
  %303 = vmatmul.bf16.gmra.mxu0 %v116
  %v304 = vpop.f32.mrf.mxu0
  %v305 = vadd.f32 %v256, %v304
  %v306 = vpop.f32.mrf.mxu0
  %v307 = vadd.f32 %v258, %v306
  %308 = vmatmul.bf16.gmra.mxu0 %v118
  %v309 = vpop.f32.mrf.mxu0
  %v310 = vadd.f32 %v261, %v309
  %v311 = vpop.f32.mrf.mxu0
  %v312 = vadd.f32 %v263, %v311
  %313 = vmatmul.bf16.gmra.mxu0 %v120
  %v314 = vpop.f32.mrf.mxu0
  %v315 = vadd.f32 %v266, %v314
  %v316 = vpop.f32.mrf.mxu0
  %v317 = vadd.f32 %v268, %v316
  %318 = vmatmul.bf16.gmra.mxu0 %v122
  %v319 = vpop.f32.mrf.mxu0
  %v320 = vadd.f32 %v271, %v319
  %v321 = vpop.f32.mrf.mxu0
  %v322 = vadd.f32 %v273, %v321
  %323 = vmatmul.bf16.gmra.mxu0 %v124
  %v324 = vpop.f32.mrf.mxu0
  %v325 = vadd.f32 %v276, %v324
  %v326 = vpop.f32.mrf.mxu0
  %v327 = vadd.f32 %v278, %v326
  %328 = vmatmul.bf16.gmra.mxu0 %v126
  %v329 = vpop.f32.mrf.mxu0
  %v330 = vadd.f32 %v281, %v329
  %v331 = vpop.f32.mrf.mxu0
  %v332 = vadd.f32 %v283, %v331
  %333 = vmatmul.bf16.gmra.mxu0 %v128
  %v334 = vpop.f32.mrf.mxu0
  %v335 = vadd.f32 %v286, %v334
  %v336 = vpop.f32.mrf.mxu0
  %v337 = vadd.f32 %v288, %v336
  %338 = vdwg.mxu0
  %v339 = vld [vmem:[%s2] sm:$0x1]
  %v341 = vperm.slane %v339, 0
  %v343 = vmul.f32 %v300, %v341
  %v344 = vmul.f32 %v302, %v341
  %v345 = vmul.f32 %v305, %v341
  %v346 = vmul.f32 %v307, %v341
  %v347 = vmul.f32 %v310, %v341
  %v348 = vmul.f32 %v312, %v341
  %v349 = vmul.f32 %v315, %v341
  %v350 = vmul.f32 %v317, %v341
  %v351 = vmul.f32 %v320, %v341
  %v352 = vmul.f32 %v322, %v341
  %v353 = vmul.f32 %v325, %v341
  %v354 = vmul.f32 %v327, %v341
  %v355 = vmul.f32 %v330, %v341
  %v356 = vmul.f32 %v332, %v341
  %v357 = vmul.f32 %v335, %v341
  %v358 = vmul.f32 %v337, %v341
  %v359 = vld [vmem:[%s3] sm:$0x1]
  %v361 = vperm.slane %v359, 0
  %v363 = vadd.f32 %v343, %v361
  %v364 = vadd.f32 %v344, %v361
  %v365 = vadd.f32 %v345, %v361
  %v366 = vadd.f32 %v346, %v361
  %v367 = vadd.f32 %v347, %v361
  %v368 = vadd.f32 %v348, %v361
  %v369 = vadd.f32 %v349, %v361
  %v370 = vadd.f32 %v350, %v361
  %v371 = vadd.f32 %v351, %v361
  %v372 = vadd.f32 %v352, %v361
  %v373 = vadd.f32 %v353, %v361
  %v374 = vadd.f32 %v354, %v361
  %v375 = vadd.f32 %v355, %v361
  %v376 = vadd.f32 %v356, %v361
  %v377 = vadd.f32 %v357, %v361
  %v378 = vadd.f32 %v358, %v361
  %v379 = vmax.f32 %v363, 0.0
  %v380 = vmax.f32 %v364, 0.0
  %v381 = vmax.f32 %v365, 0.0
  %v382 = vmax.f32 %v366, 0.0
  %v383 = vmax.f32 %v367, 0.0
  %v384 = vmax.f32 %v368, 0.0
  %v385 = vmax.f32 %v369, 0.0
  %v386 = vmax.f32 %v370, 0.0
  %v387 = vmax.f32 %v371, 0.0
  %v388 = vmax.f32 %v372, 0.0
  %v389 = vmax.f32 %v373, 0.0
  %v390 = vmax.f32 %v374, 0.0
  %v391 = vmax.f32 %v375, 0.0
  %v392 = vmax.f32 %v376, 0.0
  %v393 = vmax.f32 %v377, 0.0
  %v394 = vmax.f32 %v378, 0.0
  %v395 = vpack.c.bf16 %v379, %v379
  %v396 = vpack.c.bf16 %v380, %v380
  %v397 = vpack.c.bf16 %v381, %v381
  %v398 = vpack.c.bf16 %v382, %v382
  %v399 = vpack.c.bf16 %v383, %v383
  %v400 = vpack.c.bf16 %v384, %v384
  %v401 = vpack.c.bf16 %v385, %v385
  %v402 = vpack.c.bf16 %v386, %v386
  %v403 = vpack.c.bf16 %v387, %v387
  %v404 = vpack.c.bf16 %v388, %v388
  %v405 = vpack.c.bf16 %v389, %v389
  %v406 = vpack.c.bf16 %v390, %v390
  %v407 = vpack.c.bf16 %v391, %v391
  %v408 = vpack.c.bf16 %v392, %v392
  %v409 = vpack.c.bf16 %v393, %v393
  %v410 = vpack.c.bf16 %v394, %v394
  %411 = vst [vmem:[%s4] sm:$0xf] %v395
  %412 = vst [vmem:[%s4 + $0x4] sm:$0xf] %v396
  %413 = vst [vmem:[%s4 + $0x8] sm:$0xf] %v397
  %414 = vst [vmem:[%s4 + $0xc] sm:$0xf] %v398
  %415 = vst [vmem:[%s4 + $0x10] sm:$0xf] %v399
  %416 = vst [vmem:[%s4 + $0x14] sm:$0xf] %v400
  %417 = vst [vmem:[%s4 + $0x18] sm:$0xf] %v401
  %418 = vst [vmem:[%s4 + $0x1c] sm:$0xf] %v402
  %419 = vst [vmem:[%s4 + $0x20] sm:$0xf] %v403
  %420 = vst [vmem:[%s4 + $0x24] sm:$0xf] %v404
  %421 = vst [vmem:[%s4 + $0x28] sm:$0xf] %v405
  %422 = vst [vmem:[%s4 + $0x2c] sm:$0xf] %v406
  %423 = vst [vmem:[%s4 + $0x30] sm:$0xf] %v407
  %424 = vst [vmem:[%s4 + $0x34] sm:$0xf] %v408
  %425 = vst [vmem:[%s4 + $0x38] sm:$0xf] %v409
  %426 = vst [vmem:[%s4 + $0x3c] sm:$0xf] %v410
  // Predicated region
  $region18: #{multi_head_resnet_forward.3} parent=0 // pred_check
    _
  $region19: #{multi_head_resnet_forward.3} parent=0 // pred_check_branch
    %428 = sbr.rel (0) target = $region21
  $region20: #{multi_head_resnet_forward.3} parent=0 // pred_region
    _
  $region21: #{multi_head_resnet_forward.3} parent=0 // pred_fallthru
    _
  // Predicated region
  $region22: #{multi_head_resnet_forward.3} parent=0 // pred_check
    _
  $region23: #{multi_head_resnet_forward.3} parent=0 // pred_check_branch
    %430 = sbr.rel (0) target = $region25
  $region24: #{multi_head_resnet_forward.3} parent=0 // pred_region
    _
  $region25: #{multi_head_resnet_forward.3} parent=0 // pred_fallthru
    _

// kernel: multi_head_resnet_forward.5
$region0: #{multi_head_resnet_forward.5}
  #allocation0 [shape = 'u32[]', space=smem, size = 0x4, offset = 0x4, fixed_abs, tag = 'smem constant byte address 0x4 - core index']
  #allocation1 [shape = 'u32[72,128]{1,0:T(1,128)}', space=vmem, size = 0x9000, scoped, tag = 'internal scratch']
  #allocation2 [shape = 'bf16[32,128]{1,0:T(8,128)(2,1)}', space=vmem, size = 0x2000, scoped, tag = 'scratch operand']
  %s0 = inlined_call_operand.vmem [shape: bf16[2,4,9,128], index: 0, kind: input, shape index: {}]
  %s1 = inlined_call_operand.vmem [shape: bf16[9,16,128], index: 1, kind: input, shape index: {}]
  %s2 = inlined_call_operand.vmem [shape: f32[1,128], index: 2, kind: input, shape index: {}]
  %s3 = inlined_call_operand.vmem [shape: f32[1,128], index: 3, kind: input, shape index: {}]
  %s4 = inlined_call_operand.vmem [shape: bf16[9,32,128], index: 4, kind: input, shape index: {}]
  %s5 = inlined_call_operand.vmem [shape: f32[1,128], index: 5, kind: input, shape index: {}]
  %s6 = inlined_call_operand.vmem [shape: f32[1,128], index: 6, kind: input, shape index: {}]
  %s7 = inlined_call_operand.vmem [shape: bf16[16,128], index: 7, kind: input, shape index: {}]
  %s8 = inlined_call_operand.vmem [shape: f32[1,128], index: 8, kind: input, shape index: {}]
  %s9 = inlined_call_operand.vmem [shape: f32[1,128], index: 9, kind: input, shape index: {}]
  %s10 = inlined_call_operand.vmem [shape: bf16[32,128], index: 10, kind: input, shape index: {}]
  %s11 = inlined_call_operand.vmem [shape: f32[1,128], index: 11, kind: input, shape index: {}]
  %s12 = inlined_call_operand.vmem [shape: f32[2,128], index: 12, kind: output, shape index: {}]
  %s13 = sld [smem:[#allocation0]]
  $region58: #{multi_head_resnet_forward.5} parent=0
    _
  %s15 = ssub.s32 1, %s13
  %s16 = scalar_select 0, %s15, %s13
  // Predicated region
  $region2: #{multi_head_resnet_forward.5} parent=0 // pred_check
    _
  $region3: #{multi_head_resnet_forward.5} parent=0 // pred_check_branch
    %18 = sbr.rel (0) target = $region5
  $region4: #{multi_head_resnet_forward.5} parent=0 // pred_region
    _
  $region5: #{multi_head_resnet_forward.5} parent=0 // pred_fallthru
    _
  // Predicated region
  $region6: #{multi_head_resnet_forward.5} parent=0 // pred_check
    _
  $region7: #{multi_head_resnet_forward.5} parent=0 // pred_check_branch
    %20 = sbr.rel (0) target = $region9
  $region8: #{multi_head_resnet_forward.5} parent=0 // pred_region
    _
  $region9: #{multi_head_resnet_forward.5} parent=0 // pred_fallthru
    _
  // Predicated region
  $region10: #{multi_head_resnet_forward.5} parent=0 // pred_check
    _
  $region11: #{multi_head_resnet_forward.5} parent=0 // pred_check_branch
    %22 = sbr.rel (0) target = $region13
  $region12: #{multi_head_resnet_forward.5} parent=0 // pred_region
    _
  $region13: #{multi_head_resnet_forward.5} parent=0 // pred_fallthru
    _
  // Predicated region
  $region14: #{multi_head_resnet_forward.5} parent=0 // pred_check
    _
  $region15: #{multi_head_resnet_forward.5} parent=0 // pred_check_branch
    %24 = sbr.rel (0) target = $region17
  $region16: #{multi_head_resnet_forward.5} parent=0 // pred_region
    _
  $region17: #{multi_head_resnet_forward.5} parent=0 // pred_fallthru
    _
  // Predicated region
  $region18: #{multi_head_resnet_forward.5} parent=0 // pred_check
    _
  $region19: #{multi_head_resnet_forward.5} parent=0 // pred_check_branch
    %26 = sbr.rel (0) target = $region21
  $region20: #{multi_head_resnet_forward.5} parent=0 // pred_region
    _
  $region21: #{multi_head_resnet_forward.5} parent=0 // pred_fallthru
    _
  // Predicated region
  $region22: #{multi_head_resnet_forward.5} parent=0 // pred_check
    _
  $region23: #{multi_head_resnet_forward.5} parent=0 // pred_check_branch
    %28 = sbr.rel (0) target = $region25
  $region24: #{multi_head_resnet_forward.5} parent=0 // pred_region
    _
  $region25: #{multi_head_resnet_forward.5} parent=0 // pred_fallthru
    _
  // Predicated region
  $region26: #{multi_head_resnet_forward.5} parent=0 // pred_check
    _
  $region27: #{multi_head_resnet_forward.5} parent=0 // pred_check_branch
    %30 = sbr.rel (0) target = $region29
  $region28: #{multi_head_resnet_forward.5} parent=0 // pred_region
    _
  $region29: #{multi_head_resnet_forward.5} parent=0 // pred_fallthru
    _
  // Predicated region
  $region30: #{multi_head_resnet_forward.5} parent=0 // pred_check
    _
  $region31: #{multi_head_resnet_forward.5} parent=0 // pred_check_branch
    %32 = sbr.rel (0) target = $region33
  $region32: #{multi_head_resnet_forward.5} parent=0 // pred_region
    _
  $region33: #{multi_head_resnet_forward.5} parent=0 // pred_fallthru
    _
  // Predicated region
  $region34: #{multi_head_resnet_forward.5} parent=0 // pred_check
    _
  $region35: #{multi_head_resnet_forward.5} parent=0 // pred_check_branch
    %34 = sbr.rel (0) target = $region37
  $region36: #{multi_head_resnet_forward.5} parent=0 // pred_region
    _
  $region37: #{multi_head_resnet_forward.5} parent=0 // pred_fallthru
    _
  // Predicated region
  $region38: #{multi_head_resnet_forward.5} parent=0 // pred_check
    _
  $region39: #{multi_head_resnet_forward.5} parent=0 // pred_check_branch
    %36 = sbr.rel (0) target = $region41
  $region40: #{multi_head_resnet_forward.5} parent=0 // pred_region
    _
  $region41: #{multi_head_resnet_forward.5} parent=0 // pred_fallthru
    _
  // Predicated region
  $region42: #{multi_head_resnet_forward.5} parent=0 // pred_check
    _
  $region43: #{multi_head_resnet_forward.5} parent=0 // pred_check_branch
    %38 = sbr.rel (0) target = $region45
  $region44: #{multi_head_resnet_forward.5} parent=0 // pred_region
    _
  $region45: #{multi_head_resnet_forward.5} parent=0 // pred_fallthru
    _
  // Predicated region
  $region46: #{multi_head_resnet_forward.5} parent=0 // pred_check
    _
  $region47: #{multi_head_resnet_forward.5} parent=0 // pred_check_branch
    %40 = sbr.rel (0) target = $region49
  $region48: #{multi_head_resnet_forward.5} parent=0 // pred_region
    _
  $region49: #{multi_head_resnet_forward.5} parent=0 // pred_fallthru
    _
  %42 = vst [vmem:[#allocation2] sm:$0xf] 0
  %43 = vst [vmem:[#allocation2 + $0x4] sm:$0xf] 0
  %44 = vst [vmem:[#allocation2 + $0x8] sm:$0xf] 0
  %45 = vst [vmem:[#allocation2 + $0xc] sm:$0xf] 0
  %v46 = vld [vmem:[%s0] sm:$0x7]
  %v47 = vld [vmem:[%s1] sm:$0xf]
  %v48 = vld [vmem:[%s1 + $0x4] sm:$0xf]
  %s49 = scalar_lea.vmem %s0, 8
  %v50 = vld [vmem:[%s49] sm:$0x7]
  %s51 = scalar_lea.vmem %s1, 8
  %v52 = vld [vmem:[%s51] sm:$0xf]
  %v53 = vld [vmem:[%s51 + $0x4] sm:$0xf]
  %v56 = vunpack.c.l.b16 %v52
  %v57 = vunpack.c.l.b16 %v53
  %v58 = vpack.c.b16 %v57, %v56
  %vm60 = vcmask 130048
  %v62 = vsel %vm60, %v50, 0
  %64 = vmatpush.bf16.msra.mxu0 0
  %65 = vmatpush.bf16.msra.mxu0 0
  %66 = vmatpush.bf16.msra.mxu0 0
  %67 = vmatpush.bf16.msra.mxu0 0
  %68 = vmatpush.bf16.msra.mxu0 0
  %69 = vmatpush.bf16.msra.mxu0 0
  %70 = vmatpush.bf16.msra.mxu0 0
  %71 = vmatpush.bf16.msra.mxu0 %v58
  %72 = vmatmul.bf16.gmra.mxu0 %v62
  %v73 = vpop.f32.mrf.mxu0
  %v74 = vadd.f32 0.0, %v73
  %v75 = vpop.f32.mrf.mxu0
  %76 = vdwg.mxu0
  %v79 = vunpack.c.l.b16 %v47
  %v80 = vunpack.c.l.b16 %v48
  %v81 = vpack.c.b16 %v80, %v79
  %v84 = vsel %vm60, %v46, 0
  %86 = vmatpush.bf16.msra.mxu0 0
  %87 = vmatpush.bf16.msra.mxu0 0
  %88 = vmatpush.bf16.msra.mxu0 0
  %89 = vmatpush.bf16.msra.mxu0 0
  %90 = vmatpush.bf16.msra.mxu0 0
  %91 = vmatpush.bf16.msra.mxu0 0
  %92 = vmatpush.bf16.msra.mxu0 0
  %93 = vmatpush.bf16.msra.mxu0 %v81
  %94 = vmatmul.bf16.gmra.mxu0 %v84
  %v95 = vpop.f32.mrf.mxu0
  %v96 = vadd.f32 %v74, %v95
  %v97 = vpop.f32.mrf.mxu0
  %98 = vdwg.mxu0
  %s99 = scalar_lea.vmem %s1, 16
  %v100 = vld [vmem:[%s99] sm:$0xf]
  %v101 = vld [vmem:[%s99 + $0x4] sm:$0xf]
  %v103 = vunpack.c.l.b16 %v46
  %v104 = vpack.c.b16 %v103, %v103
  %v106 = vshrl.u32 %v104, 16
  %v108 = vshll.u32 %v104, 16
  %v110 = vrot.slane %v108, 1
  %v111 = vor.u32 %v106, %v110
  %v114 = vunpack.c.l.b16 %v100
  %v115 = vunpack.c.l.b16 %v101
  %v116 = vpack.c.b16 %v115, %v114
  %v119 = vsel %vm60, %v111, 0
  %121 = vmatpush.bf16.msra.mxu0 0
  %122 = vmatpush.bf16.msra.mxu0 0
  %123 = vmatpush.bf16.msra.mxu0 0
  %124 = vmatpush.bf16.msra.mxu0 0
  %125 = vmatpush.bf16.msra.mxu0 0
  %126 = vmatpush.bf16.msra.mxu0 0
  %127 = vmatpush.bf16.msra.mxu0 0
  %128 = vmatpush.bf16.msra.mxu0 %v116
  %129 = vmatmul.bf16.gmra.mxu0 %v119
  %v130 = vpop.f32.mrf.mxu0
  %v131 = vadd.f32 0.0, %v130
  %v132 = vpop.f32.mrf.mxu0
  %133 = vdwg.mxu0
  %v134 = vadd.f32 %v96, %v131
  %s135 = scalar_lea.vmem %s0, 16
  %v136 = vld [vmem:[%s135] sm:$0x7]
  %s137 = scalar_lea.vmem %s1, 24
  %v138 = vld [vmem:[%s137] sm:$0xf]
  %v139 = vld [vmem:[%s137 + $0x4] sm:$0xf]
  %v142 = vunpack.c.l.b16 %v138
  %v143 = vunpack.c.l.b16 %v139
  %v144 = vpack.c.b16 %v143, %v142
  %v147 = vsel %vm60, %v136, 0
  %149 = vmatpush.bf16.msra.mxu0 0
  %150 = vmatpush.bf16.msra.mxu0 0
  %151 = vmatpush.bf16.msra.mxu0 0
  %152 = vmatpush.bf16.msra.mxu0 0
  %153 = vmatpush.bf16.msra.mxu0 0
  %154 = vmatpush.bf16.msra.mxu0 0
  %155 = vmatpush.bf16.msra.mxu0 0
  %156 = vmatpush.bf16.msra.mxu0 %v144
  %157 = vmatmul.bf16.gmra.mxu0 %v147
  %v158 = vpop.f32.mrf.mxu0
  %v159 = vadd.f32 0.0, %v158
  %v160 = vpop.f32.mrf.mxu0
  %161 = vdwg.mxu0
  %v162 = vadd.f32 %v134, %v159
  %s163 = scalar_lea.vmem %s0, 24
  %v164 = vld [vmem:[%s163] sm:$0x7]
  %s165 = scalar_lea.vmem %s1, 32
  %v166 = vld [vmem:[%s165] sm:$0xf]
  %v167 = vld [vmem:[%s165 + $0x4] sm:$0xf]
  %v170 = vunpack.c.l.b16 %v166
  %v171 = vunpack.c.l.b16 %v167
  %v172 = vpack.c.b16 %v171, %v170
  %v175 = vsel %vm60, %v164, 0
  %177 = vmatpush.bf16.msra.mxu0 0
  %178 = vmatpush.bf16.msra.mxu0 0
  %179 = vmatpush.bf16.msra.mxu0 0
  %180 = vmatpush.bf16.msra.mxu0 0
  %181 = vmatpush.bf16.msra.mxu0 0
  %182 = vmatpush.bf16.msra.mxu0 0
  %183 = vmatpush.bf16.msra.mxu0 0
  %184 = vmatpush.bf16.msra.mxu0 %v172
  %185 = vmatmul.bf16.gmra.mxu0 %v175
  %v186 = vpop.f32.mrf.mxu0
  %v187 = vadd.f32 0.0, %v186
  %v188 = vpop.f32.mrf.mxu0
  %189 = vdwg.mxu0
  %v190 = vadd.f32 %v162, %v187
  %s191 = scalar_lea.vmem %s1, 40
  %v192 = vld [vmem:[%s191] sm:$0xf]
  %v193 = vld [vmem:[%s191 + $0x4] sm:$0xf]
  %v195 = vunpack.c.l.b16 %v136
  %v196 = vpack.c.b16 %v195, %v195
  %v198 = vshrl.u32 %v196, 16
  %v200 = vshll.u32 %v196, 16
  %v202 = vrot.slane %v200, 1
  %v203 = vor.u32 %v198, %v202
  %v206 = vunpack.c.l.b16 %v192
  %v207 = vunpack.c.l.b16 %v193
  %v208 = vpack.c.b16 %v207, %v206
  %v211 = vsel %vm60, %v203, 0
  %213 = vmatpush.bf16.msra.mxu0 0
  %214 = vmatpush.bf16.msra.mxu0 0
  %215 = vmatpush.bf16.msra.mxu0 0
  %216 = vmatpush.bf16.msra.mxu0 0
  %217 = vmatpush.bf16.msra.mxu0 0
  %218 = vmatpush.bf16.msra.mxu0 0
  %219 = vmatpush.bf16.msra.mxu0 0
  %220 = vmatpush.bf16.msra.mxu0 %v208
  %221 = vmatmul.bf16.gmra.mxu0 %v211
  %v222 = vpop.f32.mrf.mxu0
  %v223 = vadd.f32 0.0, %v222
  %v224 = vpop.f32.mrf.mxu0
  %225 = vdwg.mxu0
  %v226 = vadd.f32 %v190, %v223
  %v227 = vld [vmem:[%s0] sm:$0xe]
  %s228 = scalar_lea.vmem %s1, 48
  %v229 = vld [vmem:[%s228] sm:$0xf]
  %v230 = vld [vmem:[%s228 + $0x4] sm:$0xf]
  %v232 = vunpack.c.l.b16 %v227
  %v233 = vpack.c.b16 %v232, %v232
  %v235 = vshrl.u32 %v233, 16
  %v237 = vrot.slane %v235, 1
  %v238 = vshll.u32 %v233, 16
  %v240 = vrot.slane %v238, 2
  %v241 = vor.u32 %v237, %v240
  %v244 = vunpack.c.l.b16 %v229
  %v245 = vunpack.c.l.b16 %v230
  %v246 = vpack.c.b16 %v245, %v244
  %v249 = vsel %vm60, %v241, 0
  %251 = vmatpush.bf16.msra.mxu0 0
  %252 = vmatpush.bf16.msra.mxu0 0
  %253 = vmatpush.bf16.msra.mxu0 0
  %254 = vmatpush.bf16.msra.mxu0 0
  %255 = vmatpush.bf16.msra.mxu0 0
  %256 = vmatpush.bf16.msra.mxu0 0
  %257 = vmatpush.bf16.msra.mxu0 0
  %258 = vmatpush.bf16.msra.mxu0 %v246
  %259 = vmatmul.bf16.gmra.mxu0 %v249
  %v260 = vpop.f32.mrf.mxu0
  %v261 = vadd.f32 0.0, %v260
  %v262 = vpop.f32.mrf.mxu0
  %263 = vdwg.mxu0
  %v264 = vadd.f32 %v226, %v261
  %v265 = vld [vmem:[%s49] sm:$0xe]
  %s266 = scalar_lea.vmem %s1, 56
  %v267 = vld [vmem:[%s266] sm:$0xf]
  %v268 = vld [vmem:[%s266 + $0x4] sm:$0xf]
  %v270 = vunpack.c.l.b16 %v265
  %v271 = vpack.c.b16 %v270, %v270
  %v273 = vshrl.u32 %v271, 16
  %v275 = vrot.slane %v273, 1
  %v276 = vshll.u32 %v271, 16
  %v278 = vrot.slane %v276, 2
  %v279 = vor.u32 %v275, %v278
  %v282 = vunpack.c.l.b16 %v267
  %v283 = vunpack.c.l.b16 %v268
  %v284 = vpack.c.b16 %v283, %v282
  %v287 = vsel %vm60, %v279, 0
  %289 = vmatpush.bf16.msra.mxu0 0
  %290 = vmatpush.bf16.msra.mxu0 0
  %291 = vmatpush.bf16.msra.mxu0 0
  %292 = vmatpush.bf16.msra.mxu0 0
  %293 = vmatpush.bf16.msra.mxu0 0
  %294 = vmatpush.bf16.msra.mxu0 0
  %295 = vmatpush.bf16.msra.mxu0 0
  %296 = vmatpush.bf16.msra.mxu0 %v284
  %297 = vmatmul.bf16.gmra.mxu0 %v287
  %v298 = vpop.f32.mrf.mxu0
  %v299 = vadd.f32 0.0, %v298
  %v300 = vpop.f32.mrf.mxu0
  %301 = vdwg.mxu0
  %v302 = vadd.f32 %v264, %v299
  %v303 = vld [vmem:[%s0] sm:$0xc]
  %v304 = vld [vmem:[%s0 + $0x4] sm:$0x1]
  %s305 = scalar_lea.vmem %s1, 64
  %v306 = vld [vmem:[%s305] sm:$0xf]
  %v307 = vld [vmem:[%s305 + $0x4] sm:$0xf]
  %v310 = vunpack.c.l.b16 %v303
  %v311 = vunpack.c.l.b16 %v304
  %v312 = vpack.c.b16 %v311, %v310
  %v313 = vrot.slane %v312, 2
  %v316 = vunpack.c.l.b16 %v306
  %v317 = vunpack.c.l.b16 %v307
  %v318 = vpack.c.b16 %v317, %v316
  %v321 = vsel %vm60, %v313, 0
  %323 = vmatpush.bf16.msra.mxu0 0
  %324 = vmatpush.bf16.msra.mxu0 0
  %325 = vmatpush.bf16.msra.mxu0 0
  %326 = vmatpush.bf16.msra.mxu0 0
  %327 = vmatpush.bf16.msra.mxu0 0
  %328 = vmatpush.bf16.msra.mxu0 0
  %329 = vmatpush.bf16.msra.mxu0 0
  %330 = vmatpush.bf16.msra.mxu0 %v318
  %331 = vmatmul.bf16.gmra.mxu0 %v321
  %v332 = vpop.f32.mrf.mxu0
  %v333 = vadd.f32 0.0, %v332
  %v334 = vpop.f32.mrf.mxu0
  %335 = vdwg.mxu0
  %v336 = vadd.f32 %v302, %v333
  %v337 = vld [vmem:[%s2] sm:$0x1]
  %v339 = vperm.slane %v337, 0
  %v341 = vmul.f32 %v336, %v339
  %v342 = vld [vmem:[%s3] sm:$0x1]
  %v344 = vperm.slane %v342, 0
  %v346 = vadd.f32 %v341, %v344
  %v347 = vmax.f32 %v346, 0.0
  %v348 = vpack.c.bf16 %v347, %v347
  %v350 = vshrl.u32 %v348, 16
  %v352 = vrot.slane %v350, 5
  %v353 = vshll.u32 %v348, 16
  %v355 = vrot.slane %v353, 6
  %v356 = vor.u32 %v352, %v355
  %vm358 = vcmask 1043458
  %vm359 = vsmask.f32 3338
  %vm360 = vmand %vm358, %vm359
  %v361 = vld [vmem:[#allocation2] sm:$0xc]
  %v362 = vsel %vm360, %v356, %v361
  %363 = vst [vmem:[#allocation2] sm:$0xc] %v362
  %v365 = vrot.slane %v348, 5
  %v366 = vrot.slane %v365, 4
  %vm368 = vcmask 1041408
  %vm369 = vsmask.f32 1282
  %vm370 = vmand %vm368, %vm369
  %v371 = vld [vmem:[#allocation2 + $0x4] sm:$0x3]
  %v372 = vsel %vm370, %v366, %v371
  %373 = vst [vmem:[#allocation2 + $0x4] sm:$0x3] %v372
  %v374 = vld [vmem:[%s163] sm:$0x7]
  %v375 = vld [vmem:[%s7] sm:$0xf]
  %v376 = vld [vmem:[%s7 + $0x4] sm:$0xf]
  %v379 = vunpack.c.l.b16 %v375
  %v380 = vunpack.c.l.b16 %v376
  %v381 = vpack.c.b16 %v380, %v379
  %v384 = vsel %vm60, %v374, 0
  %386 = vmatpush.bf16.msra.mxu0 0
  %387 = vmatpush.bf16.msra.mxu0 0
  %388 = vmatpush.bf16.msra.mxu0 0
  %389 = vmatpush.bf16.msra.mxu0 0
  %390 = vmatpush.bf16.msra.mxu0 0
  %391 = vmatpush.bf16.msra.mxu0 0
  %392 = vmatpush.bf16.msra.mxu0 0
  %393 = vmatpush.bf16.msra.mxu0 %v381
  %394 = vmatmul.bf16.gmra.mxu0 %v384
  %v395 = vpop.f32.mrf.mxu0
  %v396 = vadd.f32 0.0, %v395
  %v397 = vpop.f32.mrf.mxu0
  %398 = vdwg.mxu0
  %v399 = vld [vmem:[%s8] sm:$0x1]
  %v401 = vperm.slane %v399, 0
  %v403 = vmul.f32 %v396, %v401
  %v404 = vld [vmem:[%s9] sm:$0x1]
  %v406 = vperm.slane %v404, 0
  %v408 = vadd.f32 %v403, %v406
  %s409 = scalar_lea.vmem %s0, 32
  %v410 = vld [vmem:[%s409] sm:$0x7]
  %v411 = vld [vmem:[%s1] sm:$0xf]
  %v412 = vld [vmem:[%s1 + $0x4] sm:$0xf]
  %s413 = scalar_lea.vmem %s0, 40
  %v414 = vld [vmem:[%s413] sm:$0x7]
  %v415 = vld [vmem:[%s51] sm:$0xf]
  %v416 = vld [vmem:[%s51 + $0x4] sm:$0xf]
  %v419 = vunpack.c.l.b16 %v415
  %v420 = vunpack.c.l.b16 %v416
  %v421 = vpack.c.b16 %v420, %v419
  %v424 = vsel %vm60, %v414, 0
  %426 = vmatpush.bf16.msra.mxu0 0
  %427 = vmatpush.bf16.msra.mxu0 0
  %428 = vmatpush.bf16.msra.mxu0 0
  %429 = vmatpush.bf16.msra.mxu0 0
  %430 = vmatpush.bf16.msra.mxu0 0
  %431 = vmatpush.bf16.msra.mxu0 0
  %432 = vmatpush.bf16.msra.mxu0 0
  %433 = vmatpush.bf16.msra.mxu0 %v421
  %434 = vmatmul.bf16.gmra.mxu0 %v424
  %v435 = vpop.f32.mrf.mxu0
  %v436 = vadd.f32 0.0, %v435
  %v437 = vpop.f32.mrf.mxu0
  %438 = vdwg.mxu0
  %v441 = vunpack.c.l.b16 %v411
  %v442 = vunpack.c.l.b16 %v412
  %v443 = vpack.c.b16 %v442, %v441
  %v446 = vsel %vm60, %v410, 0
  %448 = vmatpush.bf16.msra.mxu0 0
  %449 = vmatpush.bf16.msra.mxu0 0
  %450 = vmatpush.bf16.msra.mxu0 0
  %451 = vmatpush.bf16.msra.mxu0 0
  %452 = vmatpush.bf16.msra.mxu0 0
  %453 = vmatpush.bf16.msra.mxu0 0
  %454 = vmatpush.bf16.msra.mxu0 0
  %455 = vmatpush.bf16.msra.mxu0 %v443
  %456 = vmatmul.bf16.gmra.mxu0 %v446
  %v457 = vpop.f32.mrf.mxu0
  %v458 = vadd.f32 %v436, %v457
  %v459 = vpop.f32.mrf.mxu0
  %460 = vdwg.mxu0
  %v461 = vld [vmem:[%s99] sm:$0xf]
  %v462 = vld [vmem:[%s99 + $0x4] sm:$0xf]
  %v464 = vunpack.c.l.b16 %v410
  %v465 = vpack.c.b16 %v464, %v464
  %v467 = vshrl.u32 %v465, 16
  %v469 = vshll.u32 %v465, 16
  %v471 = vrot.slane %v469, 1
  %v472 = vor.u32 %v467, %v471
  %v475 = vunpack.c.l.b16 %v461
  %v476 = vunpack.c.l.b16 %v462
  %v477 = vpack.c.b16 %v476, %v475
  %v480 = vsel %vm60, %v472, 0
  %482 = vmatpush.bf16.msra.mxu0 0
  %483 = vmatpush.bf16.msra.mxu0 0
  %484 = vmatpush.bf16.msra.mxu0 0
  %485 = vmatpush.bf16.msra.mxu0 0
  %486 = vmatpush.bf16.msra.mxu0 0
  %487 = vmatpush.bf16.msra.mxu0 0
  %488 = vmatpush.bf16.msra.mxu0 0
  %489 = vmatpush.bf16.msra.mxu0 %v477
  %490 = vmatmul.bf16.gmra.mxu0 %v480
  %v491 = vpop.f32.mrf.mxu0
  %v492 = vadd.f32 0.0, %v491
  %v493 = vpop.f32.mrf.mxu0
  %494 = vdwg.mxu0
  %v495 = vadd.f32 %v458, %v492
  %s496 = scalar_lea.vmem %s0, 48
  %v497 = vld [vmem:[%s496] sm:$0x7]
  %v498 = vld [vmem:[%s137] sm:$0xf]
  %v499 = vld [vmem:[%s137 + $0x4] sm:$0xf]
  %v502 = vunpack.c.l.b16 %v498
  %v503 = vunpack.c.l.b16 %v499
  %v504 = vpack.c.b16 %v503, %v502
  %v507 = vsel %vm60, %v497, 0
  %509 = vmatpush.bf16.msra.mxu0 0
  %510 = vmatpush.bf16.msra.mxu0 0
  %511 = vmatpush.bf16.msra.mxu0 0
  %512 = vmatpush.bf16.msra.mxu0 0
  %513 = vmatpush.bf16.msra.mxu0 0
  %514 = vmatpush.bf16.msra.mxu0 0
  %515 = vmatpush.bf16.msra.mxu0 0
  %516 = vmatpush.bf16.msra.mxu0 %v504
  %517 = vmatmul.bf16.gmra.mxu0 %v507
  %v518 = vpop.f32.mrf.mxu0
  %v519 = vadd.f32 0.0, %v518
  %v520 = vpop.f32.mrf.mxu0
  %521 = vdwg.mxu0
  %v522 = vadd.f32 %v495, %v519
  %s523 = scalar_lea.vmem %s0, 56
  %v524 = vld [vmem:[%s523] sm:$0x7]
  %v525 = vld [vmem:[%s165] sm:$0xf]
  %v526 = vld [vmem:[%s165 + $0x4] sm:$0xf]
  %v529 = vunpack.c.l.b16 %v525
  %v530 = vunpack.c.l.b16 %v526
  %v531 = vpack.c.b16 %v530, %v529
  %v534 = vsel %vm60, %v524, 0
  %536 = vmatpush.bf16.msra.mxu0 0
  %537 = vmatpush.bf16.msra.mxu0 0
  %538 = vmatpush.bf16.msra.mxu0 0
  %539 = vmatpush.bf16.msra.mxu0 0
  %540 = vmatpush.bf16.msra.mxu0 0
  %541 = vmatpush.bf16.msra.mxu0 0
  %542 = vmatpush.bf16.msra.mxu0 0
  %543 = vmatpush.bf16.msra.mxu0 %v531
  %544 = vmatmul.bf16.gmra.mxu0 %v534
  %v545 = vpop.f32.mrf.mxu0
  %v546 = vadd.f32 0.0, %v545
  %v547 = vpop.f32.mrf.mxu0
  %548 = vdwg.mxu0
  %v549 = vadd.f32 %v522, %v546
  %v550 = vld [vmem:[%s191] sm:$0xf]
  %v551 = vld [vmem:[%s191 + $0x4] sm:$0xf]
  %v553 = vunpack.c.l.b16 %v497
  %v554 = vpack.c.b16 %v553, %v553
  %v556 = vshrl.u32 %v554, 16
  %v558 = vshll.u32 %v554, 16
  %v560 = vrot.slane %v558, 1
  %v561 = vor.u32 %v556, %v560
  %v564 = vunpack.c.l.b16 %v550
  %v565 = vunpack.c.l.b16 %v551
  %v566 = vpack.c.b16 %v565, %v564
  %v569 = vsel %vm60, %v561, 0
  %571 = vmatpush.bf16.msra.mxu0 0
  %572 = vmatpush.bf16.msra.mxu0 0
  %573 = vmatpush.bf16.msra.mxu0 0
  %574 = vmatpush.bf16.msra.mxu0 0
  %575 = vmatpush.bf16.msra.mxu0 0
  %576 = vmatpush.bf16.msra.mxu0 0
  %577 = vmatpush.bf16.msra.mxu0 0
  %578 = vmatpush.bf16.msra.mxu0 %v566
  %579 = vmatmul.bf16.gmra.mxu0 %v569
  %v580 = vpop.f32.mrf.mxu0
  %v581 = vadd.f32 0.0, %v580
  %v582 = vpop.f32.mrf.mxu0
  %583 = vdwg.mxu0
  %v584 = vadd.f32 %v549, %v581
  %v585 = vld [vmem:[%s409] sm:$0xe]
  %v586 = vld [vmem:[%s228] sm:$0xf]
  %v587 = vld [vmem:[%s228 + $0x4] sm:$0xf]
  %v589 = vunpack.c.l.b16 %v585
  %v590 = vpack.c.b16 %v589, %v589
  %v592 = vshrl.u32 %v590, 16
  %v594 = vrot.slane %v592, 1
  %v595 = vshll.u32 %v590, 16
  %v597 = vrot.slane %v595, 2
  %v598 = vor.u32 %v594, %v597
  %v601 = vunpack.c.l.b16 %v586
  %v602 = vunpack.c.l.b16 %v587
  %v603 = vpack.c.b16 %v602, %v601
  %v606 = vsel %vm60, %v598, 0
  %608 = vmatpush.bf16.msra.mxu0 0
  %609 = vmatpush.bf16.msra.mxu0 0
  %610 = vmatpush.bf16.msra.mxu0 0
  %611 = vmatpush.bf16.msra.mxu0 0
  %612 = vmatpush.bf16.msra.mxu0 0
  %613 = vmatpush.bf16.msra.mxu0 0
  %614 = vmatpush.bf16.msra.mxu0 0
  %615 = vmatpush.bf16.msra.mxu0 %v603
  %616 = vmatmul.bf16.gmra.mxu0 %v606
  %v617 = vpop.f32.mrf.mxu0
  %v618 = vadd.f32 0.0, %v617
  %v619 = vpop.f32.mrf.mxu0
  %620 = vdwg.mxu0
  %v621 = vadd.f32 %v584, %v618
  %v622 = vld [vmem:[%s413] sm:$0xe]
  %v623 = vld [vmem:[%s266] sm:$0xf]
  %v624 = vld [vmem:[%s266 + $0x4] sm:$0xf]
  %v626 = vunpack.c.l.b16 %v622
  %v627 = vpack.c.b16 %v626, %v626
  %v629 = vshrl.u32 %v627, 16
  %v631 = vrot.slane %v629, 1
  %v632 = vshll.u32 %v627, 16
  %v634 = vrot.slane %v632, 2
  %v635 = vor.u32 %v631, %v634
  %v638 = vunpack.c.l.b16 %v623
  %v639 = vunpack.c.l.b16 %v624
  %v640 = vpack.c.b16 %v639, %v638
  %v643 = vsel %vm60, %v635, 0
  %645 = vmatpush.bf16.msra.mxu0 0
  %646 = vmatpush.bf16.msra.mxu0 0
  %647 = vmatpush.bf16.msra.mxu0 0
  %648 = vmatpush.bf16.msra.mxu0 0
  %649 = vmatpush.bf16.msra.mxu0 0
  %650 = vmatpush.bf16.msra.mxu0 0
  %651 = vmatpush.bf16.msra.mxu0 0
  %652 = vmatpush.bf16.msra.mxu0 %v640
  %653 = vmatmul.bf16.gmra.mxu0 %v643
  %v654 = vpop.f32.mrf.mxu0
  %v655 = vadd.f32 0.0, %v654
  %v656 = vpop.f32.mrf.mxu0
  %657 = vdwg.mxu0
  %v658 = vadd.f32 %v621, %v655
  %v659 = vld [vmem:[%s409] sm:$0xc]
  %v660 = vld [vmem:[%s409 + $0x4] sm:$0x1]
  %v661 = vld [vmem:[%s305] sm:$0xf]
  %v662 = vld [vmem:[%s305 + $0x4] sm:$0xf]
  %v665 = vunpack.c.l.b16 %v659
  %v666 = vunpack.c.l.b16 %v660
  %v667 = vpack.c.b16 %v666, %v665
  %v668 = vrot.slane %v667, 2
  %v671 = vunpack.c.l.b16 %v661
  %v672 = vunpack.c.l.b16 %v662
  %v673 = vpack.c.b16 %v672, %v671
  %v676 = vsel %vm60, %v668, 0
  %678 = vmatpush.bf16.msra.mxu0 0
  %679 = vmatpush.bf16.msra.mxu0 0
  %680 = vmatpush.bf16.msra.mxu0 0
  %681 = vmatpush.bf16.msra.mxu0 0
  %682 = vmatpush.bf16.msra.mxu0 0
  %683 = vmatpush.bf16.msra.mxu0 0
  %684 = vmatpush.bf16.msra.mxu0 0
  %685 = vmatpush.bf16.msra.mxu0 %v673
  %686 = vmatmul.bf16.gmra.mxu0 %v676
  %v687 = vpop.f32.mrf.mxu0
  %v688 = vadd.f32 0.0, %v687
  %v689 = vpop.f32.mrf.mxu0
  %690 = vdwg.mxu0
  %v691 = vadd.f32 %v658, %v688
  %v692 = vld [vmem:[%s2] sm:$0x1]
  %v694 = vperm.slane %v692, 0
  %v696 = vmul.f32 %v691, %v694
  %v697 = vld [vmem:[%s3] sm:$0x1]
  %v699 = vperm.slane %v697, 0
  %v701 = vadd.f32 %v696, %v699
  %v702 = vmax.f32 %v701, 0.0
  %v703 = vpack.c.bf16 %v702, %v702
  %v705 = vshrl.u32 %v703, 16
  %v707 = vrot.slane %v705, 5
  %v708 = vshll.u32 %v703, 16
  %v710 = vrot.slane %v708, 6
  %v711 = vor.u32 %v707, %v710
  %v713 = vld [vmem:[#allocation2 + $0x8] sm:$0xc]
  %v714 = vsel %vm360, %v711, %v713
  %715 = vst [vmem:[#allocation2 + $0x8] sm:$0xc] %v714
  %v717 = vrot.slane %v703, 5
  %v718 = vrot.slane %v717, 4
  %v720 = vld [vmem:[#allocation2 + $0xc] sm:$0x3]
  %v721 = vsel %vm370, %v718, %v720
  %722 = vst [vmem:[#allocation2 + $0xc] sm:$0x3] %v721
  %v723 = vld [vmem:[%s523] sm:$0x7]
  %v724 = vld [vmem:[%s7] sm:$0xf]
  %v725 = vld [vmem:[%s7 + $0x4] sm:$0xf]
  %v728 = vunpack.c.l.b16 %v724
  %v729 = vunpack.c.l.b16 %v725
  %v730 = vpack.c.b16 %v729, %v728
  %v733 = vsel %vm60, %v723, 0
  %735 = vmatpush.bf16.msra.mxu0 0
  %736 = vmatpush.bf16.msra.mxu0 0
  %737 = vmatpush.bf16.msra.mxu0 0
  %738 = vmatpush.bf16.msra.mxu0 0
  %739 = vmatpush.bf16.msra.mxu0 0
  %740 = vmatpush.bf16.msra.mxu0 0
  %741 = vmatpush.bf16.msra.mxu0 0
  %742 = vmatpush.bf16.msra.mxu0 %v730
  %743 = vmatmul.bf16.gmra.mxu0 %v733
  %v744 = vpop.f32.mrf.mxu0
  %v745 = vadd.f32 0.0, %v744
  %v746 = vpop.f32.mrf.mxu0
  %747 = vdwg.mxu0
  %v748 = vld [vmem:[%s8] sm:$0x1]
  %v750 = vperm.slane %v748, 0
  %v752 = vmul.f32 %v745, %v750
  %v753 = vld [vmem:[%s9] sm:$0x1]
  %v755 = vperm.slane %v753, 0
  %v757 = vadd.f32 %v752, %v755
  %v758 = vld [vmem:[#allocation2] sm:$0xf]
  %v759 = vld [vmem:[#allocation2 + $0x4] sm:$0xf]
  %v760 = vld [vmem:[#allocation2 + $0x8] sm:$0x7]
  %v761 = vld [vmem:[%s4] sm:$0xf]
  %v762 = vld [vmem:[%s4 + $0x4] sm:$0xf]
  %v763 = vld [vmem:[%s4 + $0x8] sm:$0xf]
  %v764 = vld [vmem:[%s4 + $0xc] sm:$0xf]
  %v765 = vld [vmem:[#allocation2 + $0x8] sm:$0xf]
  %s766 = scalar_lea.vmem %s4, 16
  %v767 = vld [vmem:[%s766] sm:$0xf]
  %v768 = vld [vmem:[%s766 + $0x4] sm:$0xf]
  %v769 = vld [vmem:[%s766 + $0x8] sm:$0xf]
  %v770 = vld [vmem:[%s766 + $0xc] sm:$0xf]
  %v774 = vunpack.c.l.b16 %v758
  %v775 = vunpack.c.l.b16 %v759
  %v776 = vunpack.c.l.b16 %v765
  %v777 = vpack.c.b16 %v775, %v774
  %v778 = vpack.c.b16 %v776, %v776
  %vm779 = vsmask.f32 7424
  %v781 = vshrl.u32 %v777, 16
  %v783 = vshll.u32 %v777, 16
  %v785 = vrot.slane %v783, 1
  %v786 = vor.u32 %v781, %v785
  %v788 = vshll.u32 %v778, 16
  %v790 = vrot.slane %v788, 1
  %v791 = vsel %vm779, %v786, %v790
  %v792 = vshrl.u32 %v778, 16
  %v794 = vor.u32 %v792, %v790
  %v799 = vunpack.c.l.b16 %v767
  %v800 = vunpack.c.l.b16 %v768
  %v801 = vunpack.c.l.b16 %v769
  %v802 = vunpack.c.l.b16 %v770
  %v803 = vpack.c.b16 %v800, %v799
  %v804 = vpack.c.b16 %v802, %v801
  %vm807 = vcmask 261120
  %v809 = vsel %vm807, %v791, 0
  %v812 = vsel %vm807, %v794, 0
  %814 = vmatpush.bf16.msra.mxu0 0
  %815 = vmatpush.bf16.msra.mxu0 0
  %816 = vmatpush.bf16.msra.mxu0 0
  %817 = vmatpush.bf16.msra.mxu0 0
  %818 = vmatpush.bf16.msra.mxu0 0
  %819 = vmatpush.bf16.msra.mxu0 0
  %820 = vmatpush.bf16.msra.mxu0 %v804
  %821 = vmatpush.bf16.msra.mxu0 %v803
  %822 = vmatmul.bf16.gmra.mxu0 %v809
  %v823 = vpop.f32.mrf.mxu0
  %v824 = vadd.f32 0.0, %v823
  %v825 = vpop.f32.mrf.mxu0
  %826 = vmatmul.bf16.gmra.mxu0 %v812
  %v827 = vpop.f32.mrf.mxu0
  %v828 = vadd.f32 0.0, %v827
  %v829 = vpop.f32.mrf.mxu0
  %830 = vdwg.mxu0
  %v832 = vunpack.c.l.b16 %v760
  %v833 = vpack.c.b16 %v832, %v832
  %v838 = vunpack.c.l.b16 %v761
  %v839 = vunpack.c.l.b16 %v762
  %v840 = vunpack.c.l.b16 %v763
  %v841 = vunpack.c.l.b16 %v764
  %v842 = vpack.c.b16 %v839, %v838
  %v843 = vpack.c.b16 %v841, %v840
  %v846 = vsel %vm807, %v777, 0
  %v849 = vsel %vm807, %v833, 0
  %851 = vmatpush.bf16.msra.mxu0 0
  %852 = vmatpush.bf16.msra.mxu0 0
  %853 = vmatpush.bf16.msra.mxu0 0
  %854 = vmatpush.bf16.msra.mxu0 0
  %855 = vmatpush.bf16.msra.mxu0 0
  %856 = vmatpush.bf16.msra.mxu0 0
  %857 = vmatpush.bf16.msra.mxu0 %v843
  %858 = vmatpush.bf16.msra.mxu0 %v842
  %859 = vmatmul.bf16.gmra.mxu0 %v846
  %v860 = vpop.f32.mrf.mxu0
  %v861 = vadd.f32 %v824, %v860
  %v862 = vpop.f32.mrf.mxu0
  %863 = vmatmul.bf16.gmra.mxu0 %v849
  %v864 = vpop.f32.mrf.mxu0
  %v865 = vadd.f32 %v828, %v864
  %v866 = vpop.f32.mrf.mxu0
  %867 = vdwg.mxu0
  %v868 = vld [vmem:[#allocation2] sm:$0xe]
  %s869 = scalar_lea.vmem %s4, 32
  %v870 = vld [vmem:[%s869] sm:$0xf]
  %v871 = vld [vmem:[%s869 + $0x4] sm:$0xf]
  %v872 = vld [vmem:[%s869 + $0x8] sm:$0xf]
  %v873 = vld [vmem:[%s869 + $0xc] sm:$0xf]
  %v875 = vunpack.c.l.b16 %v868
  %v876 = vpack.c.b16 %v775, %v875
  %vm877 = vcmask 1046528
  %v878 = vrot.slane %v876, 1
  %v879 = vrot.slane %v778, 1
  %v880 = vsel %vm877, %v878, %v879
  %v885 = vunpack.c.l.b16 %v870
  %v886 = vunpack.c.l.b16 %v871
  %v887 = vunpack.c.l.b16 %v872
  %v888 = vunpack.c.l.b16 %v873
  %v889 = vpack.c.b16 %v886, %v885
  %v890 = vpack.c.b16 %v888, %v887
  %v894 = vsel %vm807, %v880, 0
  %v897 = vsel %vm807, %v879, 0
  %899 = vmatpush.bf16.msra.mxu0 0
  %900 = vmatpush.bf16.msra.mxu0 0
  %901 = vmatpush.bf16.msra.mxu0 0
  %902 = vmatpush.bf16.msra.mxu0 0
  %903 = vmatpush.bf16.msra.mxu0 0
  %904 = vmatpush.bf16.msra.mxu0 0
  %905 = vmatpush.bf16.msra.mxu0 %v890
  %906 = vmatpush.bf16.msra.mxu0 %v889
  %907 = vmatmul.bf16.gmra.mxu0 %v894
  %v908 = vpop.f32.mrf.mxu0
  %v909 = vadd.f32 0.0, %v908
  %v910 = vpop.f32.mrf.mxu0
  %911 = vmatmul.bf16.gmra.mxu0 %v897
  %v912 = vpop.f32.mrf.mxu0
  %v913 = vadd.f32 0.0, %v912
  %v914 = vpop.f32.mrf.mxu0
  %915 = vdwg.mxu0
  %v916 = vadd.f32 %v861, %v909
  %v917 = vadd.f32 %v865, %v913
  %v918 = vld [vmem:[#allocation2] sm:$0xc]
  %v919 = vld [vmem:[#allocation2 + $0x4] sm:$0xf]
  %v920 = vld [vmem:[#allocation2 + $0x8] sm:$0xf]
  %v921 = vld [vmem:[#allocation2 + $0xc] sm:$0x1]
  %s922 = scalar_lea.vmem %s4, 48
  %v923 = vld [vmem:[%s922] sm:$0xf]
  %v924 = vld [vmem:[%s922 + $0x4] sm:$0xf]
  %v925 = vld [vmem:[%s922 + $0x8] sm:$0xf]
  %v926 = vld [vmem:[%s922 + $0xc] sm:$0xf]
  %v931 = vunpack.c.l.b16 %v918
  %v932 = vunpack.c.l.b16 %v919
  %v933 = vunpack.c.l.b16 %v920
  %v934 = vunpack.c.l.b16 %v921
  %v935 = vpack.c.b16 %v932, %v931
  %v936 = vpack.c.b16 %v934, %v933
  %vm937 = vcmask 1045504
  %v938 = vrot.slane %v935, 2
  %v939 = vrot.slane %v936, 2
  %v940 = vsel %vm937, %v938, %v939
  %v945 = vunpack.c.l.b16 %v923
  %v946 = vunpack.c.l.b16 %v924
  %v947 = vunpack.c.l.b16 %v925
  %v948 = vunpack.c.l.b16 %v926
  %v949 = vpack.c.b16 %v946, %v945
  %v950 = vpack.c.b16 %v948, %v947
  %v954 = vsel %vm807, %v940, 0
  %v957 = vsel %vm807, %v939, 0
  %959 = vmatpush.bf16.msra.mxu0 0
  %960 = vmatpush.bf16.msra.mxu0 0
  %961 = vmatpush.bf16.msra.mxu0 0
  %962 = vmatpush.bf16.msra.mxu0 0
  %963 = vmatpush.bf16.msra.mxu0 0
  %964 = vmatpush.bf16.msra.mxu0 0
  %965 = vmatpush.bf16.msra.mxu0 %v950
  %966 = vmatpush.bf16.msra.mxu0 %v949
  %967 = vmatmul.bf16.gmra.mxu0 %v954
  %v968 = vpop.f32.mrf.mxu0
  %v969 = vadd.f32 0.0, %v968
  %v970 = vpop.f32.mrf.mxu0
  %971 = vmatmul.bf16.gmra.mxu0 %v957
  %v972 = vpop.f32.mrf.mxu0
  %v973 = vadd.f32 0.0, %v972
  %v974 = vpop.f32.mrf.mxu0
  %975 = vdwg.mxu0
  %v976 = vadd.f32 %v916, %v969
  %v977 = vadd.f32 %v917, %v973
  %v978 = vld [vmem:[#allocation2 + $0xc] sm:$0x3]
  %s979 = scalar_lea.vmem %s4, 64
  %v980 = vld [vmem:[%s979] sm:$0xf]
  %v981 = vld [vmem:[%s979 + $0x4] sm:$0xf]
  %v982 = vld [vmem:[%s979 + $0x8] sm:$0xf]
  %v983 = vld [vmem:[%s979 + $0xc] sm:$0xf]
  %v985 = vunpack.c.l.b16 %v978
  %v986 = vpack.c.b16 %v985, %v933
  %vm987 = vsmask.f32 5376
  %v989 = vshrl.u32 %v935, 16
  %v991 = vrot.slane %v989, 2
  %v992 = vshll.u32 %v935, 16
  %v994 = vrot.slane %v992, 3
  %v995 = vor.u32 %v991, %v994
  %v997 = vshrl.u32 %v986, 16
  %v999 = vrot.slane %v997, 2
  %v1000 = vshll.u32 %v986, 16
  %v1002 = vrot.slane %v1000, 3
  %v1003 = vor.u32 %v999, %v1002
  %v1004 = vsel %vm987, %v995, %v1003
  %v1009 = vunpack.c.l.b16 %v980
  %v1010 = vunpack.c.l.b16 %v981
  %v1011 = vunpack.c.l.b16 %v982
  %v1012 = vunpack.c.l.b16 %v983
  %v1013 = vpack.c.b16 %v1010, %v1009
  %v1014 = vpack.c.b16 %v1012, %v1011
  %v1018 = vsel %vm807, %v1004, 0
  %v1021 = vsel %vm807, %v1003, 0
  %1023 = vmatpush.bf16.msra.mxu0 0
  %1024 = vmatpush.bf16.msra.mxu0 0
  %1025 = vmatpush.bf16.msra.mxu0 0
  %1026 = vmatpush.bf16.msra.mxu0 0
  %1027 = vmatpush.bf16.msra.mxu0 0
  %1028 = vmatpush.bf16.msra.mxu0 0
  %1029 = vmatpush.bf16.msra.mxu0 %v1014
  %1030 = vmatpush.bf16.msra.mxu0 %v1013
  %1031 = vmatmul.bf16.gmra.mxu0 %v1018
  %v1032 = vpop.f32.mrf.mxu0
  %v1033 = vadd.f32 0.0, %v1032
  %v1034 = vpop.f32.mrf.mxu0
  %1035 = vmatmul.bf16.gmra.mxu0 %v1021
  %v1036 = vpop.f32.mrf.mxu0
  %v1037 = vadd.f32 0.0, %v1036
  %v1038 = vpop.f32.mrf.mxu0
  %1039 = vdwg.mxu0
  %v1040 = vadd.f32 %v976, %v1033
  %v1041 = vadd.f32 %v977, %v1037
  %v1042 = vld [vmem:[#allocation2] sm:$0x8]
  %s1043 = scalar_lea.vmem %s4, 80
  %v1044 = vld [vmem:[%s1043] sm:$0xf]
  %v1045 = vld [vmem:[%s1043 + $0x4] sm:$0xf]
  %v1046 = vld [vmem:[%s1043 + $0x8] sm:$0xf]
  %v1047 = vld [vmem:[%s1043 + $0xc] sm:$0xf]
  %v1049 = vunpack.c.l.b16 %v1042
  %v1050 = vpack.c.b16 %v932, %v1049
  %vm1051 = vcmask 1044480
  %v1052 = vrot.slane %v1050, 3
  %v1053 = vrot.slane %v986, 3
  %v1054 = vsel %vm1051, %v1052, %v1053
  %v1059 = vunpack.c.l.b16 %v1044
  %v1060 = vunpack.c.l.b16 %v1045
  %v1061 = vunpack.c.l.b16 %v1046
  %v1062 = vunpack.c.l.b16 %v1047
  %v1063 = vpack.c.b16 %v1060, %v1059
  %v1064 = vpack.c.b16 %v1062, %v1061
  %v1068 = vsel %vm807, %v1054, 0
  %v1071 = vsel %vm807, %v1053, 0
  %1073 = vmatpush.bf16.msra.mxu0 0
  %1074 = vmatpush.bf16.msra.mxu0 0
  %1075 = vmatpush.bf16.msra.mxu0 0
  %1076 = vmatpush.bf16.msra.mxu0 0
  %1077 = vmatpush.bf16.msra.mxu0 0
  %1078 = vmatpush.bf16.msra.mxu0 0
  %1079 = vmatpush.bf16.msra.mxu0 %v1064
  %1080 = vmatpush.bf16.msra.mxu0 %v1063
  %1081 = vmatmul.bf16.gmra.mxu0 %v1068
  %v1082 = vpop.f32.mrf.mxu0
  %v1083 = vadd.f32 0.0, %v1082
  %v1084 = vpop.f32.mrf.mxu0
  %1085 = vmatmul.bf16.gmra.mxu0 %v1071
  %v1086 = vpop.f32.mrf.mxu0
  %v1087 = vadd.f32 0.0, %v1086
  %v1088 = vpop.f32.mrf.mxu0
  %1089 = vdwg.mxu0
  %v1090 = vadd.f32 %v1040, %v1083
  %v1091 = vadd.f32 %v1041, %v1087
  %v1092 = vld [vmem:[#allocation2 + $0xc] sm:$0x7]
  %s1093 = scalar_lea.vmem %s4, 96
  %v1094 = vld [vmem:[%s1093] sm:$0xf]
  %v1095 = vld [vmem:[%s1093 + $0x4] sm:$0xf]
  %v1096 = vld [vmem:[%s1093 + $0x8] sm:$0xf]
  %v1097 = vld [vmem:[%s1093 + $0xc] sm:$0xf]
  %v1099 = vunpack.c.l.b16 %v1092
  %v1100 = vpack.c.b16 %v933, %v932
  %v1101 = vpack.c.b16 %v1099, %v1099
  %v1106 = vunpack.c.l.b16 %v1094
  %v1107 = vunpack.c.l.b16 %v1095
  %v1108 = vunpack.c.l.b16 %v1096
  %v1109 = vunpack.c.l.b16 %v1097
  %v1110 = vpack.c.b16 %v1107, %v1106
  %v1111 = vpack.c.b16 %v1109, %v1108
  %v1115 = vsel %vm807, %v1100, 0
  %v1118 = vsel %vm807, %v1101, 0
  %1120 = vmatpush.bf16.msra.mxu0 0
  %1121 = vmatpush.bf16.msra.mxu0 0
  %1122 = vmatpush.bf16.msra.mxu0 0
  %1123 = vmatpush.bf16.msra.mxu0 0
  %1124 = vmatpush.bf16.msra.mxu0 0
  %1125 = vmatpush.bf16.msra.mxu0 0
  %1126 = vmatpush.bf16.msra.mxu0 %v1111
  %1127 = vmatpush.bf16.msra.mxu0 %v1110
  %1128 = vmatmul.bf16.gmra.mxu0 %v1115
  %v1129 = vpop.f32.mrf.mxu0
  %v1130 = vadd.f32 0.0, %v1129
  %v1131 = vpop.f32.mrf.mxu0
  %1132 = vmatmul.bf16.gmra.mxu0 %v1118
  %v1133 = vpop.f32.mrf.mxu0
  %v1134 = vadd.f32 0.0, %v1133
  %v1135 = vpop.f32.mrf.mxu0
  %1136 = vdwg.mxu0
  %v1137 = vadd.f32 %v1090, %v1130
  %v1138 = vadd.f32 %v1091, %v1134
  %v1139 = vld [vmem:[#allocation2 + $0xc] sm:$0xf]
  %s1140 = scalar_lea.vmem %s4, 112
  %v1141 = vld [vmem:[%s1140] sm:$0xf]
  %v1142 = vld [vmem:[%s1140 + $0x4] sm:$0xf]
  %v1143 = vld [vmem:[%s1140 + $0x8] sm:$0xf]
  %v1144 = vld [vmem:[%s1140 + $0xc] sm:$0xf]
  %v1146 = vunpack.c.l.b16 %v1139
  %v1147 = vpack.c.b16 %v1146, %v1146
  %v1148 = vshrl.u32 %v1100, 16
  %v1150 = vshll.u32 %v1100, 16
  %v1152 = vrot.slane %v1150, 1
  %v1153 = vor.u32 %v1148, %v1152
  %v1155 = vshll.u32 %v1147, 16
  %v1157 = vrot.slane %v1155, 1
  %v1158 = vsel %vm779, %v1153, %v1157
  %v1159 = vshrl.u32 %v1147, 16
  %v1161 = vor.u32 %v1159, %v1157
  %v1166 = vunpack.c.l.b16 %v1141
  %v1167 = vunpack.c.l.b16 %v1142
  %v1168 = vunpack.c.l.b16 %v1143
  %v1169 = vunpack.c.l.b16 %v1144
  %v1170 = vpack.c.b16 %v1167, %v1166
  %v1171 = vpack.c.b16 %v1169, %v1168
  %v1175 = vsel %vm807, %v1158, 0
  %v1178 = vsel %vm807, %v1161, 0
  %1180 = vmatpush.bf16.msra.mxu0 0
  %1181 = vmatpush.bf16.msra.mxu0 0
  %1182 = vmatpush.bf16.msra.mxu0 0
  %1183 = vmatpush.bf16.msra.mxu0 0
  %1184 = vmatpush.bf16.msra.mxu0 0
  %1185 = vmatpush.bf16.msra.mxu0 0
  %1186 = vmatpush.bf16.msra.mxu0 %v1171
  %1187 = vmatpush.bf16.msra.mxu0 %v1170
  %1188 = vmatmul.bf16.gmra.mxu0 %v1175
  %v1189 = vpop.f32.mrf.mxu0
  %v1190 = vadd.f32 0.0, %v1189
  %v1191 = vpop.f32.mrf.mxu0
  %1192 = vmatmul.bf16.gmra.mxu0 %v1178
  %v1193 = vpop.f32.mrf.mxu0
  %v1194 = vadd.f32 0.0, %v1193
  %v1195 = vpop.f32.mrf.mxu0
  %1196 = vdwg.mxu0
  %v1197 = vadd.f32 %v1137, %v1190
  %v1198 = vadd.f32 %v1138, %v1194
  %v1199 = vld [vmem:[#allocation2 + $0x4] sm:$0xe]
  %s1200 = scalar_lea.vmem %s4, 128
  %v1201 = vld [vmem:[%s1200] sm:$0xf]
  %v1202 = vld [vmem:[%s1200 + $0x4] sm:$0xf]
  %v1203 = vld [vmem:[%s1200 + $0x8] sm:$0xf]
  %v1204 = vld [vmem:[%s1200 + $0xc] sm:$0xf]
  %v1206 = vunpack.c.l.b16 %v1199
  %v1207 = vpack.c.b16 %v933, %v1206
  %v1208 = vrot.slane %v1207, 1
  %v1209 = vrot.slane %v1147, 1
  %v1210 = vsel %vm877, %v1208, %v1209
  %v1215 = vunpack.c.l.b16 %v1201
  %v1216 = vunpack.c.l.b16 %v1202
  %v1217 = vunpack.c.l.b16 %v1203
  %v1218 = vunpack.c.l.b16 %v1204
  %v1219 = vpack.c.b16 %v1216, %v1215
  %v1220 = vpack.c.b16 %v1218, %v1217
  %v1224 = vsel %vm807, %v1210, 0
  %v1227 = vsel %vm807, %v1209, 0
  %1229 = vmatpush.bf16.msra.mxu0 0
  %1230 = vmatpush.bf16.msra.mxu0 0
  %1231 = vmatpush.bf16.msra.mxu0 0
  %1232 = vmatpush.bf16.msra.mxu0 0
  %1233 = vmatpush.bf16.msra.mxu0 0
  %1234 = vmatpush.bf16.msra.mxu0 0
  %1235 = vmatpush.bf16.msra.mxu0 %v1220
  %1236 = vmatpush.bf16.msra.mxu0 %v1219
  %1237 = vmatmul.bf16.gmra.mxu0 %v1224
  %v1238 = vpop.f32.mrf.mxu0
  %v1239 = vadd.f32 0.0, %v1238
  %v1240 = vpop.f32.mrf.mxu0
  %1241 = vmatmul.bf16.gmra.mxu0 %v1227
  %v1242 = vpop.f32.mrf.mxu0
  %v1243 = vadd.f32 0.0, %v1242
  %v1244 = vpop.f32.mrf.mxu0
  %1245 = vdwg.mxu0
  %v1246 = vadd.f32 %v1197, %v1239
  %v1247 = vadd.f32 %v1198, %v1243
  %v1248 = vld [vmem:[%s5] sm:$0x1]
  %v1250 = vperm.slane %v1248, 0
  %v1252 = vmul.f32 %v1246, %v1250
  %v1253 = vmul.f32 %v1247, %v1250
  %v1254 = vld [vmem:[%s6] sm:$0x1]
  %v1256 = vperm.slane %v1254, 0
  %v1258 = vadd.f32 %v1252, %v1256
  %v1259 = vadd.f32 %v1253, %v1256
  %v1260 = vadd.f32 %v1258, %v408
  %v1261 = vmax.f32 %v1260, 0.0
  %vm1262 = vcmask 1041408
  %v1263 = vsel %vm1262, %v1261, 0.0
  %v1264 = vrot.slane %v1263, 4
  %v1265 = vadd.f32 %v1263, %v1264
  %v1266 = vrot.slane %v1265, 2
  %v1267 = vadd.f32 %v1265, %v1266
  %v1268 = vrot.slane %v1267, 1
  %v1269 = vadd.f32 %v1267, %v1268
  %v1270 = vadd.f32 %v1269, 0.0
  %v1272 = vrot.slane %v408, 7
  %v1274 = vadd.f32 %v1258, %v1272
  %v1275 = vmax.f32 %v1274, 0.0
  %v1277 = vrot.slane %v1275, 4
  %v1279 = vsel %vm1262, %v1277, 0.0
  %v1280 = vrot.slane %v1279, 4
  %v1281 = vadd.f32 %v1279, %v1280
  %v1282 = vrot.slane %v1281, 2
  %v1283 = vadd.f32 %v1281, %v1282
  %v1284 = vrot.slane %v1283, 1
  %v1285 = vadd.f32 %v1283, %v1284
  %v1286 = vadd.f32 %v1270, %v1285
  %v1287 = vmul.f32 %v1286, 0.25
  %v1288 = vadd.f32 %v1259, %v757
  %v1289 = vmax.f32 %v1288, 0.0
  %v1290 = vsel %vm1262, %v1289, 0.0
  %v1291 = vrot.slane %v1290, 4
  %v1292 = vadd.f32 %v1290, %v1291
  %v1293 = vrot.slane %v1292, 2
  %v1294 = vadd.f32 %v1292, %v1293
  %v1295 = vrot.slane %v1294, 1
  %v1296 = vadd.f32 %v1294, %v1295
  %v1297 = vadd.f32 %v1296, 0.0
  %v1299 = vrot.slane %v757, 7
  %v1301 = vadd.f32 %v1259, %v1299
  %v1302 = vmax.f32 %v1301, 0.0
  %v1304 = vrot.slane %v1302, 4
  %v1306 = vsel %vm1262, %v1304, 0.0
  %v1307 = vrot.slane %v1306, 4
  %v1308 = vadd.f32 %v1306, %v1307
  %v1309 = vrot.slane %v1308, 2
  %v1310 = vadd.f32 %v1308, %v1309
  %v1311 = vrot.slane %v1310, 1
  %v1312 = vadd.f32 %v1310, %v1311
  %v1313 = vadd.f32 %v1297, %v1312
  %v1314 = vmul.f32 %v1313, 0.25
  %vm1315 = vcmask 1040384
  %v1316 = vsel %vm1315, %v1287, %v1314
  %v1317 = vpack.c.bf16 %v1316, %v1316
  %v1318 = vld [vmem:[%s10] sm:$0xf]
  %v1319 = vld [vmem:[%s10 + $0x4] sm:$0xf]
  %v1320 = vld [vmem:[%s10 + $0x8] sm:$0xf]
  %v1321 = vld [vmem:[%s10 + $0xc] sm:$0xf]
  %v1322 = vld [vmem:[%s11] sm:$0x1]
  %v1324 = vperm.slane %v1322, 0
  %v1330 = vunpack.c.l.b16 %v1318
  %v1331 = vunpack.c.l.b16 %v1319
  %v1332 = vunpack.c.l.b16 %v1320
  %v1333 = vunpack.c.l.b16 %v1321
  %v1334 = vpack.c.b16 %v1331, %v1330
  %v1335 = vpack.c.b16 %v1333, %v1332
  %v1339 = vsel %vm807, %v1317, 0
  %1341 = vmatpush.bf16.msra.mxu0 0
  %1342 = vmatpush.bf16.msra.mxu0 0
  %1343 = vmatpush.bf16.msra.mxu0 0
  %1344 = vmatpush.bf16.msra.mxu0 0
  %1345 = vmatpush.bf16.msra.mxu0 0
  %1346 = vmatpush.bf16.msra.mxu0 0
  %1347 = vmatpush.bf16.msra.mxu0 %v1335
  %1348 = vmatpush.bf16.msra.mxu0 %v1334
  %1349 = vmatmul.bf16.gmra.mxu0 %v1339
  %v1350 = vpop.f32.mrf.mxu0
  %v1351 = vadd.f32 %v1324, %v1350
  %v1352 = vpop.f32.mrf.mxu0
  %1353 = vdwg.mxu0
  %1354 = vst [vmem:[%s12] sm:$0x3] %v1351
  // Predicated region
  $region50: #{multi_head_resnet_forward.5} parent=0 // pred_check
    _
  $region51: #{multi_head_resnet_forward.5} parent=0 // pred_check_branch
    %1356 = sbr.rel (0) target = $region53
  $region52: #{multi_head_resnet_forward.5} parent=0 // pred_region
    _
  $region53: #{multi_head_resnet_forward.5} parent=0 // pred_fallthru
    _
  // Predicated region
  $region54: #{multi_head_resnet_forward.5} parent=0 // pred_check
    _
  $region55: #{multi_head_resnet_forward.5} parent=0 // pred_check_branch
    %1358 = sbr.rel (0) target = $region57
  $region56: #{multi_head_resnet_forward.5} parent=0 // pred_region
    _
  $region57: #{multi_head_resnet_forward.5} parent=0 // pred_fallthru
    _

// kernel: multi_head_resnet_forward.4
$region0: #{multi_head_resnet_forward.4}
  #allocation0 [shape = 'u32[]', space=smem, size = 0x4, offset = 0x4, fixed_abs, tag = 'smem constant byte address 0x4 - core index']
  #allocation1 [shape = 'u32[72,128]{1,0:T(1,128)}', space=vmem, size = 0x9000, scoped, tag = 'internal scratch']
  #allocation2 [shape = 'bf16[72,128]{1,0:T(8,128)(2,1)}', space=vmem, size = 0x4800, scoped, tag = 'scratch operand']
  #allocation3 [shape = 'bf16[72,128]{1,0:T(8,128)(2,1)}', space=vmem, size = 0x4800, scoped, tag = 'scratch operand']
  %s0 = inlined_call_operand.vmem [shape: bf16[2,4,25,128], index: 0, kind: input, shape index: {}]
  %s1 = inlined_call_operand.vmem [shape: bf16[9,16,128], index: 1, kind: input, shape index: {}]
  %s2 = inlined_call_operand.vmem [shape: f32[1,128], index: 2, kind: input, shape index: {}]
  %s3 = inlined_call_operand.vmem [shape: f32[1,128], index: 3, kind: input, shape index: {}]
  %s4 = inlined_call_operand.vmem [shape: bf16[9,16,128], index: 4, kind: input, shape index: {}]
  %s5 = inlined_call_operand.vmem [shape: f32[1,128], index: 5, kind: input, shape index: {}]
  %s6 = inlined_call_operand.vmem [shape: f32[1,128], index: 6, kind: input, shape index: {}]
  %s7 = inlined_call_operand.vmem [shape: bf16[32,128], index: 7, kind: output, shape index: {}]
  %s8 = sld [smem:[#allocation0]]
  $region38: #{multi_head_resnet_forward.4} parent=0
    _
  %s10 = ssub.s32 1, %s8
  %s11 = scalar_select 0, %s10, %s8
  // Predicated region
  $region2: #{multi_head_resnet_forward.4} parent=0 // pred_check
    _
  $region3: #{multi_head_resnet_forward.4} parent=0 // pred_check_branch
    %13 = sbr.rel (0) target = $region5
  $region4: #{multi_head_resnet_forward.4} parent=0 // pred_region
    _
  $region5: #{multi_head_resnet_forward.4} parent=0 // pred_fallthru
    _
  // Predicated region
  $region6: #{multi_head_resnet_forward.4} parent=0 // pred_check
    _
  $region7: #{multi_head_resnet_forward.4} parent=0 // pred_check_branch
    %15 = sbr.rel (0) target = $region9
  $region8: #{multi_head_resnet_forward.4} parent=0 // pred_region
    _
  $region9: #{multi_head_resnet_forward.4} parent=0 // pred_fallthru
    _
  // Predicated region
  $region10: #{multi_head_resnet_forward.4} parent=0 // pred_check
    _
  $region11: #{multi_head_resnet_forward.4} parent=0 // pred_check_branch
    %17 = sbr.rel (0) target = $region13
  $region12: #{multi_head_resnet_forward.4} parent=0 // pred_region
    _
  $region13: #{multi_head_resnet_forward.4} parent=0 // pred_fallthru
    _
  // Predicated region
  $region14: #{multi_head_resnet_forward.4} parent=0 // pred_check
    _
  $region15: #{multi_head_resnet_forward.4} parent=0 // pred_check_branch
    %19 = sbr.rel (0) target = $region17
  $region16: #{multi_head_resnet_forward.4} parent=0 // pred_region
    _
  $region17: #{multi_head_resnet_forward.4} parent=0 // pred_fallthru
    _
  // Predicated region
  $region18: #{multi_head_resnet_forward.4} parent=0 // pred_check
    _
  $region19: #{multi_head_resnet_forward.4} parent=0 // pred_check_branch
    %21 = sbr.rel (0) target = $region21
  $region20: #{multi_head_resnet_forward.4} parent=0 // pred_region
    _
  $region21: #{multi_head_resnet_forward.4} parent=0 // pred_fallthru
    _
  // Predicated region
  $region22: #{multi_head_resnet_forward.4} parent=0 // pred_check
    _
  $region23: #{multi_head_resnet_forward.4} parent=0 // pred_check_branch
    %23 = sbr.rel (0) target = $region25
  $region24: #{multi_head_resnet_forward.4} parent=0 // pred_region
    _
  $region25: #{multi_head_resnet_forward.4} parent=0 // pred_fallthru
    _
  // Predicated region
  $region26: #{multi_head_resnet_forward.4} parent=0 // pred_check
    _
  $region27: #{multi_head_resnet_forward.4} parent=0 // pred_check_branch
    %25 = sbr.rel (0) target = $region29
  $region28: #{multi_head_resnet_forward.4} parent=0 // pred_region
    _
  $region29: #{multi_head_resnet_forward.4} parent=0 // pred_fallthru
    _
  %27 = vst [vmem:[#allocation2] sm:$0xf] 0
  %28 = vst [vmem:[#allocation2 + $0x4] sm:$0xf] 0
  %29 = vst [vmem:[#allocation2 + $0x8] sm:$0xf] 0
  %30 = vst [vmem:[#allocation2 + $0xc] sm:$0xf] 0
  %31 = vst [vmem:[#allocation2 + $0x10] sm:$0xf] 0
  %32 = vst [vmem:[#allocation2 + $0x14] sm:$0xf] 0
  %33 = vst [vmem:[#allocation2 + $0x18] sm:$0xf] 0
  %34 = vst [vmem:[#allocation2 + $0x1c] sm:$0xf] 0
  %35 = vst [vmem:[#allocation2 + $0x20] sm:$0xf] 0
  %36 = vst [vmem:[#allocation3] sm:$0xf] 0
  %37 = vst [vmem:[#allocation3 + $0x4] sm:$0xf] 0
  %38 = vst [vmem:[#allocation3 + $0x8] sm:$0xf] 0
  %39 = vst [vmem:[#allocation3 + $0xc] sm:$0xf] 0
  %40 = vst [vmem:[#allocation3 + $0x10] sm:$0xf] 0
  %41 = vst [vmem:[#allocation3 + $0x14] sm:$0xf] 0
  %42 = vst [vmem:[#allocation3 + $0x18] sm:$0xf] 0
  %43 = vst [vmem:[#allocation3 + $0x1c] sm:$0xf] 0
  %44 = vst [vmem:[#allocation3 + $0x20] sm:$0xf] 0
  %v45 = vld [vmem:[%s0] sm:$0xf]
  %v46 = vld [vmem:[%s0 + $0x4] sm:$0xf]
  %v47 = vld [vmem:[%s0 + $0x8] sm:$0x3]
  %s48 = scalar_lea.vmem %s0, 16
  %v49 = vld [vmem:[%s48] sm:$0xf]
  %v50 = vld [vmem:[%s48 + $0x4] sm:$0xf]
  %v51 = vld [vmem:[%s48 + $0x8] sm:$0x3]
  %v52 = vunpack.c.l.bf16 %v45
  %v53 = vunpack.c.l.bf16 %v46
  %v54 = vunpack.c.l.bf16 %v47
  %v55 = vunpack.c.l.bf16 %v49
  %v56 = vunpack.c.l.bf16 %v50
  %v57 = vunpack.c.l.bf16 %v51
  %v58 = vmax.f32 %v52, %v55
  %v59 = vmax.f32 %v53, %v56
  %v60 = vmax.f32 %v54, %v57
  %v61 = vpack.c.bf16 %v58, %v58
  %v62 = vpack.c.bf16 %v59, %v59
  %v63 = vpack.c.bf16 %v60, %v60
  %v64 = vunpack.c.l.bf16 %v61
  %v65 = vunpack.c.l.bf16 %v62
  %v66 = vunpack.c.l.bf16 %v63
  %vm70 = vcmask 1046528
  %v71 = vrot.slane %v52, 1
  %v72 = vrot.slane %v53, 1
  %v73 = vsel %vm70, %v71, %v72
  %v74 = vrot.slane %v54, 1
  %v75 = vsel %vm70, %v72, %v74
  %v79 = vmax.f32 %v64, %v73
  %v80 = vmax.f32 %v65, %v75
  %v81 = vmax.f32 %v66, %v74
  %v82 = vpack.c.bf16 %v79, %v79
  %v83 = vpack.c.bf16 %v80, %v80
  %v84 = vpack.c.bf16 %v81, %v81
  %s85 = scalar_lea.vmem %s0, 32
  %v86 = vld [vmem:[%s85] sm:$0xf]
  %v87 = vld [vmem:[%s85 + $0x4] sm:$0xf]
  %v88 = vld [vmem:[%s85 + $0x8] sm:$0x3]
  %v89 = vunpack.c.l.bf16 %v82
  %v90 = vunpack.c.l.bf16 %v83
  %v91 = vunpack.c.l.bf16 %v84
  %v92 = vunpack.c.l.bf16 %v86
  %v93 = vunpack.c.l.bf16 %v87
  %v94 = vunpack.c.l.bf16 %v88
  %v95 = vmax.f32 %v89, %v92
  %v96 = vmax.f32 %v90, %v93
  %v97 = vmax.f32 %v91, %v94
  %v98 = vpack.c.bf16 %v95, %v95
  %v99 = vpack.c.bf16 %v96, %v96
  %v100 = vpack.c.bf16 %v97, %v97
  %s101 = scalar_lea.vmem %s0, 48
  %v102 = vld [vmem:[%s101] sm:$0xf]
  %v103 = vld [vmem:[%s101 + $0x4] sm:$0xf]
  %v104 = vld [vmem:[%s101 + $0x8] sm:$0x3]
  %v105 = vunpack.c.l.bf16 %v98
  %v106 = vunpack.c.l.bf16 %v99
  %v107 = vunpack.c.l.bf16 %v100
  %v108 = vunpack.c.l.bf16 %v102
  %v109 = vunpack.c.l.bf16 %v103
  %v110 = vunpack.c.l.bf16 %v104
  %v111 = vmax.f32 %v105, %v108
  %v112 = vmax.f32 %v106, %v109
  %v113 = vmax.f32 %v107, %v110
  %v114 = vpack.c.bf16 %v111, %v111
  %v115 = vpack.c.bf16 %v112, %v112
  %v116 = vpack.c.bf16 %v113, %v113
  %v117 = vunpack.c.l.bf16 %v114
  %v118 = vunpack.c.l.bf16 %v115
  %v119 = vunpack.c.l.bf16 %v116
  %v123 = vrot.slane %v92, 1
  %v124 = vrot.slane %v93, 1
  %v125 = vsel %vm70, %v123, %v124
  %v126 = vrot.slane %v94, 1
  %v127 = vsel %vm70, %v124, %v126
  %v131 = vmax.f32 %v117, %v125
  %v132 = vmax.f32 %v118, %v127
  %v133 = vmax.f32 %v119, %v126
  %v134 = vpack.c.bf16 %v131, %v131
  %v135 = vpack.c.bf16 %v132, %v132
  %v136 = vpack.c.bf16 %v133, %v133
  %v137 = vld [vmem:[%s0] sm:$0xc]
  %v138 = vld [vmem:[%s0 + $0x8] sm:$0xf]
  %v139 = vunpack.c.l.bf16 %v134
  %v140 = vunpack.c.l.bf16 %v135
  %v141 = vunpack.c.l.bf16 %v136
  %v142 = vunpack.c.l.bf16 %v137
  %v143 = vunpack.c.l.bf16 %v138
  %vm146 = vcmask 1042432
  %v147 = vrot.slane %v142, 5
  %v148 = vrot.slane %v53, 5
  %v149 = vsel %vm146, %v147, %v148
  %v150 = vrot.slane %v143, 5
  %v151 = vsel %vm146, %v148, %v150
  %v155 = vmax.f32 %v139, %v149
  %v156 = vmax.f32 %v140, %v151
  %v157 = vmax.f32 %v141, %v150
  %v158 = vpack.c.bf16 %v155, %v155
  %v159 = vpack.c.bf16 %v156, %v156
  %v160 = vpack.c.bf16 %v157, %v157
  %v161 = vld [vmem:[%s48] sm:$0xc]
  %v162 = vld [vmem:[%s48 + $0x8] sm:$0xf]
  %v163 = vunpack.c.l.bf16 %v158
  %v164 = vunpack.c.l.bf16 %v159
  %v165 = vunpack.c.l.bf16 %v160
  %v166 = vunpack.c.l.bf16 %v161
  %v167 = vunpack.c.l.bf16 %v162
  %v171 = vrot.slane %v166, 5
  %v172 = vrot.slane %v56, 5
  %v173 = vsel %vm146, %v171, %v172
  %v174 = vrot.slane %v167, 5
  %v175 = vsel %vm146, %v172, %v174
  %v179 = vmax.f32 %v163, %v173
  %v180 = vmax.f32 %v164, %v175
  %v181 = vmax.f32 %v165, %v174
  %v182 = vpack.c.bf16 %v179, %v179
  %v183 = vpack.c.bf16 %v180, %v180
  %v184 = vpack.c.bf16 %v181, %v181
  %v185 = vld [vmem:[%s0] sm:$0x8]
  %v186 = vld [vmem:[%s0 + $0xc] sm:$0x1]
  %v187 = vunpack.c.l.bf16 %v182
  %v188 = vunpack.c.l.bf16 %v183
  %v189 = vunpack.c.l.bf16 %v184
  %v190 = vunpack.c.l.bf16 %v185
  %v191 = vunpack.c.l.bf16 %v186
  %vm194 = vcmask 1041408
  %v195 = vrot.slane %v190, 6
  %v196 = vrot.slane %v53, 6
  %v197 = vsel %vm194, %v195, %v196
  %v198 = vrot.slane %v143, 6
  %v199 = vsel %vm194, %v196, %v198
  %v200 = vrot.slane %v191, 6
  %v201 = vsel %vm194, %v198, %v200
  %v205 = vmax.f32 %v187, %v197
  %v206 = vmax.f32 %v188, %v199
  %v207 = vmax.f32 %v189, %v201
  %v208 = vpack.c.bf16 %v205, %v205
  %v209 = vpack.c.bf16 %v206, %v206
  %v210 = vpack.c.bf16 %v207, %v207
  %v212 = vshll.u32 %v208, 16
  %v214 = vrot.slane %v212, 5
  %v215 = vshrl.u32 %v208, 16
  %v217 = vrot.slane %v215, 4
  %v218 = vor.u32 %v217, %v214
  %v219 = vrot.slane %v218, 4
  %vm222 = vcmask 1043459
  %vm223 = vsmask.f32 7950
  %vm224 = vmand %vm222, %vm223
  %v225 = vld [vmem:[#allocation2] sm:$0x8]
  %v226 = vsel %vm224, %v214, %v225
  %227 = vst [vmem:[#allocation2] sm:$0x8] %v226
  %vm228 = vcmask 1041408
  %vm229 = vsmask.f32 1280
  %vm230 = vmand %vm228, %vm229
  %v231 = vld [vmem:[#allocation2 + $0x4] sm:$0x3]
  %v232 = vsel %vm230, %v219, %v231
  %233 = vst [vmem:[#allocation2 + $0x4] sm:$0x3] %v232
  %vm234 = vcmask 1043458
  %vm235 = vsmask.f32 7946
  %vm236 = vmand %vm234, %vm235
  %v237 = vld [vmem:[#allocation2 + $0x4] sm:$0xc]
  %v238 = vsel %vm236, %v208, %v237
  %239 = vst [vmem:[#allocation2 + $0x4] sm:$0xc] %v238
  %vm240 = vcmask 1040384
  %vm241 = vsmask.f32 256
  %vm242 = vmand %vm240, %vm241
  %v243 = vld [vmem:[#allocation2 + $0x8] sm:$0x1]
  %v244 = vsel %vm242, %v209, %v243
  %245 = vst [vmem:[#allocation2 + $0x8] sm:$0x1] %v244
  %v247 = vshrl.u32 %v209, 16
  %v249 = vrot.slane %v247, 7
  %v250 = vshll.u32 %v209, 16
  %v252 = vor.u32 %v249, %v250
  %vm254 = vcmask 1043457
  %vm255 = vsmask.f32 3334
  %vm256 = vmand %vm254, %vm255
  %v257 = vld [vmem:[#allocation2 + $0x8] sm:$0xe]
  %v258 = vsel %vm256, %v252, %v257
  %259 = vst [vmem:[#allocation2 + $0x8] sm:$0xe] %v258
  %vm262 = vcmask 1044484
  %vm263 = vmor %vm240, %vm262
  %v264 = vrot.slane %v209, 7
  %v265 = vrot.slane %v264, 4
  %v266 = vrot.slane %v210, 7
  %v267 = vsel %vm263, %v265, %v266
  %vm269 = vcmask 1042432
  %vm270 = vsmask.f32 2306
  %vm271 = vmand %vm269, %vm270
  %v272 = vld [vmem:[#allocation2 + $0xc] sm:$0x7]
  %v273 = vsel %vm271, %v267, %v272
  %274 = vst [vmem:[#allocation2 + $0xc] sm:$0x7] %v273
  %s275 = scalar_lea.vmem %s0, 64
  %v276 = vld [vmem:[%s275] sm:$0xf]
  %v277 = vld [vmem:[%s275 + $0x4] sm:$0xf]
  %v278 = vld [vmem:[%s275 + $0x8] sm:$0x3]
  %s279 = scalar_lea.vmem %s0, 80
  %v280 = vld [vmem:[%s279] sm:$0xf]
  %v281 = vld [vmem:[%s279 + $0x4] sm:$0xf]
  %v282 = vld [vmem:[%s279 + $0x8] sm:$0x3]
  %v283 = vunpack.c.l.bf16 %v276
  %v284 = vunpack.c.l.bf16 %v277
  %v285 = vunpack.c.l.bf16 %v278
  %v286 = vunpack.c.l.bf16 %v280
  %v287 = vunpack.c.l.bf16 %v281
  %v288 = vunpack.c.l.bf16 %v282
  %v289 = vmax.f32 %v283, %v286
  %v290 = vmax.f32 %v284, %v287
  %v291 = vmax.f32 %v285, %v288
  %v292 = vpack.c.bf16 %v289, %v289
  %v293 = vpack.c.bf16 %v290, %v290
  %v294 = vpack.c.bf16 %v291, %v291
  %v295 = vunpack.c.l.bf16 %v292
  %v296 = vunpack.c.l.bf16 %v293
  %v297 = vunpack.c.l.bf16 %v294
  %v301 = vrot.slane %v283, 1
  %v302 = vrot.slane %v284, 1
  %v303 = vsel %vm70, %v301, %v302
  %v304 = vrot.slane %v285, 1
  %v305 = vsel %vm70, %v302, %v304
  %v309 = vmax.f32 %v295, %v303
  %v310 = vmax.f32 %v296, %v305
  %v311 = vmax.f32 %v297, %v304
  %v312 = vpack.c.bf16 %v309, %v309
  %v313 = vpack.c.bf16 %v310, %v310
  %v314 = vpack.c.bf16 %v311, %v311
  %s315 = scalar_lea.vmem %s0, 96
  %v316 = vld [vmem:[%s315] sm:$0xf]
  %v317 = vld [vmem:[%s315 + $0x4] sm:$0xf]
  %v318 = vld [vmem:[%s315 + $0x8] sm:$0x3]
  %v319 = vunpack.c.l.bf16 %v312
  %v320 = vunpack.c.l.bf16 %v313
  %v321 = vunpack.c.l.bf16 %v314
  %v322 = vunpack.c.l.bf16 %v316
  %v323 = vunpack.c.l.bf16 %v317
  %v324 = vunpack.c.l.bf16 %v318
  %v325 = vmax.f32 %v319, %v322
  %v326 = vmax.f32 %v320, %v323
  %v327 = vmax.f32 %v321, %v324
  %v328 = vpack.c.bf16 %v325, %v325
  %v329 = vpack.c.bf16 %v326, %v326
  %v330 = vpack.c.bf16 %v327, %v327
  %s331 = scalar_lea.vmem %s0, 112
  %v332 = vld [vmem:[%s331] sm:$0xf]
  %v333 = vld [vmem:[%s331 + $0x4] sm:$0xf]
  %v334 = vld [vmem:[%s331 + $0x8] sm:$0x3]
  %v335 = vunpack.c.l.bf16 %v328
  %v336 = vunpack.c.l.bf16 %v329
  %v337 = vunpack.c.l.bf16 %v330
  %v338 = vunpack.c.l.bf16 %v332
  %v339 = vunpack.c.l.bf16 %v333
  %v340 = vunpack.c.l.bf16 %v334
  %v341 = vmax.f32 %v335, %v338
  %v342 = vmax.f32 %v336, %v339
  %v343 = vmax.f32 %v337, %v340
  %v344 = vpack.c.bf16 %v341, %v341
  %v345 = vpack.c.bf16 %v342, %v342
  %v346 = vpack.c.bf16 %v343, %v343
  %v347 = vunpack.c.l.bf16 %v344
  %v348 = vunpack.c.l.bf16 %v345
  %v349 = vunpack.c.l.bf16 %v346
  %v353 = vrot.slane %v322, 1
  %v354 = vrot.slane %v323, 1
  %v355 = vsel %vm70, %v353, %v354
  %v356 = vrot.slane %v324, 1
  %v357 = vsel %vm70, %v354, %v356
  %v361 = vmax.f32 %v347, %v355
  %v362 = vmax.f32 %v348, %v357
  %v363 = vmax.f32 %v349, %v356
  %v364 = vpack.c.bf16 %v361, %v361
  %v365 = vpack.c.bf16 %v362, %v362
  %v366 = vpack.c.bf16 %v363, %v363
  %v367 = vld [vmem:[%s275] sm:$0xc]
  %v368 = vld [vmem:[%s275 + $0x8] sm:$0xf]
  %v369 = vunpack.c.l.bf16 %v364
  %v370 = vunpack.c.l.bf16 %v365
  %v371 = vunpack.c.l.bf16 %v366
  %v372 = vunpack.c.l.bf16 %v367
  %v373 = vunpack.c.l.bf16 %v368
  %v376 = vrot.slane %v372, 5
  %v377 = vrot.slane %v284, 5
  %v378 = vsel %vm146, %v376, %v377
  %v379 = vrot.slane %v373, 5
  %v380 = vsel %vm146, %v377, %v379
  %v384 = vmax.f32 %v369, %v378
  %v385 = vmax.f32 %v370, %v380
  %v386 = vmax.f32 %v371, %v379
  %v387 = vpack.c.bf16 %v384, %v384
  %v388 = vpack.c.bf16 %v385, %v385
  %v389 = vpack.c.bf16 %v386, %v386
  %v390 = vld [vmem:[%s279] sm:$0xc]
  %v391 = vld [vmem:[%s279 + $0x8] sm:$0xf]
  %v392 = vunpack.c.l.bf16 %v387
  %v393 = vunpack.c.l.bf16 %v388
  %v394 = vunpack.c.l.bf16 %v389
  %v395 = vunpack.c.l.bf16 %v390
  %v396 = vunpack.c.l.bf16 %v391
  %v400 = vrot.slane %v395, 5
  %v401 = vrot.slane %v287, 5
  %v402 = vsel %vm146, %v400, %v401
  %v403 = vrot.slane %v396, 5
  %v404 = vsel %vm146, %v401, %v403
  %v408 = vmax.f32 %v392, %v402
  %v409 = vmax.f32 %v393, %v404
  %v410 = vmax.f32 %v394, %v403
  %v411 = vpack.c.bf16 %v408, %v408
  %v412 = vpack.c.bf16 %v409, %v409
  %v413 = vpack.c.bf16 %v410, %v410
  %v414 = vld [vmem:[%s275] sm:$0x8]
  %v415 = vld [vmem:[%s275 + $0xc] sm:$0x1]
  %v416 = vunpack.c.l.bf16 %v411
  %v417 = vunpack.c.l.bf16 %v412
  %v418 = vunpack.c.l.bf16 %v413
  %v419 = vunpack.c.l.bf16 %v414
  %v420 = vunpack.c.l.bf16 %v415
  %v423 = vrot.slane %v419, 6
  %v424 = vrot.slane %v284, 6
  %v425 = vsel %vm194, %v423, %v424
  %v426 = vrot.slane %v373, 6
  %v427 = vsel %vm194, %v424, %v426
  %v428 = vrot.slane %v420, 6
  %v429 = vsel %vm194, %v426, %v428
  %v433 = vmax.f32 %v416, %v425
  %v434 = vmax.f32 %v417, %v427
  %v435 = vmax.f32 %v418, %v429
  %v436 = vpack.c.bf16 %v433, %v433
  %v437 = vpack.c.bf16 %v434, %v434
  %v438 = vpack.c.bf16 %v435, %v435
  %v440 = vshrl.u32 %v436, 16
  %v442 = vrot.slane %v440, 6
  %v443 = vshll.u32 %v436, 16
  %v445 = vrot.slane %v443, 7
  %v446 = vor.u32 %v442, %v445
  %v448 = vld [vmem:[#allocation2 + $0x14] sm:$0xe]
  %v449 = vsel %vm256, %v446, %v448
  %450 = vst [vmem:[#allocation2 + $0x14] sm:$0xe] %v449
  %vm453 = vcmask 1045508
  %vm454 = vmor %vm228, %vm453
  %v455 = vrot.slane %v436, 6
  %v456 = vrot.slane %v455, 4
  %v457 = vrot.slane %v437, 6
  %v458 = vsel %vm454, %v456, %v457
  %v460 = vld [vmem:[#allocation2 + $0x18] sm:$0x7]
  %v461 = vsel %vm271, %v458, %v460
  %462 = vst [vmem:[#allocation2 + $0x18] sm:$0x7] %v461
  %v464 = vshll.u32 %v437, 16
  %v466 = vrot.slane %v464, 6
  %v467 = vshrl.u32 %v437, 16
  %v469 = vrot.slane %v467, 5
  %v470 = vor.u32 %v469, %v466
  %v471 = vrot.slane %v470, 4
  %v474 = vld [vmem:[#allocation2 + $0x18] sm:$0x8]
  %v475 = vsel %vm224, %v466, %v474
  %476 = vst [vmem:[#allocation2 + $0x18] sm:$0x8] %v475
  %v477 = vld [vmem:[#allocation2 + $0x1c] sm:$0x3]
  %v478 = vsel %vm230, %v471, %v477
  %479 = vst [vmem:[#allocation2 + $0x1c] sm:$0x3] %v478
  %vm481 = vcmask 1046532
  %vm482 = vmor %vm269, %vm481
  %v483 = vrot.slane %v437, 5
  %v484 = vrot.slane %v483, 4
  %v485 = vrot.slane %v438, 5
  %v486 = vsel %vm482, %v484, %v485
  %v487 = vrot.slane %v485, 4
  %v490 = vld [vmem:[#allocation2 + $0x1c] sm:$0xc]
  %v491 = vsel %vm236, %v486, %v490
  %492 = vst [vmem:[#allocation2 + $0x1c] sm:$0xc] %v491
  %v493 = vld [vmem:[#allocation2 + $0x20] sm:$0x1]
  %v494 = vsel %vm242, %v487, %v493
  %495 = vst [vmem:[#allocation2 + $0x20] sm:$0x1] %v494
  %v496 = vld [vmem:[#allocation2] sm:$0xf]
  %v497 = vld [vmem:[#allocation2 + $0x4] sm:$0xf]
  %v498 = vld [vmem:[#allocation2 + $0x8] sm:$0xf]
  %v499 = vld [vmem:[#allocation2 + $0xc] sm:$0xf]
  %v500 = vld [vmem:[#allocation2 + $0x10] sm:$0xf]
  %v501 = vld [vmem:[#allocation2 + $0x14] sm:$0xf]
  %v502 = vld [vmem:[#allocation2 + $0x18] sm:$0xf]
  %v503 = vld [vmem:[#allocation2 + $0x1c] sm:$0x1]
  %v504 = vld [vmem:[%s1] sm:$0xf]
  %v505 = vld [vmem:[%s1 + $0x4] sm:$0xf]
  %v506 = vld [vmem:[#allocation2 + $0x1c] sm:$0x3]
  %s507 = scalar_lea.vmem %s1, 8
  %v508 = vld [vmem:[%s507] sm:$0xf]
  %v509 = vld [vmem:[%s507 + $0x4] sm:$0xf]
  %v518 = vunpack.c.l.b16 %v496
  %v519 = vunpack.c.l.b16 %v497
  %v520 = vunpack.c.l.b16 %v498
  %v521 = vunpack.c.l.b16 %v499
  %v522 = vunpack.c.l.b16 %v500
  %v523 = vunpack.c.l.b16 %v501
  %v524 = vunpack.c.l.b16 %v502
  %v525 = vunpack.c.l.b16 %v506
  %v526 = vpack.c.b16 %v519, %v518
  %v527 = vpack.c.b16 %v521, %v520
  %v528 = vpack.c.b16 %v523, %v522
  %v529 = vpack.c.b16 %v525, %v524
  %vm530 = vsmask.f32 7424
  %v532 = vshrl.u32 %v526, 16
  %v534 = vshll.u32 %v526, 16
  %v536 = vrot.slane %v534, 1
  %v537 = vor.u32 %v532, %v536
  %v539 = vshll.u32 %v527, 16
  %v541 = vrot.slane %v539, 1
  %v542 = vsel %vm530, %v537, %v541
  %v543 = vshrl.u32 %v527, 16
  %v545 = vor.u32 %v543, %v541
  %v547 = vshll.u32 %v528, 16
  %v549 = vrot.slane %v547, 1
  %v550 = vsel %vm530, %v545, %v549
  %v551 = vshrl.u32 %v528, 16
  %v553 = vor.u32 %v551, %v549
  %v555 = vshll.u32 %v529, 16
  %v557 = vrot.slane %v555, 1
  %v558 = vsel %vm530, %v553, %v557
  %v559 = vshrl.u32 %v529, 16
  %v561 = vor.u32 %v559, %v557
  %v564 = vunpack.c.l.b16 %v508
  %v565 = vunpack.c.l.b16 %v509
  %v566 = vpack.c.b16 %v565, %v564
  %vm568 = vcmask 130048
  %v570 = vsel %vm568, %v542, 0
  %v573 = vsel %vm568, %v550, 0
  %v576 = vsel %vm568, %v558, 0
  %v579 = vsel %vm568, %v561, 0
  %581 = vmatpush.bf16.msra.mxu0 0
  %582 = vmatpush.bf16.msra.mxu0 0
  %583 = vmatpush.bf16.msra.mxu0 0
  %584 = vmatpush.bf16.msra.mxu0 0
  %585 = vmatpush.bf16.msra.mxu0 0
  %586 = vmatpush.bf16.msra.mxu0 0
  %587 = vmatpush.bf16.msra.mxu0 0
  %588 = vmatpush.bf16.msra.mxu0 %v566
  %589 = vmatmul.bf16.gmra.mxu0 %v570
  %v590 = vpop.f32.mrf.mxu0
  %v591 = vadd.f32 0.0, %v590
  %v592 = vpop.f32.mrf.mxu0
  %v593 = vadd.f32 0.0, %v592
  %594 = vmatmul.bf16.gmra.mxu0 %v573
  %v595 = vpop.f32.mrf.mxu0
  %v596 = vadd.f32 0.0, %v595
  %v597 = vpop.f32.mrf.mxu0
  %598 = vmatmul.bf16.gmra.mxu0 %v576
  %v599 = vpop.f32.mrf.mxu0
  %v600 = vadd.f32 0.0, %v599
  %v601 = vpop.f32.mrf.mxu0
  %v602 = vadd.f32 0.0, %v601
  %603 = vmatmul.bf16.gmra.mxu0 %v579
  %v604 = vpop.f32.mrf.mxu0
  %v605 = vadd.f32 0.0, %v604
  %v606 = vpop.f32.mrf.mxu0
  %v607 = vadd.f32 0.0, %v606
  %608 = vdwg.mxu0
  %v610 = vunpack.c.l.b16 %v503
  %v611 = vpack.c.b16 %v610, %v524
  %v614 = vunpack.c.l.b16 %v504
  %v615 = vunpack.c.l.b16 %v505
  %v616 = vpack.c.b16 %v615, %v614
  %v618 = vsel %vm568, %v526, 0
  %v620 = vsel %vm568, %v527, 0
  %v622 = vsel %vm568, %v528, 0
  %v625 = vsel %vm568, %v611, 0
  %627 = vmatpush.bf16.msra.mxu0 0
  %628 = vmatpush.bf16.msra.mxu0 0
  %629 = vmatpush.bf16.msra.mxu0 0
  %630 = vmatpush.bf16.msra.mxu0 0
  %631 = vmatpush.bf16.msra.mxu0 0
  %632 = vmatpush.bf16.msra.mxu0 0
  %633 = vmatpush.bf16.msra.mxu0 0
  %634 = vmatpush.bf16.msra.mxu0 %v616
  %635 = vmatmul.bf16.gmra.mxu0 %v618
  %v636 = vpop.f32.mrf.mxu0
  %v637 = vadd.f32 %v591, %v636
  %v638 = vpop.f32.mrf.mxu0
  %v639 = vadd.f32 %v593, %v638
  %640 = vmatmul.bf16.gmra.mxu0 %v620
  %v641 = vpop.f32.mrf.mxu0
  %v642 = vadd.f32 %v596, %v641
  %v643 = vpop.f32.mrf.mxu0
  %644 = vmatmul.bf16.gmra.mxu0 %v622
  %v645 = vpop.f32.mrf.mxu0
  %v646 = vadd.f32 %v600, %v645
  %v647 = vpop.f32.mrf.mxu0
  %v648 = vadd.f32 %v602, %v647
  %649 = vmatmul.bf16.gmra.mxu0 %v625
  %v650 = vpop.f32.mrf.mxu0
  %v651 = vadd.f32 %v605, %v650
  %v652 = vpop.f32.mrf.mxu0
  %v653 = vadd.f32 %v607, %v652
  %654 = vdwg.mxu0
  %v655 = vld [vmem:[#allocation2] sm:$0xe]
  %s656 = scalar_lea.vmem %s1, 16
  %v657 = vld [vmem:[%s656] sm:$0xf]
  %v658 = vld [vmem:[%s656 + $0x4] sm:$0xf]
  %v660 = vunpack.c.l.b16 %v655
  %v661 = vpack.c.b16 %v519, %v660
  %vm662 = vcmask 1046528
  %v663 = vrot.slane %v661, 1
  %v664 = vrot.slane %v527, 1
  %v665 = vsel %vm662, %v663, %v664
  %v666 = vrot.slane %v528, 1
  %v667 = vsel %vm662, %v664, %v666
  %v668 = vrot.slane %v529, 1
  %v669 = vsel %vm662, %v666, %v668
  %v672 = vunpack.c.l.b16 %v657
  %v673 = vunpack.c.l.b16 %v658
  %v674 = vpack.c.b16 %v673, %v672
  %v677 = vsel %vm568, %v665, 0
  %v680 = vsel %vm568, %v667, 0
  %v683 = vsel %vm568, %v669, 0
  %v686 = vsel %vm568, %v668, 0
  %688 = vmatpush.bf16.msra.mxu0 0
  %689 = vmatpush.bf16.msra.mxu0 0
  %690 = vmatpush.bf16.msra.mxu0 0
  %691 = vmatpush.bf16.msra.mxu0 0
  %692 = vmatpush.bf16.msra.mxu0 0
  %693 = vmatpush.bf16.msra.mxu0 0
  %694 = vmatpush.bf16.msra.mxu0 0
  %695 = vmatpush.bf16.msra.mxu0 %v674
  %696 = vmatmul.bf16.gmra.mxu0 %v677
  %v697 = vpop.f32.mrf.mxu0
  %v698 = vadd.f32 0.0, %v697
  %v699 = vpop.f32.mrf.mxu0
  %v700 = vadd.f32 0.0, %v699
  %701 = vmatmul.bf16.gmra.mxu0 %v680
  %v702 = vpop.f32.mrf.mxu0
  %v703 = vadd.f32 0.0, %v702
  %v704 = vpop.f32.mrf.mxu0
  %705 = vmatmul.bf16.gmra.mxu0 %v683
  %v706 = vpop.f32.mrf.mxu0
  %v707 = vadd.f32 0.0, %v706
  %v708 = vpop.f32.mrf.mxu0
  %v709 = vadd.f32 0.0, %v708
  %710 = vmatmul.bf16.gmra.mxu0 %v686
  %v711 = vpop.f32.mrf.mxu0
  %v712 = vadd.f32 0.0, %v711
  %v713 = vpop.f32.mrf.mxu0
  %v714 = vadd.f32 0.0, %v713
  %715 = vdwg.mxu0
  %v716 = vadd.f32 %v637, %v698
  %v717 = vadd.f32 %v639, %v700
  %v718 = vadd.f32 %v642, %v703
  %v719 = vadd.f32 %v646, %v707
  %v720 = vadd.f32 %v648, %v709
  %v721 = vadd.f32 %v651, %v712
  %v722 = vadd.f32 %v653, %v714
  %v723 = vld [vmem:[#allocation2] sm:$0x8]
  %v724 = vld [vmem:[#allocation2 + $0x1c] sm:$0xf]
  %s725 = scalar_lea.vmem %s1, 24
  %v726 = vld [vmem:[%s725] sm:$0xf]
  %v727 = vld [vmem:[%s725 + $0x4] sm:$0xf]
  %v730 = vunpack.c.l.b16 %v723
  %v731 = vunpack.c.l.b16 %v724
  %v732 = vpack.c.b16 %v519, %v730
  %v733 = vpack.c.b16 %v731, %v524
  %vm734 = vcmask 1044480
  %v735 = vrot.slane %v732, 3
  %v736 = vrot.slane %v527, 3
  %v737 = vsel %vm734, %v735, %v736
  %v738 = vrot.slane %v528, 3
  %v739 = vsel %vm734, %v736, %v738
  %v740 = vrot.slane %v733, 3
  %v741 = vsel %vm734, %v738, %v740
  %v744 = vunpack.c.l.b16 %v726
  %v745 = vunpack.c.l.b16 %v727
  %v746 = vpack.c.b16 %v745, %v744
  %v749 = vsel %vm568, %v737, 0
  %v752 = vsel %vm568, %v739, 0
  %v755 = vsel %vm568, %v741, 0
  %v758 = vsel %vm568, %v740, 0
  %760 = vmatpush.bf16.msra.mxu0 0
  %761 = vmatpush.bf16.msra.mxu0 0
  %762 = vmatpush.bf16.msra.mxu0 0
  %763 = vmatpush.bf16.msra.mxu0 0
  %764 = vmatpush.bf16.msra.mxu0 0
  %765 = vmatpush.bf16.msra.mxu0 0
  %766 = vmatpush.bf16.msra.mxu0 0
  %767 = vmatpush.bf16.msra.mxu0 %v746
  %768 = vmatmul.bf16.gmra.mxu0 %v749
  %v769 = vpop.f32.mrf.mxu0
  %v770 = vadd.f32 0.0, %v769
  %v771 = vpop.f32.mrf.mxu0
  %v772 = vadd.f32 0.0, %v771
  %773 = vmatmul.bf16.gmra.mxu0 %v752
  %v774 = vpop.f32.mrf.mxu0
  %v775 = vadd.f32 0.0, %v774
  %v776 = vpop.f32.mrf.mxu0
  %777 = vmatmul.bf16.gmra.mxu0 %v755
  %v778 = vpop.f32.mrf.mxu0
  %v779 = vadd.f32 0.0, %v778
  %v780 = vpop.f32.mrf.mxu0
  %v781 = vadd.f32 0.0, %v780
  %782 = vmatmul.bf16.gmra.mxu0 %v758
  %v783 = vpop.f32.mrf.mxu0
  %v784 = vadd.f32 0.0, %v783
  %v785 = vpop.f32.mrf.mxu0
  %v786 = vadd.f32 0.0, %v785
  %787 = vdwg.mxu0
  %v788 = vadd.f32 %v716, %v770
  %v789 = vadd.f32 %v717, %v772
  %v790 = vadd.f32 %v718, %v775
  %v791 = vadd.f32 %v719, %v779
  %v792 = vadd.f32 %v720, %v781
  %v793 = vadd.f32 %v721, %v784
  %v794 = vadd.f32 %v722, %v786
  %v795 = vld [vmem:[#allocation2] sm:$0x8]
  %v796 = vld [vmem:[#allocation2 + $0x4] sm:$0xf]
  %v797 = vld [vmem:[#allocation2 + $0x8] sm:$0xf]
  %v798 = vld [vmem:[#allocation2 + $0xc] sm:$0xf]
  %v799 = vld [vmem:[#allocation2 + $0x10] sm:$0xf]
  %v800 = vld [vmem:[#allocation2 + $0x14] sm:$0xf]
  %v801 = vld [vmem:[#allocation2 + $0x18] sm:$0xf]
  %v802 = vld [vmem:[#allocation2 + $0x1c] sm:$0xf]
  %v803 = vld [vmem:[#allocation2 + $0x20] sm:$0x1]
  %s804 = scalar_lea.vmem %s1, 32
  %v805 = vld [vmem:[%s804] sm:$0xf]
  %v806 = vld [vmem:[%s804 + $0x4] sm:$0xf]
  %v816 = vunpack.c.l.b16 %v795
  %v817 = vunpack.c.l.b16 %v796
  %v818 = vunpack.c.l.b16 %v797
  %v819 = vunpack.c.l.b16 %v798
  %v820 = vunpack.c.l.b16 %v799
  %v821 = vunpack.c.l.b16 %v800
  %v822 = vunpack.c.l.b16 %v801
  %v823 = vunpack.c.l.b16 %v802
  %v824 = vunpack.c.l.b16 %v803
  %v825 = vpack.c.b16 %v817, %v816
  %v826 = vpack.c.b16 %v819, %v818
  %v827 = vpack.c.b16 %v821, %v820
  %v828 = vpack.c.b16 %v823, %v822
  %v829 = vpack.c.b16 %v824, %v824
  %vm830 = vsmask.f32 4352
  %v832 = vshrl.u32 %v825, 16
  %v834 = vrot.slane %v832, 3
  %v835 = vshll.u32 %v825, 16
  %v837 = vrot.slane %v835, 4
  %v838 = vor.u32 %v834, %v837
  %v840 = vshrl.u32 %v826, 16
  %v842 = vrot.slane %v840, 3
  %v843 = vshll.u32 %v826, 16
  %v845 = vrot.slane %v843, 4
  %v846 = vor.u32 %v842, %v845
  %v847 = vsel %vm830, %v838, %v846
  %v849 = vshrl.u32 %v827, 16
  %v851 = vrot.slane %v849, 3
  %v852 = vshll.u32 %v827, 16
  %v854 = vrot.slane %v852, 4
  %v855 = vor.u32 %v851, %v854
  %v856 = vsel %vm830, %v846, %v855
  %v858 = vshrl.u32 %v828, 16
  %v860 = vrot.slane %v858, 3
  %v861 = vshll.u32 %v828, 16
  %v863 = vrot.slane %v861, 4
  %v864 = vor.u32 %v860, %v863
  %v865 = vsel %vm830, %v855, %v864
  %v867 = vshll.u32 %v829, 16
  %v869 = vrot.slane %v867, 4
  %v870 = vsel %vm830, %v864, %v869
  %v873 = vunpack.c.l.b16 %v805
  %v874 = vunpack.c.l.b16 %v806
  %v875 = vpack.c.b16 %v874, %v873
  %v878 = vsel %vm568, %v847, 0
  %v881 = vsel %vm568, %v856, 0
  %v884 = vsel %vm568, %v865, 0
  %v887 = vsel %vm568, %v870, 0
  %889 = vmatpush.bf16.msra.mxu0 0
  %890 = vmatpush.bf16.msra.mxu0 0
  %891 = vmatpush.bf16.msra.mxu0 0
  %892 = vmatpush.bf16.msra.mxu0 0
  %893 = vmatpush.bf16.msra.mxu0 0
  %894 = vmatpush.bf16.msra.mxu0 0
  %895 = vmatpush.bf16.msra.mxu0 0
  %896 = vmatpush.bf16.msra.mxu0 %v875
  %897 = vmatmul.bf16.gmra.mxu0 %v878
  %v898 = vpop.f32.mrf.mxu0
  %v899 = vadd.f32 0.0, %v898
  %v900 = vpop.f32.mrf.mxu0
  %v901 = vadd.f32 0.0, %v900
  %902 = vmatmul.bf16.gmra.mxu0 %v881
  %v903 = vpop.f32.mrf.mxu0
  %v904 = vadd.f32 0.0, %v903
  %v905 = vpop.f32.mrf.mxu0
  %906 = vmatmul.bf16.gmra.mxu0 %v884
  %v907 = vpop.f32.mrf.mxu0
  %v908 = vadd.f32 0.0, %v907
  %v909 = vpop.f32.mrf.mxu0
  %v910 = vadd.f32 0.0, %v909
  %911 = vmatmul.bf16.gmra.mxu0 %v887
  %v912 = vpop.f32.mrf.mxu0
  %v913 = vadd.f32 0.0, %v912
  %v914 = vpop.f32.mrf.mxu0
  %v915 = vadd.f32 0.0, %v914
  %916 = vdwg.mxu0
  %v917 = vadd.f32 %v788, %v899
  %v918 = vadd.f32 %v789, %v901
  %v919 = vadd.f32 %v790, %v904
  %v920 = vadd.f32 %v791, %v908
  %v921 = vadd.f32 %v792, %v910
  %v922 = vadd.f32 %v793, %v913
  %v923 = vadd.f32 %v794, %v915
  %s924 = scalar_lea.vmem %s1, 40
  %v925 = vld [vmem:[%s924] sm:$0xf]
  %v926 = vld [vmem:[%s924 + $0x4] sm:$0xf]
  %v927 = vpack.c.b16 %v818, %v817
  %v928 = vpack.c.b16 %v820, %v819
  %v929 = vpack.c.b16 %v822, %v821
  %v930 = vpack.c.b16 %v824, %v823
  %v933 = vunpack.c.l.b16 %v925
  %v934 = vunpack.c.l.b16 %v926
  %v935 = vpack.c.b16 %v934, %v933
  %v938 = vsel %vm568, %v927, 0
  %v941 = vsel %vm568, %v928, 0
  %v944 = vsel %vm568, %v929, 0
  %v947 = vsel %vm568, %v930, 0
  %949 = vmatpush.bf16.msra.mxu0 0
  %950 = vmatpush.bf16.msra.mxu0 0
  %951 = vmatpush.bf16.msra.mxu0 0
  %952 = vmatpush.bf16.msra.mxu0 0
  %953 = vmatpush.bf16.msra.mxu0 0
  %954 = vmatpush.bf16.msra.mxu0 0
  %955 = vmatpush.bf16.msra.mxu0 0
  %956 = vmatpush.bf16.msra.mxu0 %v935
  %957 = vmatmul.bf16.gmra.mxu0 %v938
  %v958 = vpop.f32.mrf.mxu0
  %v959 = vadd.f32 0.0, %v958
  %v960 = vpop.f32.mrf.mxu0
  %v961 = vadd.f32 0.0, %v960
  %962 = vmatmul.bf16.gmra.mxu0 %v941
  %v963 = vpop.f32.mrf.mxu0
  %v964 = vadd.f32 0.0, %v963
  %v965 = vpop.f32.mrf.mxu0
  %966 = vmatmul.bf16.gmra.mxu0 %v944
  %v967 = vpop.f32.mrf.mxu0
  %v968 = vadd.f32 0.0, %v967
  %v969 = vpop.f32.mrf.mxu0
  %v970 = vadd.f32 0.0, %v969
  %971 = vmatmul.bf16.gmra.mxu0 %v947
  %v972 = vpop.f32.mrf.mxu0
  %v973 = vadd.f32 0.0, %v972
  %v974 = vpop.f32.mrf.mxu0
  %v975 = vadd.f32 0.0, %v974
  %976 = vdwg.mxu0
  %v977 = vadd.f32 %v917, %v959
  %v978 = vadd.f32 %v918, %v961
  %v979 = vadd.f32 %v919, %v964
  %v980 = vadd.f32 %v920, %v968
  %v981 = vadd.f32 %v921, %v970
  %v982 = vadd.f32 %v922, %v973
  %v983 = vadd.f32 %v923, %v975
  %v984 = vld [vmem:[#allocation2 + $0x4] sm:$0xc]
  %v985 = vld [vmem:[#allocation2 + $0x20] sm:$0x7]
  %s986 = scalar_lea.vmem %s1, 48
  %v987 = vld [vmem:[%s986] sm:$0xf]
  %v988 = vld [vmem:[%s986 + $0x4] sm:$0xf]
  %v991 = vunpack.c.l.b16 %v984
  %v992 = vunpack.c.l.b16 %v985
  %v993 = vpack.c.b16 %v818, %v991
  %v994 = vpack.c.b16 %v992, %v823
  %vm995 = vcmask 1045504
  %v996 = vrot.slane %v993, 2
  %v997 = vrot.slane %v928, 2
  %v998 = vsel %vm995, %v996, %v997
  %v999 = vrot.slane %v929, 2
  %v1000 = vsel %vm995, %v997, %v999
  %v1001 = vrot.slane %v994, 2
  %v1002 = vsel %vm995, %v999, %v1001
  %v1005 = vunpack.c.l.b16 %v987
  %v1006 = vunpack.c.l.b16 %v988
  %v1007 = vpack.c.b16 %v1006, %v1005
  %v1010 = vsel %vm568, %v998, 0
  %v1013 = vsel %vm568, %v1000, 0
  %v1016 = vsel %vm568, %v1002, 0
  %v1019 = vsel %vm568, %v1001, 0
  %1021 = vmatpush.bf16.msra.mxu0 0
  %1022 = vmatpush.bf16.msra.mxu0 0
  %1023 = vmatpush.bf16.msra.mxu0 0
  %1024 = vmatpush.bf16.msra.mxu0 0
  %1025 = vmatpush.bf16.msra.mxu0 0
  %1026 = vmatpush.bf16.msra.mxu0 0
  %1027 = vmatpush.bf16.msra.mxu0 0
  %1028 = vmatpush.bf16.msra.mxu0 %v1007
  %1029 = vmatmul.bf16.gmra.mxu0 %v1010
  %v1030 = vpop.f32.mrf.mxu0
  %v1031 = vadd.f32 0.0, %v1030
  %v1032 = vpop.f32.mrf.mxu0
  %v1033 = vadd.f32 0.0, %v1032
  %1034 = vmatmul.bf16.gmra.mxu0 %v1013
  %v1035 = vpop.f32.mrf.mxu0
  %v1036 = vadd.f32 0.0, %v1035
  %v1037 = vpop.f32.mrf.mxu0
  %1038 = vmatmul.bf16.gmra.mxu0 %v1016
  %v1039 = vpop.f32.mrf.mxu0
  %v1040 = vadd.f32 0.0, %v1039
  %v1041 = vpop.f32.mrf.mxu0
  %v1042 = vadd.f32 0.0, %v1041
  %1043 = vmatmul.bf16.gmra.mxu0 %v1019
  %v1044 = vpop.f32.mrf.mxu0
  %v1045 = vadd.f32 0.0, %v1044
  %v1046 = vpop.f32.mrf.mxu0
  %v1047 = vadd.f32 0.0, %v1046
  %1048 = vdwg.mxu0
  %v1049 = vadd.f32 %v977, %v1031
  %v1050 = vadd.f32 %v978, %v1033
  %v1051 = vadd.f32 %v979, %v1036
  %v1052 = vadd.f32 %v980, %v1040
  %v1053 = vadd.f32 %v981, %v1042
  %v1054 = vadd.f32 %v982, %v1045
  %v1055 = vadd.f32 %v983, %v1047
  %v1056 = vld [vmem:[#allocation2 + $0x20] sm:$0xf]
  %s1057 = scalar_lea.vmem %s1, 56
  %v1058 = vld [vmem:[%s1057] sm:$0xf]
  %v1059 = vld [vmem:[%s1057 + $0x4] sm:$0xf]
  %v1061 = vunpack.c.l.b16 %v1056
  %v1062 = vpack.c.b16 %v1061, %v823
  %vm1063 = vsmask.f32 5376
  %v1065 = vshrl.u32 %v993, 16
  %v1067 = vrot.slane %v1065, 2
  %v1068 = vshll.u32 %v993, 16
  %v1070 = vrot.slane %v1068, 3
  %v1071 = vor.u32 %v1067, %v1070
  %v1072 = vshrl.u32 %v928, 16
  %v1074 = vrot.slane %v1072, 2
  %v1075 = vshll.u32 %v928, 16
  %v1077 = vrot.slane %v1075, 3
  %v1078 = vor.u32 %v1074, %v1077
  %v1079 = vsel %vm1063, %v1071, %v1078
  %v1080 = vshrl.u32 %v929, 16
  %v1082 = vrot.slane %v1080, 2
  %v1083 = vshll.u32 %v929, 16
  %v1085 = vrot.slane %v1083, 3
  %v1086 = vor.u32 %v1082, %v1085
  %v1087 = vsel %vm1063, %v1078, %v1086
  %v1089 = vshrl.u32 %v1062, 16
  %v1091 = vrot.slane %v1089, 2
  %v1092 = vshll.u32 %v1062, 16
  %v1094 = vrot.slane %v1092, 3
  %v1095 = vor.u32 %v1091, %v1094
  %v1096 = vsel %vm1063, %v1086, %v1095
  %v1099 = vunpack.c.l.b16 %v1058
  %v1100 = vunpack.c.l.b16 %v1059
  %v1101 = vpack.c.b16 %v1100, %v1099
  %v1104 = vsel %vm568, %v1079, 0
  %v1107 = vsel %vm568, %v1087, 0
  %v1110 = vsel %vm568, %v1096, 0
  %v1113 = vsel %vm568, %v1095, 0
  %1115 = vmatpush.bf16.msra.mxu0 0
  %1116 = vmatpush.bf16.msra.mxu0 0
  %1117 = vmatpush.bf16.msra.mxu0 0
  %1118 = vmatpush.bf16.msra.mxu0 0
  %1119 = vmatpush.bf16.msra.mxu0 0
  %1120 = vmatpush.bf16.msra.mxu0 0
  %1121 = vmatpush.bf16.msra.mxu0 0
  %1122 = vmatpush.bf16.msra.mxu0 %v1101
  %1123 = vmatmul.bf16.gmra.mxu0 %v1104
  %v1124 = vpop.f32.mrf.mxu0
  %v1125 = vadd.f32 0.0, %v1124
  %v1126 = vpop.f32.mrf.mxu0
  %v1127 = vadd.f32 0.0, %v1126
  %1128 = vmatmul.bf16.gmra.mxu0 %v1107
  %v1129 = vpop.f32.mrf.mxu0
  %v1130 = vadd.f32 0.0, %v1129
  %v1131 = vpop.f32.mrf.mxu0
  %1132 = vmatmul.bf16.gmra.mxu0 %v1110
  %v1133 = vpop.f32.mrf.mxu0
  %v1134 = vadd.f32 0.0, %v1133
  %v1135 = vpop.f32.mrf.mxu0
  %v1136 = vadd.f32 0.0, %v1135
  %1137 = vmatmul.bf16.gmra.mxu0 %v1113
  %v1138 = vpop.f32.mrf.mxu0
  %v1139 = vadd.f32 0.0, %v1138
  %v1140 = vpop.f32.mrf.mxu0
  %v1141 = vadd.f32 0.0, %v1140
  %1142 = vdwg.mxu0
  %v1143 = vadd.f32 %v1049, %v1125
  %v1144 = vadd.f32 %v1050, %v1127
  %v1145 = vadd.f32 %v1051, %v1130
  %v1146 = vadd.f32 %v1052, %v1134
  %v1147 = vadd.f32 %v1053, %v1136
  %v1148 = vadd.f32 %v1054, %v1139
  %v1149 = vadd.f32 %v1055, %v1141
  %v1150 = vld [vmem:[#allocation2 + $0x4] sm:$0x8]
  %s1151 = scalar_lea.vmem %s1, 64
  %v1152 = vld [vmem:[%s1151] sm:$0xf]
  %v1153 = vld [vmem:[%s1151 + $0x4] sm:$0xf]
  %v1155 = vunpack.c.l.b16 %v1150
  %v1156 = vpack.c.b16 %v818, %v1155
  %v1157 = vrot.slane %v1156, 3
  %v1158 = vrot.slane %v928, 3
  %v1159 = vsel %vm734, %v1157, %v1158
  %v1160 = vrot.slane %v929, 3
  %v1161 = vsel %vm734, %v1158, %v1160
  %v1162 = vrot.slane %v1062, 3
  %v1163 = vsel %vm734, %v1160, %v1162
  %v1166 = vunpack.c.l.b16 %v1152
  %v1167 = vunpack.c.l.b16 %v1153
  %v1168 = vpack.c.b16 %v1167, %v1166
  %v1171 = vsel %vm568, %v1159, 0
  %v1174 = vsel %vm568, %v1161, 0
  %v1177 = vsel %vm568, %v1163, 0
  %v1180 = vsel %vm568, %v1162, 0
  %1182 = vmatpush.bf16.msra.mxu0 0
  %1183 = vmatpush.bf16.msra.mxu0 0
  %1184 = vmatpush.bf16.msra.mxu0 0
  %1185 = vmatpush.bf16.msra.mxu0 0
  %1186 = vmatpush.bf16.msra.mxu0 0
  %1187 = vmatpush.bf16.msra.mxu0 0
  %1188 = vmatpush.bf16.msra.mxu0 0
  %1189 = vmatpush.bf16.msra.mxu0 %v1168
  %1190 = vmatmul.bf16.gmra.mxu0 %v1171
  %v1191 = vpop.f32.mrf.mxu0
  %v1192 = vadd.f32 0.0, %v1191
  %v1193 = vpop.f32.mrf.mxu0
  %v1194 = vadd.f32 0.0, %v1193
  %1195 = vmatmul.bf16.gmra.mxu0 %v1174
  %v1196 = vpop.f32.mrf.mxu0
  %v1197 = vadd.f32 0.0, %v1196
  %v1198 = vpop.f32.mrf.mxu0
  %1199 = vmatmul.bf16.gmra.mxu0 %v1177
  %v1200 = vpop.f32.mrf.mxu0
  %v1201 = vadd.f32 0.0, %v1200
  %v1202 = vpop.f32.mrf.mxu0
  %v1203 = vadd.f32 0.0, %v1202
  %1204 = vmatmul.bf16.gmra.mxu0 %v1180
  %v1205 = vpop.f32.mrf.mxu0
  %v1206 = vadd.f32 0.0, %v1205
  %v1207 = vpop.f32.mrf.mxu0
  %v1208 = vadd.f32 0.0, %v1207
  %1209 = vdwg.mxu0
  %v1210 = vadd.f32 %v1143, %v1192
  %v1211 = vadd.f32 %v1144, %v1194
  %v1212 = vadd.f32 %v1145, %v1197
  %v1213 = vadd.f32 %v1146, %v1201
  %v1214 = vadd.f32 %v1147, %v1203
  %v1215 = vadd.f32 %v1148, %v1206
  %v1216 = vadd.f32 %v1149, %v1208
  %v1217 = vld [vmem:[%s2] sm:$0x1]
  %v1219 = vperm.slane %v1217, 0
  %v1221 = vmul.f32 %v1210, %v1219
  %v1222 = vmul.f32 %v1211, %v1219
  %v1223 = vmul.f32 %v1212, %v1219
  %v1224 = vmul.f32 %v1213, %v1219
  %v1225 = vmul.f32 %v1214, %v1219
  %v1226 = vmul.f32 %v1215, %v1219
  %v1227 = vmul.f32 %v1216, %v1219
  %v1228 = vld [vmem:[%s3] sm:$0x1]
  %v1230 = vperm.slane %v1228, 0
  %v1232 = vadd.f32 %v1221, %v1230
  %v1233 = vadd.f32 %v1222, %v1230
  %v1234 = vadd.f32 %v1223, %v1230
  %v1235 = vadd.f32 %v1224, %v1230
  %v1236 = vadd.f32 %v1225, %v1230
  %v1237 = vadd.f32 %v1226, %v1230
  %v1238 = vadd.f32 %v1227, %v1230
  %v1239 = vmax.f32 %v1232, 0.0
  %v1240 = vmax.f32 %v1233, 0.0
  %v1241 = vmax.f32 %v1234, 0.0
  %v1242 = vmax.f32 %v1235, 0.0
  %v1243 = vmax.f32 %v1236, 0.0
  %v1244 = vmax.f32 %v1237, 0.0
  %v1245 = vmax.f32 %v1238, 0.0
  %v1246 = vpack.c.bf16 %v1239, %v1239
  %v1247 = vpack.c.bf16 %v1240, %v1240
  %v1248 = vpack.c.bf16 %v1241, %v1241
  %v1249 = vpack.c.bf16 %v1242, %v1242
  %v1250 = vpack.c.bf16 %v1243, %v1243
  %v1251 = vpack.c.bf16 %v1244, %v1244
  %v1252 = vpack.c.bf16 %v1245, %v1245
  %v1254 = vshll.u32 %v1246, 16
  %v1256 = vrot.slane %v1254, 5
  %v1257 = vshrl.u32 %v1246, 16
  %v1259 = vrot.slane %v1257, 4
  %v1260 = vor.u32 %v1259, %v1256
  %v1261 = vrot.slane %v1260, 4
  %v1264 = vld [vmem:[#allocation3] sm:$0x8]
  %v1265 = vsel %vm224, %v1256, %v1264
  %1266 = vst [vmem:[#allocation3] sm:$0x8] %v1265
  %v1267 = vld [vmem:[#allocation3 + $0x4] sm:$0x3]
  %v1268 = vsel %vm230, %v1261, %v1267
  %1269 = vst [vmem:[#allocation3 + $0x4] sm:$0x3] %v1268
  %vm1270 = vsmask.f32 3328
  %vm1271 = vsmask.f32 7440
  %vm1272 = vmor %vm1270, %vm1271
  %v1274 = vshll.u32 %v1247, 16
  %v1276 = vrot.slane %v1274, 5
  %v1277 = vsel %vm1272, %v1261, %v1276
  %v1278 = vshrl.u32 %v1247, 16
  %v1280 = vrot.slane %v1278, 4
  %v1281 = vrot.slane %v1280, 4
  %v1284 = vld [vmem:[#allocation3 + $0x4] sm:$0xc]
  %v1285 = vsel %vm236, %v1277, %v1284
  %1286 = vst [vmem:[#allocation3 + $0x4] sm:$0xc] %v1285
  %v1287 = vld [vmem:[#allocation3 + $0x8] sm:$0x1]
  %v1288 = vsel %vm242, %v1281, %v1287
  %1289 = vst [vmem:[#allocation3 + $0x8] sm:$0x1] %v1288
  %v1290 = vor.u32 %v1280, %v1276
  %v1291 = vrot.slane %v1290, 4
  %v1293 = vld [vmem:[#allocation3 + $0x8] sm:$0xe]
  %v1294 = vsel %vm256, %v1291, %v1293
  %1295 = vst [vmem:[#allocation3 + $0x8] sm:$0xe] %v1294
  %v1297 = vshrl.u32 %v1248, 16
  %v1299 = vrot.slane %v1297, 4
  %v1300 = vshll.u32 %v1248, 16
  %v1302 = vrot.slane %v1300, 5
  %v1303 = vor.u32 %v1299, %v1302
  %v1304 = vrot.slane %v1303, 4
  %v1306 = vld [vmem:[#allocation3 + $0xc] sm:$0x7]
  %v1307 = vsel %vm271, %v1304, %v1306
  %1308 = vst [vmem:[#allocation3 + $0xc] sm:$0x7] %v1307
  %v1310 = vshrl.u32 %v1249, 16
  %v1312 = vrot.slane %v1310, 4
  %v1313 = vshll.u32 %v1249, 16
  %v1315 = vrot.slane %v1313, 5
  %v1316 = vor.u32 %v1312, %v1315
  %v1317 = vrot.slane %v1316, 4
  %v1319 = vld [vmem:[#allocation3 + $0x14] sm:$0xe]
  %v1320 = vsel %vm256, %v1317, %v1319
  %1321 = vst [vmem:[#allocation3 + $0x14] sm:$0xe] %v1320
  %v1323 = vshrl.u32 %v1250, 16
  %v1325 = vrot.slane %v1323, 4
  %v1326 = vshll.u32 %v1250, 16
  %v1328 = vrot.slane %v1326, 5
  %v1329 = vor.u32 %v1325, %v1328
  %v1330 = vrot.slane %v1329, 4
  %v1332 = vld [vmem:[#allocation3 + $0x18] sm:$0x7]
  %v1333 = vsel %vm271, %v1330, %v1332
  %1334 = vst [vmem:[#allocation3 + $0x18] sm:$0x7] %v1333
  %v1336 = vshll.u32 %v1251, 16
  %v1338 = vrot.slane %v1336, 5
  %v1339 = vshrl.u32 %v1251, 16
  %v1341 = vrot.slane %v1339, 4
  %v1342 = vor.u32 %v1341, %v1338
  %v1343 = vrot.slane %v1342, 4
  %v1346 = vld [vmem:[#allocation3 + $0x18] sm:$0x8]
  %v1347 = vsel %vm224, %v1338, %v1346
  %1348 = vst [vmem:[#allocation3 + $0x18] sm:$0x8] %v1347
  %v1349 = vld [vmem:[#allocation3 + $0x1c] sm:$0x3]
  %v1350 = vsel %vm230, %v1343, %v1349
  %1351 = vst [vmem:[#allocation3 + $0x1c] sm:$0x3] %v1350
  %v1353 = vshll.u32 %v1252, 16
  %v1355 = vrot.slane %v1353, 5
  %v1356 = vsel %vm1272, %v1343, %v1355
  %v1357 = vshrl.u32 %v1252, 16
  %v1359 = vrot.slane %v1357, 4
  %v1360 = vrot.slane %v1359, 4
  %v1363 = vld [vmem:[#allocation3 + $0x1c] sm:$0xc]
  %v1364 = vsel %vm236, %v1356, %v1363
  %1365 = vst [vmem:[#allocation3 + $0x1c] sm:$0xc] %v1364
  %v1366 = vld [vmem:[#allocation3 + $0x20] sm:$0x1]
  %v1367 = vsel %vm242, %v1360, %v1366
  %1368 = vst [vmem:[#allocation3 + $0x20] sm:$0x1] %v1367
  %v1369 = vld [vmem:[#allocation3] sm:$0xf]
  %v1370 = vld [vmem:[#allocation3 + $0x4] sm:$0xf]
  %v1371 = vld [vmem:[#allocation3 + $0x8] sm:$0xf]
  %v1372 = vld [vmem:[#allocation3 + $0xc] sm:$0xf]
  %v1373 = vld [vmem:[#allocation3 + $0x10] sm:$0xf]
  %v1374 = vld [vmem:[#allocation3 + $0x14] sm:$0xf]
  %v1375 = vld [vmem:[#allocation3 + $0x18] sm:$0xf]
  %v1376 = vld [vmem:[#allocation3 + $0x1c] sm:$0x1]
  %v1377 = vld [vmem:[%s4] sm:$0xf]
  %v1378 = vld [vmem:[%s4 + $0x4] sm:$0xf]
  %v1379 = vld [vmem:[#allocation3 + $0x1c] sm:$0x3]
  %s1380 = scalar_lea.vmem %s4, 8
  %v1381 = vld [vmem:[%s1380] sm:$0xf]
  %v1382 = vld [vmem:[%s1380 + $0x4] sm:$0xf]
  %v1391 = vunpack.c.l.b16 %v1369
  %v1392 = vunpack.c.l.b16 %v1370
  %v1393 = vunpack.c.l.b16 %v1371
  %v1394 = vunpack.c.l.b16 %v1372
  %v1395 = vunpack.c.l.b16 %v1373
  %v1396 = vunpack.c.l.b16 %v1374
  %v1397 = vunpack.c.l.b16 %v1375
  %v1398 = vunpack.c.l.b16 %v1379
  %v1399 = vpack.c.b16 %v1392, %v1391
  %v1400 = vpack.c.b16 %v1394, %v1393
  %v1401 = vpack.c.b16 %v1396, %v1395
  %v1402 = vpack.c.b16 %v1398, %v1397
  %v1404 = vshrl.u32 %v1399, 16
  %v1406 = vshll.u32 %v1399, 16
  %v1408 = vrot.slane %v1406, 1
  %v1409 = vor.u32 %v1404, %v1408
  %v1411 = vshll.u32 %v1400, 16
  %v1413 = vrot.slane %v1411, 1
  %v1414 = vsel %vm530, %v1409, %v1413
  %v1415 = vshrl.u32 %v1400, 16
  %v1417 = vor.u32 %v1415, %v1413
  %v1419 = vshll.u32 %v1401, 16
  %v1421 = vrot.slane %v1419, 1
  %v1422 = vsel %vm530, %v1417, %v1421
  %v1423 = vshrl.u32 %v1401, 16
  %v1425 = vor.u32 %v1423, %v1421
  %v1427 = vshll.u32 %v1402, 16
  %v1429 = vrot.slane %v1427, 1
  %v1430 = vsel %vm530, %v1425, %v1429
  %v1431 = vshrl.u32 %v1402, 16
  %v1433 = vor.u32 %v1431, %v1429
  %v1436 = vunpack.c.l.b16 %v1381
  %v1437 = vunpack.c.l.b16 %v1382
  %v1438 = vpack.c.b16 %v1437, %v1436
  %v1441 = vsel %vm568, %v1414, 0
  %v1444 = vsel %vm568, %v1422, 0
  %v1447 = vsel %vm568, %v1430, 0
  %v1450 = vsel %vm568, %v1433, 0
  %1452 = vmatpush.bf16.msra.mxu0 0
  %1453 = vmatpush.bf16.msra.mxu0 0
  %1454 = vmatpush.bf16.msra.mxu0 0
  %1455 = vmatpush.bf16.msra.mxu0 0
  %1456 = vmatpush.bf16.msra.mxu0 0
  %1457 = vmatpush.bf16.msra.mxu0 0
  %1458 = vmatpush.bf16.msra.mxu0 0
  %1459 = vmatpush.bf16.msra.mxu0 %v1438
  %1460 = vmatmul.bf16.gmra.mxu0 %v1441
  %v1461 = vpop.f32.mrf.mxu0
  %v1462 = vadd.f32 0.0, %v1461
  %v1463 = vpop.f32.mrf.mxu0
  %v1464 = vadd.f32 0.0, %v1463
  %1465 = vmatmul.bf16.gmra.mxu0 %v1444
  %v1466 = vpop.f32.mrf.mxu0
  %v1467 = vadd.f32 0.0, %v1466
  %v1468 = vpop.f32.mrf.mxu0
  %1469 = vmatmul.bf16.gmra.mxu0 %v1447
  %v1470 = vpop.f32.mrf.mxu0
  %v1471 = vadd.f32 0.0, %v1470
  %v1472 = vpop.f32.mrf.mxu0
  %v1473 = vadd.f32 0.0, %v1472
  %1474 = vmatmul.bf16.gmra.mxu0 %v1450
  %v1475 = vpop.f32.mrf.mxu0
  %v1476 = vadd.f32 0.0, %v1475
  %v1477 = vpop.f32.mrf.mxu0
  %v1478 = vadd.f32 0.0, %v1477
  %1479 = vdwg.mxu0
  %v1481 = vunpack.c.l.b16 %v1376
  %v1482 = vpack.c.b16 %v1481, %v1397
  %v1485 = vunpack.c.l.b16 %v1377
  %v1486 = vunpack.c.l.b16 %v1378
  %v1487 = vpack.c.b16 %v1486, %v1485
  %v1489 = vsel %vm568, %v1399, 0
  %v1491 = vsel %vm568, %v1400, 0
  %v1493 = vsel %vm568, %v1401, 0
  %v1496 = vsel %vm568, %v1482, 0
  %1498 = vmatpush.bf16.msra.mxu0 0
  %1499 = vmatpush.bf16.msra.mxu0 0
  %1500 = vmatpush.bf16.msra.mxu0 0
  %1501 = vmatpush.bf16.msra.mxu0 0
  %1502 = vmatpush.bf16.msra.mxu0 0
  %1503 = vmatpush.bf16.msra.mxu0 0
  %1504 = vmatpush.bf16.msra.mxu0 0
  %1505 = vmatpush.bf16.msra.mxu0 %v1487
  %1506 = vmatmul.bf16.gmra.mxu0 %v1489
  %v1507 = vpop.f32.mrf.mxu0
  %v1508 = vadd.f32 %v1462, %v1507
  %v1509 = vpop.f32.mrf.mxu0
  %v1510 = vadd.f32 %v1464, %v1509
  %1511 = vmatmul.bf16.gmra.mxu0 %v1491
  %v1512 = vpop.f32.mrf.mxu0
  %v1513 = vadd.f32 %v1467, %v1512
  %v1514 = vpop.f32.mrf.mxu0
  %1515 = vmatmul.bf16.gmra.mxu0 %v1493
  %v1516 = vpop.f32.mrf.mxu0
  %v1517 = vadd.f32 %v1471, %v1516
  %v1518 = vpop.f32.mrf.mxu0
  %v1519 = vadd.f32 %v1473, %v1518
  %1520 = vmatmul.bf16.gmra.mxu0 %v1496
  %v1521 = vpop.f32.mrf.mxu0
  %v1522 = vadd.f32 %v1476, %v1521
  %v1523 = vpop.f32.mrf.mxu0
  %v1524 = vadd.f32 %v1478, %v1523
  %1525 = vdwg.mxu0
  %v1526 = vld [vmem:[#allocation3] sm:$0xe]
  %s1527 = scalar_lea.vmem %s4, 16
  %v1528 = vld [vmem:[%s1527] sm:$0xf]
  %v1529 = vld [vmem:[%s1527 + $0x4] sm:$0xf]
  %v1531 = vunpack.c.l.b16 %v1526
  %v1532 = vpack.c.b16 %v1392, %v1531
  %v1533 = vrot.slane %v1532, 1
  %v1534 = vrot.slane %v1400, 1
  %v1535 = vsel %vm662, %v1533, %v1534
  %v1536 = vrot.slane %v1401, 1
  %v1537 = vsel %vm662, %v1534, %v1536
  %v1538 = vrot.slane %v1402, 1
  %v1539 = vsel %vm662, %v1536, %v1538
  %v1542 = vunpack.c.l.b16 %v1528
  %v1543 = vunpack.c.l.b16 %v1529
  %v1544 = vpack.c.b16 %v1543, %v1542
  %v1547 = vsel %vm568, %v1535, 0
  %v1550 = vsel %vm568, %v1537, 0
  %v1553 = vsel %vm568, %v1539, 0
  %v1556 = vsel %vm568, %v1538, 0
  %1558 = vmatpush.bf16.msra.mxu0 0
  %1559 = vmatpush.bf16.msra.mxu0 0
  %1560 = vmatpush.bf16.msra.mxu0 0
  %1561 = vmatpush.bf16.msra.mxu0 0
  %1562 = vmatpush.bf16.msra.mxu0 0
  %1563 = vmatpush.bf16.msra.mxu0 0
  %1564 = vmatpush.bf16.msra.mxu0 0
  %1565 = vmatpush.bf16.msra.mxu0 %v1544
  %1566 = vmatmul.bf16.gmra.mxu0 %v1547
  %v1567 = vpop.f32.mrf.mxu0
  %v1568 = vadd.f32 0.0, %v1567
  %v1569 = vpop.f32.mrf.mxu0
  %v1570 = vadd.f32 0.0, %v1569
  %1571 = vmatmul.bf16.gmra.mxu0 %v1550
  %v1572 = vpop.f32.mrf.mxu0
  %v1573 = vadd.f32 0.0, %v1572
  %v1574 = vpop.f32.mrf.mxu0
  %1575 = vmatmul.bf16.gmra.mxu0 %v1553
  %v1576 = vpop.f32.mrf.mxu0
  %v1577 = vadd.f32 0.0, %v1576
  %v1578 = vpop.f32.mrf.mxu0
  %v1579 = vadd.f32 0.0, %v1578
  %1580 = vmatmul.bf16.gmra.mxu0 %v1556
  %v1581 = vpop.f32.mrf.mxu0
  %v1582 = vadd.f32 0.0, %v1581
  %v1583 = vpop.f32.mrf.mxu0
  %v1584 = vadd.f32 0.0, %v1583
  %1585 = vdwg.mxu0
  %v1586 = vadd.f32 %v1508, %v1568
  %v1587 = vadd.f32 %v1510, %v1570
  %v1588 = vadd.f32 %v1513, %v1573
  %v1589 = vadd.f32 %v1517, %v1577
  %v1590 = vadd.f32 %v1519, %v1579
  %v1591 = vadd.f32 %v1522, %v1582
  %v1592 = vadd.f32 %v1524, %v1584
  %v1593 = vld [vmem:[#allocation3] sm:$0x8]
  %v1594 = vld [vmem:[#allocation3 + $0x1c] sm:$0xf]
  %s1595 = scalar_lea.vmem %s4, 24
  %v1596 = vld [vmem:[%s1595] sm:$0xf]
  %v1597 = vld [vmem:[%s1595 + $0x4] sm:$0xf]
  %v1600 = vunpack.c.l.b16 %v1593
  %v1601 = vunpack.c.l.b16 %v1594
  %v1602 = vpack.c.b16 %v1392, %v1600
  %v1603 = vpack.c.b16 %v1601, %v1397
  %v1604 = vrot.slane %v1602, 3
  %v1605 = vrot.slane %v1400, 3
  %v1606 = vsel %vm734, %v1604, %v1605
  %v1607 = vrot.slane %v1401, 3
  %v1608 = vsel %vm734, %v1605, %v1607
  %v1609 = vrot.slane %v1603, 3
  %v1610 = vsel %vm734, %v1607, %v1609
  %v1613 = vunpack.c.l.b16 %v1596
  %v1614 = vunpack.c.l.b16 %v1597
  %v1615 = vpack.c.b16 %v1614, %v1613
  %v1618 = vsel %vm568, %v1606, 0
  %v1621 = vsel %vm568, %v1608, 0
  %v1624 = vsel %vm568, %v1610, 0
  %v1627 = vsel %vm568, %v1609, 0
  %1629 = vmatpush.bf16.msra.mxu0 0
  %1630 = vmatpush.bf16.msra.mxu0 0
  %1631 = vmatpush.bf16.msra.mxu0 0
  %1632 = vmatpush.bf16.msra.mxu0 0
  %1633 = vmatpush.bf16.msra.mxu0 0
  %1634 = vmatpush.bf16.msra.mxu0 0
  %1635 = vmatpush.bf16.msra.mxu0 0
  %1636 = vmatpush.bf16.msra.mxu0 %v1615
  %1637 = vmatmul.bf16.gmra.mxu0 %v1618
  %v1638 = vpop.f32.mrf.mxu0
  %v1639 = vadd.f32 0.0, %v1638
  %v1640 = vpop.f32.mrf.mxu0
  %v1641 = vadd.f32 0.0, %v1640
  %1642 = vmatmul.bf16.gmra.mxu0 %v1621
  %v1643 = vpop.f32.mrf.mxu0
  %v1644 = vadd.f32 0.0, %v1643
  %v1645 = vpop.f32.mrf.mxu0
  %1646 = vmatmul.bf16.gmra.mxu0 %v1624
  %v1647 = vpop.f32.mrf.mxu0
  %v1648 = vadd.f32 0.0, %v1647
  %v1649 = vpop.f32.mrf.mxu0
  %v1650 = vadd.f32 0.0, %v1649
  %1651 = vmatmul.bf16.gmra.mxu0 %v1627
  %v1652 = vpop.f32.mrf.mxu0
  %v1653 = vadd.f32 0.0, %v1652
  %v1654 = vpop.f32.mrf.mxu0
  %v1655 = vadd.f32 0.0, %v1654
  %1656 = vdwg.mxu0
  %v1657 = vadd.f32 %v1586, %v1639
  %v1658 = vadd.f32 %v1587, %v1641
  %v1659 = vadd.f32 %v1588, %v1644
  %v1660 = vadd.f32 %v1589, %v1648
  %v1661 = vadd.f32 %v1590, %v1650
  %v1662 = vadd.f32 %v1591, %v1653
  %v1663 = vadd.f32 %v1592, %v1655
  %v1664 = vld [vmem:[#allocation3] sm:$0x8]
  %v1665 = vld [vmem:[#allocation3 + $0x4] sm:$0xf]
  %v1666 = vld [vmem:[#allocation3 + $0x8] sm:$0xf]
  %v1667 = vld [vmem:[#allocation3 + $0xc] sm:$0xf]
  %v1668 = vld [vmem:[#allocation3 + $0x10] sm:$0xf]
  %v1669 = vld [vmem:[#allocation3 + $0x14] sm:$0xf]
  %v1670 = vld [vmem:[#allocation3 + $0x18] sm:$0xf]
  %v1671 = vld [vmem:[#allocation3 + $0x1c] sm:$0xf]
  %v1672 = vld [vmem:[#allocation3 + $0x20] sm:$0x1]
  %s1673 = scalar_lea.vmem %s4, 32
  %v1674 = vld [vmem:[%s1673] sm:$0xf]
  %v1675 = vld [vmem:[%s1673 + $0x4] sm:$0xf]
  %v1685 = vunpack.c.l.b16 %v1664
  %v1686 = vunpack.c.l.b16 %v1665
  %v1687 = vunpack.c.l.b16 %v1666
  %v1688 = vunpack.c.l.b16 %v1667
  %v1689 = vunpack.c.l.b16 %v1668
  %v1690 = vunpack.c.l.b16 %v1669
  %v1691 = vunpack.c.l.b16 %v1670
  %v1692 = vunpack.c.l.b16 %v1671
  %v1693 = vunpack.c.l.b16 %v1672
  %v1694 = vpack.c.b16 %v1686, %v1685
  %v1695 = vpack.c.b16 %v1688, %v1687
  %v1696 = vpack.c.b16 %v1690, %v1689
  %v1697 = vpack.c.b16 %v1692, %v1691
  %v1698 = vpack.c.b16 %v1693, %v1693
  %v1700 = vshrl.u32 %v1694, 16
  %v1702 = vrot.slane %v1700, 3
  %v1703 = vshll.u32 %v1694, 16
  %v1705 = vrot.slane %v1703, 4
  %v1706 = vor.u32 %v1702, %v1705
  %v1708 = vshrl.u32 %v1695, 16
  %v1710 = vrot.slane %v1708, 3
  %v1711 = vshll.u32 %v1695, 16
  %v1713 = vrot.slane %v1711, 4
  %v1714 = vor.u32 %v1710, %v1713
  %v1715 = vsel %vm830, %v1706, %v1714
  %v1717 = vshrl.u32 %v1696, 16
  %v1719 = vrot.slane %v1717, 3
  %v1720 = vshll.u32 %v1696, 16
  %v1722 = vrot.slane %v1720, 4
  %v1723 = vor.u32 %v1719, %v1722
  %v1724 = vsel %vm830, %v1714, %v1723
  %v1726 = vshrl.u32 %v1697, 16
  %v1728 = vrot.slane %v1726, 3
  %v1729 = vshll.u32 %v1697, 16
  %v1731 = vrot.slane %v1729, 4
  %v1732 = vor.u32 %v1728, %v1731
  %v1733 = vsel %vm830, %v1723, %v1732
  %v1735 = vshll.u32 %v1698, 16
  %v1737 = vrot.slane %v1735, 4
  %v1738 = vsel %vm830, %v1732, %v1737
  %v1741 = vunpack.c.l.b16 %v1674
  %v1742 = vunpack.c.l.b16 %v1675
  %v1743 = vpack.c.b16 %v1742, %v1741
  %v1746 = vsel %vm568, %v1715, 0
  %v1749 = vsel %vm568, %v1724, 0
  %v1752 = vsel %vm568, %v1733, 0
  %v1755 = vsel %vm568, %v1738, 0
  %1757 = vmatpush.bf16.msra.mxu0 0
  %1758 = vmatpush.bf16.msra.mxu0 0
  %1759 = vmatpush.bf16.msra.mxu0 0
  %1760 = vmatpush.bf16.msra.mxu0 0
  %1761 = vmatpush.bf16.msra.mxu0 0
  %1762 = vmatpush.bf16.msra.mxu0 0
  %1763 = vmatpush.bf16.msra.mxu0 0
  %1764 = vmatpush.bf16.msra.mxu0 %v1743
  %1765 = vmatmul.bf16.gmra.mxu0 %v1746
  %v1766 = vpop.f32.mrf.mxu0
  %v1767 = vadd.f32 0.0, %v1766
  %v1768 = vpop.f32.mrf.mxu0
  %v1769 = vadd.f32 0.0, %v1768
  %1770 = vmatmul.bf16.gmra.mxu0 %v1749
  %v1771 = vpop.f32.mrf.mxu0
  %v1772 = vadd.f32 0.0, %v1771
  %v1773 = vpop.f32.mrf.mxu0
  %1774 = vmatmul.bf16.gmra.mxu0 %v1752
  %v1775 = vpop.f32.mrf.mxu0
  %v1776 = vadd.f32 0.0, %v1775
  %v1777 = vpop.f32.mrf.mxu0
  %v1778 = vadd.f32 0.0, %v1777
  %1779 = vmatmul.bf16.gmra.mxu0 %v1755
  %v1780 = vpop.f32.mrf.mxu0
  %v1781 = vadd.f32 0.0, %v1780
  %v1782 = vpop.f32.mrf.mxu0
  %v1783 = vadd.f32 0.0, %v1782
  %1784 = vdwg.mxu0
  %v1785 = vadd.f32 %v1657, %v1767
  %v1786 = vadd.f32 %v1658, %v1769
  %v1787 = vadd.f32 %v1659, %v1772
  %v1788 = vadd.f32 %v1660, %v1776
  %v1789 = vadd.f32 %v1661, %v1778
  %v1790 = vadd.f32 %v1662, %v1781
  %v1791 = vadd.f32 %v1663, %v1783
  %s1792 = scalar_lea.vmem %s4, 40
  %v1793 = vld [vmem:[%s1792] sm:$0xf]
  %v1794 = vld [vmem:[%s1792 + $0x4] sm:$0xf]
  %v1795 = vpack.c.b16 %v1687, %v1686
  %v1796 = vpack.c.b16 %v1689, %v1688
  %v1797 = vpack.c.b16 %v1691, %v1690
  %v1798 = vpack.c.b16 %v1693, %v1692
  %v1801 = vunpack.c.l.b16 %v1793
  %v1802 = vunpack.c.l.b16 %v1794
  %v1803 = vpack.c.b16 %v1802, %v1801
  %v1806 = vsel %vm568, %v1795, 0
  %v1809 = vsel %vm568, %v1796, 0
  %v1812 = vsel %vm568, %v1797, 0
  %v1815 = vsel %vm568, %v1798, 0
  %1817 = vmatpush.bf16.msra.mxu0 0
  %1818 = vmatpush.bf16.msra.mxu0 0
  %1819 = vmatpush.bf16.msra.mxu0 0
  %1820 = vmatpush.bf16.msra.mxu0 0
  %1821 = vmatpush.bf16.msra.mxu0 0
  %1822 = vmatpush.bf16.msra.mxu0 0
  %1823 = vmatpush.bf16.msra.mxu0 0
  %1824 = vmatpush.bf16.msra.mxu0 %v1803
  %1825 = vmatmul.bf16.gmra.mxu0 %v1806
  %v1826 = vpop.f32.mrf.mxu0
  %v1827 = vadd.f32 0.0, %v1826
  %v1828 = vpop.f32.mrf.mxu0
  %v1829 = vadd.f32 0.0, %v1828
  %1830 = vmatmul.bf16.gmra.mxu0 %v1809
  %v1831 = vpop.f32.mrf.mxu0
  %v1832 = vadd.f32 0.0, %v1831
  %v1833 = vpop.f32.mrf.mxu0
  %1834 = vmatmul.bf16.gmra.mxu0 %v1812
  %v1835 = vpop.f32.mrf.mxu0
  %v1836 = vadd.f32 0.0, %v1835
  %v1837 = vpop.f32.mrf.mxu0
  %v1838 = vadd.f32 0.0, %v1837
  %1839 = vmatmul.bf16.gmra.mxu0 %v1815
  %v1840 = vpop.f32.mrf.mxu0
  %v1841 = vadd.f32 0.0, %v1840
  %v1842 = vpop.f32.mrf.mxu0
  %v1843 = vadd.f32 0.0, %v1842
  %1844 = vdwg.mxu0
  %v1845 = vadd.f32 %v1785, %v1827
  %v1846 = vadd.f32 %v1786, %v1829
  %v1847 = vadd.f32 %v1787, %v1832
  %v1848 = vadd.f32 %v1788, %v1836
  %v1849 = vadd.f32 %v1789, %v1838
  %v1850 = vadd.f32 %v1790, %v1841
  %v1851 = vadd.f32 %v1791, %v1843
  %v1852 = vld [vmem:[#allocation3 + $0x4] sm:$0xc]
  %v1853 = vld [vmem:[#allocation3 + $0x20] sm:$0x7]
  %s1854 = scalar_lea.vmem %s4, 48
  %v1855 = vld [vmem:[%s1854] sm:$0xf]
  %v1856 = vld [vmem:[%s1854 + $0x4] sm:$0xf]
  %v1859 = vunpack.c.l.b16 %v1852
  %v1860 = vunpack.c.l.b16 %v1853
  %v1861 = vpack.c.b16 %v1687, %v1859
  %v1862 = vpack.c.b16 %v1860, %v1692
  %v1863 = vrot.slane %v1861, 2
  %v1864 = vrot.slane %v1796, 2
  %v1865 = vsel %vm995, %v1863, %v1864
  %v1866 = vrot.slane %v1797, 2
  %v1867 = vsel %vm995, %v1864, %v1866
  %v1868 = vrot.slane %v1862, 2
  %v1869 = vsel %vm995, %v1866, %v1868
  %v1872 = vunpack.c.l.b16 %v1855
  %v1873 = vunpack.c.l.b16 %v1856
  %v1874 = vpack.c.b16 %v1873, %v1872
  %v1877 = vsel %vm568, %v1865, 0
  %v1880 = vsel %vm568, %v1867, 0
  %v1883 = vsel %vm568, %v1869, 0
  %v1886 = vsel %vm568, %v1868, 0
  %1888 = vmatpush.bf16.msra.mxu0 0
  %1889 = vmatpush.bf16.msra.mxu0 0
  %1890 = vmatpush.bf16.msra.mxu0 0
  %1891 = vmatpush.bf16.msra.mxu0 0
  %1892 = vmatpush.bf16.msra.mxu0 0
  %1893 = vmatpush.bf16.msra.mxu0 0
  %1894 = vmatpush.bf16.msra.mxu0 0
  %1895 = vmatpush.bf16.msra.mxu0 %v1874
  %1896 = vmatmul.bf16.gmra.mxu0 %v1877
  %v1897 = vpop.f32.mrf.mxu0
  %v1898 = vadd.f32 0.0, %v1897
  %v1899 = vpop.f32.mrf.mxu0
  %v1900 = vadd.f32 0.0, %v1899
  %1901 = vmatmul.bf16.gmra.mxu0 %v1880
  %v1902 = vpop.f32.mrf.mxu0
  %v1903 = vadd.f32 0.0, %v1902
  %v1904 = vpop.f32.mrf.mxu0
  %1905 = vmatmul.bf16.gmra.mxu0 %v1883
  %v1906 = vpop.f32.mrf.mxu0
  %v1907 = vadd.f32 0.0, %v1906
  %v1908 = vpop.f32.mrf.mxu0
  %v1909 = vadd.f32 0.0, %v1908
  %1910 = vmatmul.bf16.gmra.mxu0 %v1886
  %v1911 = vpop.f32.mrf.mxu0
  %v1912 = vadd.f32 0.0, %v1911
  %v1913 = vpop.f32.mrf.mxu0
  %v1914 = vadd.f32 0.0, %v1913
  %1915 = vdwg.mxu0
  %v1916 = vadd.f32 %v1845, %v1898
  %v1917 = vadd.f32 %v1846, %v1900
  %v1918 = vadd.f32 %v1847, %v1903
  %v1919 = vadd.f32 %v1848, %v1907
  %v1920 = vadd.f32 %v1849, %v1909
  %v1921 = vadd.f32 %v1850, %v1912
  %v1922 = vadd.f32 %v1851, %v1914
  %v1923 = vld [vmem:[#allocation3 + $0x20] sm:$0xf]
  %s1924 = scalar_lea.vmem %s4, 56
  %v1925 = vld [vmem:[%s1924] sm:$0xf]
  %v1926 = vld [vmem:[%s1924 + $0x4] sm:$0xf]
  %v1928 = vunpack.c.l.b16 %v1923
  %v1929 = vpack.c.b16 %v1928, %v1692
  %v1931 = vshrl.u32 %v1861, 16
  %v1933 = vrot.slane %v1931, 2
  %v1934 = vshll.u32 %v1861, 16
  %v1936 = vrot.slane %v1934, 3
  %v1937 = vor.u32 %v1933, %v1936
  %v1938 = vshrl.u32 %v1796, 16
  %v1940 = vrot.slane %v1938, 2
  %v1941 = vshll.u32 %v1796, 16
  %v1943 = vrot.slane %v1941, 3
  %v1944 = vor.u32 %v1940, %v1943
  %v1945 = vsel %vm1063, %v1937, %v1944
  %v1946 = vshrl.u32 %v1797, 16
  %v1948 = vrot.slane %v1946, 2
  %v1949 = vshll.u32 %v1797, 16
  %v1951 = vrot.slane %v1949, 3
  %v1952 = vor.u32 %v1948, %v1951
  %v1953 = vsel %vm1063, %v1944, %v1952
  %v1955 = vshrl.u32 %v1929, 16
  %v1957 = vrot.slane %v1955, 2
  %v1958 = vshll.u32 %v1929, 16
  %v1960 = vrot.slane %v1958, 3
  %v1961 = vor.u32 %v1957, %v1960
  %v1962 = vsel %vm1063, %v1952, %v1961
  %v1965 = vunpack.c.l.b16 %v1925
  %v1966 = vunpack.c.l.b16 %v1926
  %v1967 = vpack.c.b16 %v1966, %v1965
  %v1970 = vsel %vm568, %v1945, 0
  %v1973 = vsel %vm568, %v1953, 0
  %v1976 = vsel %vm568, %v1962, 0
  %v1979 = vsel %vm568, %v1961, 0
  %1981 = vmatpush.bf16.msra.mxu0 0
  %1982 = vmatpush.bf16.msra.mxu0 0
  %1983 = vmatpush.bf16.msra.mxu0 0
  %1984 = vmatpush.bf16.msra.mxu0 0
  %1985 = vmatpush.bf16.msra.mxu0 0
  %1986 = vmatpush.bf16.msra.mxu0 0
  %1987 = vmatpush.bf16.msra.mxu0 0
  %1988 = vmatpush.bf16.msra.mxu0 %v1967
  %1989 = vmatmul.bf16.gmra.mxu0 %v1970
  %v1990 = vpop.f32.mrf.mxu0
  %v1991 = vadd.f32 0.0, %v1990
  %v1992 = vpop.f32.mrf.mxu0
  %v1993 = vadd.f32 0.0, %v1992
  %1994 = vmatmul.bf16.gmra.mxu0 %v1973
  %v1995 = vpop.f32.mrf.mxu0
  %v1996 = vadd.f32 0.0, %v1995
  %v1997 = vpop.f32.mrf.mxu0
  %1998 = vmatmul.bf16.gmra.mxu0 %v1976
  %v1999 = vpop.f32.mrf.mxu0
  %v2000 = vadd.f32 0.0, %v1999
  %v2001 = vpop.f32.mrf.mxu0
  %v2002 = vadd.f32 0.0, %v2001
  %2003 = vmatmul.bf16.gmra.mxu0 %v1979
  %v2004 = vpop.f32.mrf.mxu0
  %v2005 = vadd.f32 0.0, %v2004
  %v2006 = vpop.f32.mrf.mxu0
  %v2007 = vadd.f32 0.0, %v2006
  %2008 = vdwg.mxu0
  %v2009 = vadd.f32 %v1916, %v1991
  %v2010 = vadd.f32 %v1917, %v1993
  %v2011 = vadd.f32 %v1918, %v1996
  %v2012 = vadd.f32 %v1919, %v2000
  %v2013 = vadd.f32 %v1920, %v2002
  %v2014 = vadd.f32 %v1921, %v2005
  %v2015 = vadd.f32 %v1922, %v2007
  %v2016 = vld [vmem:[#allocation3 + $0x4] sm:$0x8]
  %s2017 = scalar_lea.vmem %s4, 64
  %v2018 = vld [vmem:[%s2017] sm:$0xf]
  %v2019 = vld [vmem:[%s2017 + $0x4] sm:$0xf]
  %v2021 = vunpack.c.l.b16 %v2016
  %v2022 = vpack.c.b16 %v1687, %v2021
  %v2023 = vrot.slane %v2022, 3
  %v2024 = vrot.slane %v1796, 3
  %v2025 = vsel %vm734, %v2023, %v2024
  %v2026 = vrot.slane %v1797, 3
  %v2027 = vsel %vm734, %v2024, %v2026
  %v2028 = vrot.slane %v1929, 3
  %v2029 = vsel %vm734, %v2026, %v2028
  %v2032 = vunpack.c.l.b16 %v2018
  %v2033 = vunpack.c.l.b16 %v2019
  %v2034 = vpack.c.b16 %v2033, %v2032
  %v2037 = vsel %vm568, %v2025, 0
  %v2040 = vsel %vm568, %v2027, 0
  %v2043 = vsel %vm568, %v2029, 0
  %v2046 = vsel %vm568, %v2028, 0
  %2048 = vmatpush.bf16.msra.mxu0 0
  %2049 = vmatpush.bf16.msra.mxu0 0
  %2050 = vmatpush.bf16.msra.mxu0 0
  %2051 = vmatpush.bf16.msra.mxu0 0
  %2052 = vmatpush.bf16.msra.mxu0 0
  %2053 = vmatpush.bf16.msra.mxu0 0
  %2054 = vmatpush.bf16.msra.mxu0 0
  %2055 = vmatpush.bf16.msra.mxu0 %v2034
  %2056 = vmatmul.bf16.gmra.mxu0 %v2037
  %v2057 = vpop.f32.mrf.mxu0
  %v2058 = vadd.f32 0.0, %v2057
  %v2059 = vpop.f32.mrf.mxu0
  %v2060 = vadd.f32 0.0, %v2059
  %2061 = vmatmul.bf16.gmra.mxu0 %v2040
  %v2062 = vpop.f32.mrf.mxu0
  %v2063 = vadd.f32 0.0, %v2062
  %v2064 = vpop.f32.mrf.mxu0
  %2065 = vmatmul.bf16.gmra.mxu0 %v2043
  %v2066 = vpop.f32.mrf.mxu0
  %v2067 = vadd.f32 0.0, %v2066
  %v2068 = vpop.f32.mrf.mxu0
  %v2069 = vadd.f32 0.0, %v2068
  %2070 = vmatmul.bf16.gmra.mxu0 %v2046
  %v2071 = vpop.f32.mrf.mxu0
  %v2072 = vadd.f32 0.0, %v2071
  %v2073 = vpop.f32.mrf.mxu0
  %v2074 = vadd.f32 0.0, %v2073
  %2075 = vdwg.mxu0
  %v2076 = vadd.f32 %v2009, %v2058
  %v2077 = vadd.f32 %v2010, %v2060
  %v2078 = vadd.f32 %v2011, %v2063
  %v2079 = vadd.f32 %v2012, %v2067
  %v2080 = vadd.f32 %v2013, %v2069
  %v2081 = vadd.f32 %v2014, %v2072
  %v2082 = vadd.f32 %v2015, %v2074
  %v2083 = vld [vmem:[#allocation2] sm:$0x8]
  %v2084 = vld [vmem:[#allocation2 + $0x4] sm:$0xf]
  %v2085 = vld [vmem:[#allocation2 + $0x8] sm:$0xf]
  %v2086 = vld [vmem:[#allocation2 + $0xc] sm:$0xf]
  %v2087 = vld [vmem:[#allocation2 + $0x10] sm:$0xf]
  %v2088 = vld [vmem:[#allocation2 + $0x14] sm:$0xf]
  %v2089 = vld [vmem:[#allocation2 + $0x18] sm:$0xf]
  %v2090 = vld [vmem:[#allocation2 + $0x1c] sm:$0xf]
  %v2091 = vld [vmem:[#allocation2 + $0x20] sm:$0x1]
  %v2092 = vunpack.c.l.bf16 %v2083
  %v2093 = vunpack.c.l.bf16 %v2084
  %v2094 = vunpack.c.l.bf16 %v2085
  %v2095 = vunpack.c.l.bf16 %v2086
  %v2096 = vunpack.c.l.bf16 %v2087
  %v2097 = vunpack.c.l.bf16 %v2088
  %v2098 = vunpack.c.l.bf16 %v2089
  %v2099 = vunpack.c.l.bf16 %v2090
  %v2100 = vunpack.c.l.bf16 %v2091
  %v2101 = vld [vmem:[%s5] sm:$0x1]
  %v2103 = vperm.slane %v2101, 0
  %v2105 = vmul.f32 %v2076, %v2103
  %v2106 = vmul.f32 %v2077, %v2103
  %v2107 = vmul.f32 %v2078, %v2103
  %v2108 = vmul.f32 %v2079, %v2103
  %v2109 = vmul.f32 %v2080, %v2103
  %v2110 = vmul.f32 %v2081, %v2103
  %v2111 = vmul.f32 %v2082, %v2103
  %v2112 = vld [vmem:[%s6] sm:$0x1]
  %v2114 = vperm.slane %v2112, 0
  %v2116 = vadd.f32 %v2105, %v2114
  %v2117 = vadd.f32 %v2106, %v2114
  %v2118 = vadd.f32 %v2107, %v2114
  %v2119 = vadd.f32 %v2108, %v2114
  %v2120 = vadd.f32 %v2109, %v2114
  %v2121 = vadd.f32 %v2110, %v2114
  %v2122 = vadd.f32 %v2111, %v2114
  %vm2132 = vcmask 1040384
  %v2133 = vrot.slane %v2092, 7
  %v2134 = vrot.slane %v2093, 7
  %v2135 = vsel %vm2132, %v2133, %v2134
  %v2136 = vrot.slane %v2094, 7
  %v2137 = vsel %vm2132, %v2134, %v2136
  %v2138 = vrot.slane %v2095, 7
  %v2139 = vsel %vm2132, %v2136, %v2138
  %v2140 = vrot.slane %v2096, 7
  %v2141 = vrot.slane %v2097, 7
  %v2142 = vsel %vm2132, %v2140, %v2141
  %v2143 = vrot.slane %v2098, 7
  %v2144 = vsel %vm2132, %v2141, %v2143
  %v2145 = vrot.slane %v2099, 7
  %v2146 = vsel %vm2132, %v2143, %v2145
  %v2147 = vrot.slane %v2100, 7
  %v2148 = vsel %vm2132, %v2145, %v2147
  %v2156 = vadd.f32 %v2116, %v2135
  %v2157 = vadd.f32 %v2117, %v2137
  %v2158 = vadd.f32 %v2118, %v2139
  %v2159 = vadd.f32 %v2119, %v2142
  %v2160 = vadd.f32 %v2120, %v2144
  %v2161 = vadd.f32 %v2121, %v2146
  %v2162 = vadd.f32 %v2122, %v2148
  %v2163 = vmax.f32 %v2156, 0.0
  %v2164 = vmax.f32 %v2157, 0.0
  %v2165 = vmax.f32 %v2158, 0.0
  %v2166 = vmax.f32 %v2159, 0.0
  %v2167 = vmax.f32 %v2160, 0.0
  %v2168 = vmax.f32 %v2161, 0.0
  %v2169 = vmax.f32 %v2162, 0.0
  %v2170 = vpack.c.bf16 %v2163, %v2163
  %v2171 = vpack.c.bf16 %v2164, %v2164
  %v2172 = vpack.c.bf16 %v2165, %v2165
  %v2173 = vpack.c.bf16 %v2166, %v2166
  %v2174 = vpack.c.bf16 %v2167, %v2167
  %v2175 = vpack.c.bf16 %v2168, %v2168
  %v2176 = vpack.c.bf16 %v2169, %v2169
  %2177 = vst [vmem:[%s7] sm:$0x3] %v2170
  %v2180 = vrot.slane %v2170, 5
  %v2181 = vrot.slane %v2180, 4
  %v2182 = vrot.slane %v2171, 5
  %v2183 = vsel %vm482, %v2181, %v2182
  %2185 = vst [vmem:[%s7] sm:$0xc] %v2183
  %v2186 = vrot.slane %v2171, 6
  %v2187 = vrot.slane %v2186, 4
  %2189 = vst [vmem:[%s7 + $0x4] sm:$0x3] %v2187
  %v2191 = vrot.slane %v2172, 7
  %2193 = vst [vmem:[%s7 + $0x4] sm:$0xc] %v2191
  %v2195 = vrot.slane %v2173, 6
  %v2196 = vrot.slane %v2195, 4
  %2198 = vst [vmem:[%s7 + $0x8] sm:$0x3] %v2196
  %v2200 = vrot.slane %v2174, 7
  %2202 = vst [vmem:[%s7 + $0x8] sm:$0xc] %v2200
  %2203 = vst [vmem:[%s7 + $0xc] sm:$0x3] %v2175
  %v2206 = vrot.slane %v2175, 5
  %v2207 = vrot.slane %v2206, 4
  %v2208 = vrot.slane %v2176, 5
  %v2209 = vsel %vm482, %v2207, %v2208
  %2211 = vst [vmem:[%s7 + $0xc] sm:$0xc] %v2209
  // Predicated region
  $region30: #{multi_head_resnet_forward.4} parent=0 // pred_check
    _
  $region31: #{multi_head_resnet_forward.4} parent=0 // pred_check_branch
    %2213 = sbr.rel (0) target = $region33
  $region32: #{multi_head_resnet_forward.4} parent=0 // pred_region
    _
  $region33: #{multi_head_resnet_forward.4} parent=0 // pred_fallthru
    _
  // Predicated region
  $region34: #{multi_head_resnet_forward.4} parent=0 // pred_check
    _
  $region35: #{multi_head_resnet_forward.4} parent=0 // pred_check_branch
    %2215 = sbr.rel (0) target = $region37
  $region36: #{multi_head_resnet_forward.4} parent=0 // pred_region
    _
  $region37: #{multi_head_resnet_forward.4} parent=0 // pred_fallthru
    _

</llo_original>
